<compile_context>
chip_gen: v7x
topology: tpu7x:2x2x1
jax: 0.10.0
libtpu: 0.0.40
codegen_flags: <defaults>
</compile_context>

<pallas_src>
import math

import jax
import jax.numpy as jnp
from jax.experimental import pallas as pl
from jax.experimental.pallas import tpu as pltpu

# ----------------------------- model config ---------------------------------
VOCAB = 128
HIDDEN = 32                 # true hidden size D
HIDDEN_PAD = 128            # D zero-padded to lane width
N_HEADS = 4
HEAD_DIM = HIDDEN // N_HEADS
INTERMEDIATE = 64           # true MLP width I
INTER_PAD = 128             # I zero-padded to lane width
N_LAYERS = 2
NUM_LABELS = 2
LABEL_PAD = 128             # classifier output padded to lane width
RMS_EPS = 1e-6
ROPE_THETA = 10000.0

_VMEM = pl.BlockSpec(memory_space=pltpu.MemorySpace.VMEM)


# --------------------------- fused forward kernel ----------------------------
def _fused_forward_kernel(
    ids_ref,     # [N, 1]      int32  flattened input_ids
    amask_ref,   # [B, S]      int32  attention_mask
    cos_ref,     # [N, DP]     f32    RoPE cos (tiled over batch & head slots)
    sin_ref,     # [N, DP]     f32
    rot_ref,     # [DP, DP]    f32    block-diagonal rotate-half matrix
    embed_ref,   # [VOCAB, DP] f32    token embedding table (zero-padded)
    ln1_ref,     # [L, 1, DP]
    ln2_ref,     # [L, 1, DP]
    wqkv_ref,    # [L, DP, 3*DP]      fused Q|K|V (1/sqrt(Dh) folded into Q)
    wo_ref,      # [L*H, Dh, DP]      output projection, per-head slabs
    wgu_ref,     # [L, DP, 2*IP]      fused gate|up
    wd_ref,      # [L, IP, DP]
    lnf_ref,     # [1, DP]
    wc_ref,      # [DP, LABEL_PAD]
    bc_ref,      # [1, LABEL_PAD]
    o_ref,       # [B, LABEL_PAD]
):
    B, S = amask_ref.shape
    N = B * S
    DP = HIDDEN_PAD
    IP = INTER_PAD
    Dh = HEAD_DIM
    H = N_HEADS
    f32 = jnp.float32

    cos = cos_ref[...]
    sin = sin_ref[...]
    rot = rot_ref[...]

    # ---- embedding fused in-kernel: one-hot (iota == id) @ table on the MXU ----
    ids = ids_ref[...]                                                # [N, 1]
    vocab_iota = jax.lax.broadcasted_iota(jnp.int32, (N, VOCAB), 1)
    one_hot = (vocab_iota == ids).astype(f32)                         # [N, VOCAB]
    x = jnp.dot(one_hot, embed_ref[...], preferred_element_type=f32)  # [N, DP]

    # ---- additive attention bias built in-kernel (cheap VPU compare/select) ----
    qpos = jax.lax.broadcasted_iota(jnp.int32, (S, S), 0)
    kpos = jax.lax.broadcasted_iota(jnp.int32, (S, S), 1)
    causal = qpos >= kpos                                             # [S, S]
    pad_ok = amask_ref[...] > 0                                       # [B, S]
    allowed = jnp.logical_and(causal[None, :, :], pad_ok[:, None, :])
    bias = jnp.where(allowed, 0.0, -1e9).astype(f32)                  # [B, S, S]
    bias_g = jnp.concatenate([bias] * H, axis=0)                      # [H*B, S, S]

    def rmsnorm(h, w):
        # divide by the TRUE hidden size (pad columns are exactly zero)
        var = jnp.sum(h * h, axis=-1, keepdims=True) * (1.0 / HIDDEN)
        return h * jax.lax.rsqrt(var + RMS_EPS) * w

    def rope(t):
        # per-head rotate-half as one MXU matmul with a block-diagonal +/-1
        # matrix: no lane slices / negates / concats on the vector units.
        return t * cos + jnp.dot(t, rot, preferred_element_type=f32) * sin

    def heads(t):
        # stack real heads on the leading axis -> single einsum / softmax below
        return jnp.concatenate(
            [t[:, hd * Dh:(hd + 1) * Dh] for hd in range(H)], axis=0
        ).reshape(H * B, S, Dh)                                       # [H*B, S, Dh]

    # layers unrolled (tiny fixed trip count -> full LLO visibility)
    for l in range(N_LAYERS):
        # ------------------------- attention block -------------------------
        h = rmsnorm(x, ln1_ref[l])                                    # [N, DP]
        qkv = jnp.dot(h, wqkv_ref[l], preferred_element_type=f32)     # [N, 3*DP]
        q = rope(qkv[:, :DP])               # attention scale pre-folded into Wq
        k = rope(qkv[:, DP:2 * DP])
        v = qkv[:, 2 * DP:]

        qh, kh, vh = heads(q), heads(k), heads(v)
        s = jnp.einsum("gqd,gkd->gqk", qh, kh,
                       preferred_element_type=f32) + bias_g           # [H*B, S, S]
        m = jnp.max(s, axis=-1, keepdims=True)
        p = jnp.exp(s - m)
        p = p * pl.reciprocal(jnp.sum(p, axis=-1, keepdims=True), approx=True)
        ctx = jnp.einsum("gqk,gkd->gqd", p, vh,
                         preferred_element_type=f32)                  # [H*B, S, Dh]

        # head-concat fused into the O-projection: per-head GEMM accumulation
        attn_out = jnp.zeros((N, DP), f32)
        for hd in range(H):
            ctx_h = ctx[hd * B:(hd + 1) * B].reshape(N, Dh)           # [N, Dh]
            attn_out = attn_out + jnp.dot(
                ctx_h, wo_ref[l * H + hd], preferred_element_type=f32)
        x = x + attn_out

        # ------------------------- SwiGLU MLP block -------------------------
        h = rmsnorm(x, ln2_ref[l])
        gu = jnp.dot(h, wgu_ref[l], preferred_element_type=f32)       # [N, 2*IP]
        g = gu[:, :IP]
        u = gu[:, IP:]
        x = x + jnp.dot(g * jax.nn.sigmoid(g) * u, wd_ref[l],
                        preferred_element_type=f32)

    # ---------- final norm, token-0 pooling, lane-dense classifier ----------
    xf = rmsnorm(x, lnf_ref[...])                                     # [N, DP]
    pooled = xf.reshape(B, S, DP)[:, 0, :]                            # [B, DP]
    o_ref[...] = jnp.dot(pooled, wc_ref[...],
                         preferred_element_type=f32) + bc_ref[...]


# ------------------------------ JAX glue -------------------------------------
def _rope_tables(B, S):
    inv_freq = 1.0 / (ROPE_THETA ** (
        jnp.arange(0, HEAD_DIM, 2, dtype=jnp.float32) / HEAD_DIM))
    t = jnp.arange(S, dtype=jnp.float32)
    freqs = jnp.outer(t, inv_freq)                       # [S, Dh/2]
    emb = jnp.concatenate([freqs, freqs], axis=-1)       # [S, Dh]
    reps = HIDDEN_PAD // HEAD_DIM
    cos = jnp.tile(jnp.cos(emb), (B, reps))              # [B*S, DP]
    sin = jnp.tile(jnp.sin(emb), (B, reps))
    return cos, sin


def _rotate_half_matrix():
    # x @ M == rotate_half(x) within every Dh-wide head block
    hh = HEAD_DIM // 2
    blk = jnp.zeros((HEAD_DIM, HEAD_DIM), jnp.float32)
    blk = blk.at[hh + jnp.arange(hh), jnp.arange(hh)].set(-1.0)   # out[:hh] = -x2
    blk = blk.at[jnp.arange(hh), hh + jnp.arange(hh)].set(1.0)    # out[hh:] =  x1
    eye = jnp.eye(HIDDEN_PAD // HEAD_DIM, dtype=jnp.float32)
    return jnp.kron(eye, blk)                             # [DP, DP] block-diagonal


def llama_classifier_forward(params, input_ids, attention_mask):
    B, S = input_ids.shape
    N = B * S
    ids = input_ids.reshape(N, 1).astype(jnp.int32)
    amask = attention_mask.astype(jnp.int32)
    cos, sin = _rope_tables(B, S)
    rot = _rotate_half_matrix()

    logits_padded = pl.pallas_call(
        _fused_forward_kernel,
        out_shape=jax.ShapeDtypeStruct((B, LABEL_PAD), jnp.float32),
        in_specs=[_VMEM] * 15,
        out_specs=_VMEM,
    )(
        ids, amask, cos, sin, rot,
        params["embed"], params["ln1"], params["ln2"], params["wqkv"],
        params["wo"], params["wgu"], params["wd"], params["ln_f"],
        params["wc"], params["bc"],
    )
    return logits_padded[:, :NUM_LABELS]


# --------------------------- parameter init ----------------------------------
def init_params(key):
    # TODO(synk): weights are synthetic (no .pt/.pth checkpoint loading available).
    keys = iter(jax.random.split(key, 16))

    def w(shape, scale=0.02):
        return (scale * jax.random.normal(next(keys), shape)).astype(jnp.float32)

    L, D, DP = N_LAYERS, HIDDEN, HIDDEN_PAD
    I, IP, Dh, H = INTERMEDIATE, INTER_PAD, HEAD_DIM, N_HEADS

    embed = w((VOCAB, D))
    wq = w((L, D, D)) / math.sqrt(Dh)     # fold 1/sqrt(Dh) into the Q projection
    wk = w((L, D, D))
    wv = w((L, D, D))
    wo = w((L, D, D))
    wg = w((L, D, I))
    wu = w((L, D, I))
    wd = w((L, I, D))
    wc = w((D, NUM_LABELS))
    bc = w((1, NUM_LABELS), scale=0.01)

    # ---- zero-pad every feature dim to the 128-lane width ----
    embed_p = jnp.zeros((VOCAB, DP), jnp.float32).at[:, :D].set(embed)
    wqkv_p = jnp.zeros((L, DP, 3 * DP), jnp.float32)
    wqkv_p = wqkv_p.at[:, :D, 0:D].set(wq)
    wqkv_p = wqkv_p.at[:, :D, DP:DP + D].set(wk)
    wqkv_p = wqkv_p.at[:, :D, 2 * DP:2 * DP + D].set(wv)
    wo_p = jnp.zeros((L * H, Dh, DP), jnp.float32).at[:, :, :D].set(
        wo.reshape(L * H, Dh, D))
    wgu_p = jnp.zeros((L, DP, 2 * IP), jnp.float32)
    wgu_p = wgu_p.at[:, :D, 0:I].set(wg)
    wgu_p = wgu_p.at[:, :D, IP:IP + I].set(wu)
    wd_p = jnp.zeros((L, IP, DP), jnp.float32).at[:, :I, :D].set(wd)
    ln1_p = jnp.zeros((L, 1, DP), jnp.float32).at[:, :, :D].set(1.0)
    ln2_p = jnp.zeros((L, 1, DP), jnp.float32).at[:, :, :D].set(1.0)
    lnf_p = jnp.zeros((1, DP), jnp.float32).at[:, :D].set(1.0)
    wc_p = jnp.zeros((DP, LABEL_PAD), jnp.float32).at[:D, :NUM_LABELS].set(wc)
    bc_p = jnp.zeros((1, LABEL_PAD), jnp.float32).at[:, :NUM_LABELS].set(bc)

    return {
        "embed": embed_p, "ln1": ln1_p, "ln2": ln2_p, "wqkv": wqkv_p,
        "wo": wo_p, "wgu": wgu_p, "wd": wd_p, "ln_f": lnf_p,
        "wc": wc_p, "bc": bc_p,
    }


# --------------------------------- main ---------------------------------------
if __name__ == "__main__":
    key = jax.random.PRNGKey(0)
    k_param, k_ids = jax.random.split(key)

    B, S = 2, 8
    params = init_params(k_param)
    input_ids = jax.random.randint(k_ids, (B, S), 0, VOCAB, dtype=jnp.int32)
    # second sequence has 2 padding tokens at the end
    attention_mask = jnp.array(
        [[1, 1, 1, 1, 1, 1, 1, 1], [1, 1, 1, 1, 1, 1, 0, 0]], dtype=jnp.int32
    )

    fwd = jax.jit(llama_classifier_forward)
    logits = fwd(params, input_ids, attention_mask)
    jax.block_until_ready(logits)
    assert logits.shape == (B, NUM_LABELS)
    print("KERNEL_OK")
</pallas_src>

<mosaic_0001>
module attributes {stable_mosaic.version = 11 : i64} {
  func.func @_fused_forward_kernel(%arg0: memref<16x1xi32, #tpu.memory_space<vmem>>, %arg1: memref<2x8xi32, #tpu.memory_space<vmem>>, %arg2: memref<16x128xf32, #tpu.memory_space<vmem>>, %arg3: memref<16x128xf32, #tpu.memory_space<vmem>>, %arg4: memref<128x128xf32, #tpu.memory_space<vmem>>, %arg5: memref<128x128xf32, #tpu.memory_space<vmem>>, %arg6: memref<2x1x128xf32, #tpu.memory_space<vmem>>, %arg7: memref<2x1x128xf32, #tpu.memory_space<vmem>>, %arg8: memref<2x128x384xf32, #tpu.memory_space<vmem>>, %arg9: memref<8x8x128xf32, #tpu.memory_space<vmem>>, %arg10: memref<2x128x256xf32, #tpu.memory_space<vmem>>, %arg11: memref<2x128x128xf32, #tpu.memory_space<vmem>>, %arg12: memref<1x128xf32, #tpu.memory_space<vmem>>, %arg13: memref<128x128xf32, #tpu.memory_space<vmem>>, %arg14: memref<1x128xf32, #tpu.memory_space<vmem>>, %arg15: memref<2x128xf32, #tpu.memory_space<vmem>>) attributes {dimension_semantics = [], scalar_prefetch = 0 : i64, scratch_operands = 0 : i64, tpu.core_type = #tpu.core_type<tc>} {
    %c0 = arith.constant 0 : index
    %c0_0 = arith.constant 0 : index
    %0 = vector.load %arg2[%c0, %c0_0] : memref<16x128xf32, #tpu.memory_space<vmem>>, vector<16x128xf32>
    %c0_1 = arith.constant 0 : index
    %c0_2 = arith.constant 0 : index
    %1 = vector.load %arg3[%c0_1, %c0_2] : memref<16x128xf32, #tpu.memory_space<vmem>>, vector<16x128xf32>
    %c0_3 = arith.constant 0 : index
    %c0_4 = arith.constant 0 : index
    %2 = vector.load %arg4[%c0_3, %c0_4] : memref<128x128xf32, #tpu.memory_space<vmem>>, vector<128x128xf32>
    %c0_5 = arith.constant 0 : index
    %c0_6 = arith.constant 0 : index
    %3 = vector.load %arg0[%c0_5, %c0_6] : memref<16x1xi32, #tpu.memory_space<vmem>>, vector<16x1xi32>
    %4 = tpu.iota {dimensions = array<i32: 1>} : vector<16x128xi32>
    %5 = vector.broadcast %3 : vector<16x1xi32> to vector<16x128xi32>
    %6 = arith.cmpi eq, %4, %5 : vector<16x128xi32>
    %7 = arith.extui %6 : vector<16x128xi1> to vector<16x128xi32>
    %8 = arith.sitofp %7 : vector<16x128xi32> to vector<16x128xf32>
    %c0_7 = arith.constant 0 : index
    %c0_8 = arith.constant 0 : index
    %9 = vector.load %arg5[%c0_7, %c0_8] : memref<128x128xf32, #tpu.memory_space<vmem>>, vector<128x128xf32>
    %cst = arith.constant dense<0.000000e+00> : vector<16x128xf32>
    %10 = tpu.matmul %8, %9, %cst {dimension_numbers = #tpu.dot_dimension_numbers<[1], [0], [0], [1], [0, 0, 1, 1], [], []>} : vector<16x128xf32>, vector<128x128xf32>, vector<16x128xf32> -> vector<16x128xf32>
    %11 = tpu.iota {dimensions = array<i32: 0>} : vector<8x8xi32>
    %12 = tpu.iota {dimensions = array<i32: 1>} : vector<8x8xi32>
    %13 = arith.cmpi sge, %11, %12 : vector<8x8xi32>
    %c0_9 = arith.constant 0 : index
    %c0_10 = arith.constant 0 : index
    %14 = vector.load %arg1[%c0_9, %c0_10] : memref<2x8xi32, #tpu.memory_space<vmem>>, vector<2x8xi32>
    %c0_i32 = arith.constant 0 : i32
    %15 = vector.broadcast %c0_i32 : i32 to vector<2x8xi32>
    %16 = arith.cmpi sgt, %14, %15 : vector<2x8xi32>
    %17 = vector.shape_cast %13 : vector<8x8xi1> to vector<1x8x8xi1>
    %18 = vector.shape_cast %16 : vector<2x8xi1> to vector<2x1x8xi1>
    %19 = vector.broadcast %17 : vector<1x8x8xi1> to vector<2x8x8xi1>
    %20 = vector.broadcast %18 : vector<2x1x8xi1> to vector<2x8x8xi1>
    %21 = arith.andi %19, %20 : vector<2x8x8xi1>
    %cst_11 = arith.constant 0.000000e+00 : f32
    %cst_12 = arith.constant -1.000000e+09 : f32
    %22 = vector.broadcast %cst_11 : f32 to vector<2x8x8xf32>
    %23 = vector.broadcast %cst_12 : f32 to vector<2x8x8xf32>
    %24 = arith.select %21, %22, %23 : vector<2x8x8xi1>, vector<2x8x8xf32>
    %25 = tpu.concatenate %24, %24, %24, %24 in 0 : vector<2x8x8xf32>, vector<2x8x8xf32>, vector<2x8x8xf32>, vector<2x8x8xf32> -> vector<8x8x8xf32>
    %c0_13 = arith.constant 0 : index
    %c0_14 = arith.constant 0 : index
    %c0_15 = arith.constant 0 : index
    %26 = vector.load %arg6[%c0_13, %c0_14, %c0_15] : memref<2x1x128xf32, #tpu.memory_space<vmem>>, vector<1x1x128xf32>
    %27 = vector.shape_cast %26 : vector<1x1x128xf32> to vector<1x128xf32>
    %28 = arith.mulf %10, %10 : vector<16x128xf32>
    %cst_16 = arith.constant dense<0.000000e+00> : vector<16xf32>
    %29 = vector.multi_reduction <add>, %28, %cst_16 [1] : vector<16x128xf32> to vector<16xf32>
    %30 = vector.shape_cast %29 : vector<16xf32> to vector<16x1xf32>
    %cst_17 = arith.constant 3.125000e-02 : f32
    %31 = vector.broadcast %cst_17 : f32 to vector<16x1xf32>
    %32 = arith.mulf %30, %31 : vector<16x1xf32>
    %cst_18 = arith.constant 9.99999997E-7 : f32
    %33 = vector.broadcast %cst_18 : f32 to vector<16x1xf32>
    %34 = arith.addf %32, %33 : vector<16x1xf32>
    %35 = math.rsqrt %34 : vector<16x1xf32>
    %36 = vector.broadcast %35 : vector<16x1xf32> to vector<16x128xf32>
    %37 = arith.mulf %10, %36 : vector<16x128xf32>
    %38 = vector.broadcast %27 : vector<1x128xf32> to vector<16x128xf32>
    %39 = arith.mulf %37, %38 : vector<16x128xf32>
    %c0_19 = arith.constant 0 : index
    %c0_20 = arith.constant 0 : index
    %c0_21 = arith.constant 0 : index
    %40 = vector.load %arg8[%c0_19, %c0_20, %c0_21] : memref<2x128x384xf32, #tpu.memory_space<vmem>>, vector<1x128x384xf32>
    %41 = vector.shape_cast %40 : vector<1x128x384xf32> to vector<128x384xf32>
    %cst_22 = arith.constant dense<0.000000e+00> : vector<16x384xf32>
    %42 = tpu.matmul %39, %41, %cst_22 {dimension_numbers = #tpu.dot_dimension_numbers<[1], [0], [0], [1], [0, 0, 1, 1], [], []>} : vector<16x128xf32>, vector<128x384xf32>, vector<16x384xf32> -> vector<16x384xf32>
    %43 = vector.extract_strided_slice %42 {offsets = [0, 0], sizes = [16, 128], strides = [1, 1]} : vector<16x384xf32> to vector<16x128xf32>
    %44 = arith.mulf %43, %0 : vector<16x128xf32>
    %cst_23 = arith.constant dense<0.000000e+00> : vector<16x128xf32>
    %45 = tpu.matmul %43, %2, %cst_23 {dimension_numbers = #tpu.dot_dimension_numbers<[1], [0], [0], [1], [0, 0, 1, 1], [], []>} : vector<16x128xf32>, vector<128x128xf32>, vector<16x128xf32> -> vector<16x128xf32>
    %46 = arith.mulf %45, %1 : vector<16x128xf32>
    %47 = arith.addf %44, %46 : vector<16x128xf32>
    %48 = vector.extract_strided_slice %42 {offsets = [0, 128], sizes = [16, 128], strides = [1, 1]} : vector<16x384xf32> to vector<16x128xf32>
    %49 = arith.mulf %48, %0 : vector<16x128xf32>
    %cst_24 = arith.constant dense<0.000000e+00> : vector<16x128xf32>
    %50 = tpu.matmul %48, %2, %cst_24 {dimension_numbers = #tpu.dot_dimension_numbers<[1], [0], [0], [1], [0, 0, 1, 1], [], []>} : vector<16x128xf32>, vector<128x128xf32>, vector<16x128xf32> -> vector<16x128xf32>
    %51 = arith.mulf %50, %1 : vector<16x128xf32>
    %52 = arith.addf %49, %51 : vector<16x128xf32>
    %53 = vector.extract_strided_slice %42 {offsets = [0, 256], sizes = [16, 128], strides = [1, 1]} : vector<16x384xf32> to vector<16x128xf32>
    %54 = vector.extract_strided_slice %47 {offsets = [0, 0], sizes = [16, 8], strides = [1, 1]} : vector<16x128xf32> to vector<16x8xf32>
    %55 = vector.extract_strided_slice %47 {offsets = [0, 8], sizes = [16, 8], strides = [1, 1]} : vector<16x128xf32> to vector<16x8xf32>
    %56 = vector.extract_strided_slice %47 {offsets = [0, 16], sizes = [16, 8], strides = [1, 1]} : vector<16x128xf32> to vector<16x8xf32>
    %57 = vector.extract_strided_slice %47 {offsets = [0, 24], sizes = [16, 8], strides = [1, 1]} : vector<16x128xf32> to vector<16x8xf32>
    %58 = tpu.concatenate %54, %55, %56, %57 in 0 : vector<16x8xf32>, vector<16x8xf32>, vector<16x8xf32>, vector<16x8xf32> -> vector<64x8xf32>
    %59 = vector.shape_cast %58 : vector<64x8xf32> to vector<8x8x8xf32>
    %60 = vector.extract_strided_slice %52 {offsets = [0, 0], sizes = [16, 8], strides = [1, 1]} : vector<16x128xf32> to vector<16x8xf32>
    %61 = vector.extract_strided_slice %52 {offsets = [0, 8], sizes = [16, 8], strides = [1, 1]} : vector<16x128xf32> to vector<16x8xf32>
    %62 = vector.extract_strided_slice %52 {offsets = [0, 16], sizes = [16, 8], strides = [1, 1]} : vector<16x128xf32> to vector<16x8xf32>
    %63 = vector.extract_strided_slice %52 {offsets = [0, 24], sizes = [16, 8], strides = [1, 1]} : vector<16x128xf32> to vector<16x8xf32>
    %64 = tpu.concatenate %60, %61, %62, %63 in 0 : vector<16x8xf32>, vector<16x8xf32>, vector<16x8xf32>, vector<16x8xf32> -> vector<64x8xf32>
    %65 = vector.shape_cast %64 : vector<64x8xf32> to vector<8x8x8xf32>
    %66 = vector.extract_strided_slice %53 {offsets = [0, 0], sizes = [16, 8], strides = [1, 1]} : vector<16x128xf32> to vector<16x8xf32>
    %67 = vector.extract_strided_slice %53 {offsets = [0, 8], sizes = [16, 8], strides = [1, 1]} : vector<16x128xf32> to vector<16x8xf32>
    %68 = vector.extract_strided_slice %53 {offsets = [0, 16], sizes = [16, 8], strides = [1, 1]} : vector<16x128xf32> to vector<16x8xf32>
    %69 = vector.extract_strided_slice %53 {offsets = [0, 24], sizes = [16, 8], strides = [1, 1]} : vector<16x128xf32> to vector<16x8xf32>
    %70 = tpu.concatenate %66, %67, %68, %69 in 0 : vector<16x8xf32>, vector<16x8xf32>, vector<16x8xf32>, vector<16x8xf32> -> vector<64x8xf32>
    %71 = vector.shape_cast %70 : vector<64x8xf32> to vector<8x8x8xf32>
    "tpu.trace_start"() <{level = 10 : i32, message = "gqd,gkd->gqk"}> : () -> ()
    %cst_25 = arith.constant dense<0.000000e+00> : vector<8x8x8xf32>
    %72 = tpu.matmul %59, %65, %cst_25 {dimension_numbers = #tpu.dot_dimension_numbers<[2], [2], [1], [1], [0, 0, 0, 1, 1, 1], [0], [0]>} : vector<8x8x8xf32>, vector<8x8x8xf32>, vector<8x8x8xf32> -> vector<8x8x8xf32>
    "tpu.trace_stop"() : () -> ()
    %73 = arith.addf %72, %25 : vector<8x8x8xf32>
    %cst_26 = arith.constant dense<0xFF800000> : vector<8x8xf32>
    %74 = vector.multi_reduction <maximumf>, %73, %cst_26 [2] : vector<8x8x8xf32> to vector<8x8xf32>
    %75 = vector.shape_cast %74 : vector<8x8xf32> to vector<8x8x1xf32>
    %76 = vector.broadcast %75 : vector<8x8x1xf32> to vector<8x8x8xf32>
    %77 = arith.subf %73, %76 : vector<8x8x8xf32>
    %78 = math.exp %77 : vector<8x8x8xf32>
    %cst_27 = arith.constant dense<0.000000e+00> : vector<8x8xf32>
    %79 = vector.multi_reduction <add>, %78, %cst_27 [2] : vector<8x8x8xf32> to vector<8x8xf32>
    %80 = vector.shape_cast %79 : vector<8x8xf32> to vector<8x8x1xf32>
    %81 = tpu.reciprocal %80 {approx = true} : vector<8x8x1xf32> -> vector<8x8x1xf32>
    %82 = vector.broadcast %81 : vector<8x8x1xf32> to vector<8x8x8xf32>
    %83 = arith.mulf %78, %82 : vector<8x8x8xf32>
    "tpu.trace_start"() <{level = 10 : i32, message = "gqk,gkd->gqd"}> : () -> ()
    %cst_28 = arith.constant dense<0.000000e+00> : vector<8x8x8xf32>
    %84 = tpu.matmul %83, %71, %cst_28 {dimension_numbers = #tpu.dot_dimension_numbers<[2], [1], [1], [2], [0, 0, 0, 1, 1, 2], [0], [0]>} : vector<8x8x8xf32>, vector<8x8x8xf32>, vector<8x8x8xf32> -> vector<8x8x8xf32>
    %cst_29 = arith.constant 0.000000e+00 : f32
    "tpu.trace_stop"() : () -> ()
    %85 = vector.broadcast %cst_29 : f32 to vector<16x128xf32>
    %86 = vector.extract_strided_slice %84 {offsets = [0, 0, 0], sizes = [2, 8, 8], strides = [1, 1, 1]} : vector<8x8x8xf32> to vector<2x8x8xf32>
    %87 = vector.shape_cast %86 : vector<2x8x8xf32> to vector<16x8xf32>
    %c0_30 = arith.constant 0 : index
    %c0_31 = arith.constant 0 : index
    %c0_32 = arith.constant 0 : index
    %88 = vector.load %arg9[%c0_30, %c0_31, %c0_32] : memref<8x8x128xf32, #tpu.memory_space<vmem>>, vector<1x8x128xf32>
    %89 = vector.shape_cast %88 : vector<1x8x128xf32> to vector<8x128xf32>
    %cst_33 = arith.constant dense<0.000000e+00> : vector<16x128xf32>
    %90 = tpu.matmul %87, %89, %cst_33 {dimension_numbers = #tpu.dot_dimension_numbers<[1], [0], [0], [1], [0, 0, 1, 1], [], []>} : vector<16x8xf32>, vector<8x128xf32>, vector<16x128xf32> -> vector<16x128xf32>
    %91 = arith.addf %85, %90 : vector<16x128xf32>
    %92 = vector.extract_strided_slice %84 {offsets = [2, 0, 0], sizes = [2, 8, 8], strides = [1, 1, 1]} : vector<8x8x8xf32> to vector<2x8x8xf32>
    %93 = vector.shape_cast %92 : vector<2x8x8xf32> to vector<16x8xf32>
    %c1 = arith.constant 1 : index
    %c0_34 = arith.constant 0 : index
    %c0_35 = arith.constant 0 : index
    %94 = vector.load %arg9[%c1, %c0_34, %c0_35] : memref<8x8x128xf32, #tpu.memory_space<vmem>>, vector<1x8x128xf32>
    %95 = vector.shape_cast %94 : vector<1x8x128xf32> to vector<8x128xf32>
    %cst_36 = arith.constant dense<0.000000e+00> : vector<16x128xf32>
    %96 = tpu.matmul %93, %95, %cst_36 {dimension_numbers = #tpu.dot_dimension_numbers<[1], [0], [0], [1], [0, 0, 1, 1], [], []>} : vector<16x8xf32>, vector<8x128xf32>, vector<16x128xf32> -> vector<16x128xf32>
    %97 = arith.addf %91, %96 : vector<16x128xf32>
    %98 = vector.extract_strided_slice %84 {offsets = [4, 0, 0], sizes = [2, 8, 8], strides = [1, 1, 1]} : vector<8x8x8xf32> to vector<2x8x8xf32>
    %99 = vector.shape_cast %98 : vector<2x8x8xf32> to vector<16x8xf32>
    %c2 = arith.constant 2 : index
    %c0_37 = arith.constant 0 : index
    %c0_38 = arith.constant 0 : index
    %100 = vector.load %arg9[%c2, %c0_37, %c0_38] : memref<8x8x128xf32, #tpu.memory_space<vmem>>, vector<1x8x128xf32>
    %101 = vector.shape_cast %100 : vector<1x8x128xf32> to vector<8x128xf32>
    %cst_39 = arith.constant dense<0.000000e+00> : vector<16x128xf32>
    %102 = tpu.matmul %99, %101, %cst_39 {dimension_numbers = #tpu.dot_dimension_numbers<[1], [0], [0], [1], [0, 0, 1, 1], [], []>} : vector<16x8xf32>, vector<8x128xf32>, vector<16x128xf32> -> vector<16x128xf32>
    %103 = arith.addf %97, %102 : vector<16x128xf32>
    %104 = vector.extract_strided_slice %84 {offsets = [6, 0, 0], sizes = [2, 8, 8], strides = [1, 1, 1]} : vector<8x8x8xf32> to vector<2x8x8xf32>
    %105 = vector.shape_cast %104 : vector<2x8x8xf32> to vector<16x8xf32>
    %c3 = arith.constant 3 : index
    %c0_40 = arith.constant 0 : index
    %c0_41 = arith.constant 0 : index
    %106 = vector.load %arg9[%c3, %c0_40, %c0_41] : memref<8x8x128xf32, #tpu.memory_space<vmem>>, vector<1x8x128xf32>
    %107 = vector.shape_cast %106 : vector<1x8x128xf32> to vector<8x128xf32>
    %cst_42 = arith.constant dense<0.000000e+00> : vector<16x128xf32>
    %108 = tpu.matmul %105, %107, %cst_42 {dimension_numbers = #tpu.dot_dimension_numbers<[1], [0], [0], [1], [0, 0, 1, 1], [], []>} : vector<16x8xf32>, vector<8x128xf32>, vector<16x128xf32> -> vector<16x128xf32>
    %109 = arith.addf %103, %108 : vector<16x128xf32>
    %110 = arith.addf %10, %109 : vector<16x128xf32>
    %c0_43 = arith.constant 0 : index
    %c0_44 = arith.constant 0 : index
    %c0_45 = arith.constant 0 : index
    %111 = vector.load %arg7[%c0_43, %c0_44, %c0_45] : memref<2x1x128xf32, #tpu.memory_space<vmem>>, vector<1x1x128xf32>
    %112 = vector.shape_cast %111 : vector<1x1x128xf32> to vector<1x128xf32>
    %113 = arith.mulf %110, %110 : vector<16x128xf32>
    %cst_46 = arith.constant dense<0.000000e+00> : vector<16xf32>
    %114 = vector.multi_reduction <add>, %113, %cst_46 [1] : vector<16x128xf32> to vector<16xf32>
    %115 = vector.shape_cast %114 : vector<16xf32> to vector<16x1xf32>
    %cst_47 = arith.constant 3.125000e-02 : f32
    %116 = vector.broadcast %cst_47 : f32 to vector<16x1xf32>
    %117 = arith.mulf %115, %116 : vector<16x1xf32>
    %cst_48 = arith.constant 9.99999997E-7 : f32
    %118 = vector.broadcast %cst_48 : f32 to vector<16x1xf32>
    %119 = arith.addf %117, %118 : vector<16x1xf32>
    %120 = math.rsqrt %119 : vector<16x1xf32>
    %121 = vector.broadcast %120 : vector<16x1xf32> to vector<16x128xf32>
    %122 = arith.mulf %110, %121 : vector<16x128xf32>
    %123 = vector.broadcast %112 : vector<1x128xf32> to vector<16x128xf32>
    %124 = arith.mulf %122, %123 : vector<16x128xf32>
    %c0_49 = arith.constant 0 : index
    %c0_50 = arith.constant 0 : index
    %c0_51 = arith.constant 0 : index
    %125 = vector.load %arg10[%c0_49, %c0_50, %c0_51] : memref<2x128x256xf32, #tpu.memory_space<vmem>>, vector<1x128x256xf32>
    %126 = vector.shape_cast %125 : vector<1x128x256xf32> to vector<128x256xf32>
    %cst_52 = arith.constant dense<0.000000e+00> : vector<16x256xf32>
    %127 = tpu.matmul %124, %126, %cst_52 {dimension_numbers = #tpu.dot_dimension_numbers<[1], [0], [0], [1], [0, 0, 1, 1], [], []>} : vector<16x128xf32>, vector<128x256xf32>, vector<16x256xf32> -> vector<16x256xf32>
    %128 = vector.extract_strided_slice %127 {offsets = [0, 0], sizes = [16, 128], strides = [1, 1]} : vector<16x256xf32> to vector<16x128xf32>
    %129 = vector.extract_strided_slice %127 {offsets = [0, 128], sizes = [16, 128], strides = [1, 1]} : vector<16x256xf32> to vector<16x128xf32>
    %130 = arith.negf %128 : vector<16x128xf32>
    %131 = math.exp %130 : vector<16x128xf32>
    %cst_53 = arith.constant 1.000000e+00 : f32
    %132 = vector.broadcast %cst_53 : f32 to vector<16x128xf32>
    %133 = arith.addf %132, %131 : vector<16x128xf32>
    %134 = arith.divf %132, %133 : vector<16x128xf32>
    %135 = arith.mulf %128, %134 : vector<16x128xf32>
    %136 = arith.mulf %135, %129 : vector<16x128xf32>
    %c0_54 = arith.constant 0 : index
    %c0_55 = arith.constant 0 : index
    %c0_56 = arith.constant 0 : index
    %137 = vector.load %arg11[%c0_54, %c0_55, %c0_56] : memref<2x128x128xf32, #tpu.memory_space<vmem>>, vector<1x128x128xf32>
    %138 = vector.shape_cast %137 : vector<1x128x128xf32> to vector<128x128xf32>
    %cst_57 = arith.constant dense<0.000000e+00> : vector<16x128xf32>
    %139 = tpu.matmul %136, %138, %cst_57 {dimension_numbers = #tpu.dot_dimension_numbers<[1], [0], [0], [1], [0, 0, 1, 1], [], []>} : vector<16x128xf32>, vector<128x128xf32>, vector<16x128xf32> -> vector<16x128xf32>
    %140 = arith.addf %110, %139 : vector<16x128xf32>
    %c1_58 = arith.constant 1 : index
    %c0_59 = arith.constant 0 : index
    %c0_60 = arith.constant 0 : index
    %141 = vector.load %arg6[%c1_58, %c0_59, %c0_60] : memref<2x1x128xf32, #tpu.memory_space<vmem>>, vector<1x1x128xf32>
    %142 = vector.shape_cast %141 : vector<1x1x128xf32> to vector<1x128xf32>
    %143 = arith.mulf %140, %140 : vector<16x128xf32>
    %cst_61 = arith.constant dense<0.000000e+00> : vector<16xf32>
    %144 = vector.multi_reduction <add>, %143, %cst_61 [1] : vector<16x128xf32> to vector<16xf32>
    %145 = vector.shape_cast %144 : vector<16xf32> to vector<16x1xf32>
    %cst_62 = arith.constant 3.125000e-02 : f32
    %146 = vector.broadcast %cst_62 : f32 to vector<16x1xf32>
    %147 = arith.mulf %145, %146 : vector<16x1xf32>
    %cst_63 = arith.constant 9.99999997E-7 : f32
    %148 = vector.broadcast %cst_63 : f32 to vector<16x1xf32>
    %149 = arith.addf %147, %148 : vector<16x1xf32>
    %150 = math.rsqrt %149 : vector<16x1xf32>
    %151 = vector.broadcast %150 : vector<16x1xf32> to vector<16x128xf32>
    %152 = arith.mulf %140, %151 : vector<16x128xf32>
    %153 = vector.broadcast %142 : vector<1x128xf32> to vector<16x128xf32>
    %154 = arith.mulf %152, %153 : vector<16x128xf32>
    %c1_64 = arith.constant 1 : index
    %c0_65 = arith.constant 0 : index
    %c0_66 = arith.constant 0 : index
    %155 = vector.load %arg8[%c1_64, %c0_65, %c0_66] : memref<2x128x384xf32, #tpu.memory_space<vmem>>, vector<1x128x384xf32>
    %156 = vector.shape_cast %155 : vector<1x128x384xf32> to vector<128x384xf32>
    %cst_67 = arith.constant dense<0.000000e+00> : vector<16x384xf32>
    %157 = tpu.matmul %154, %156, %cst_67 {dimension_numbers = #tpu.dot_dimension_numbers<[1], [0], [0], [1], [0, 0, 1, 1], [], []>} : vector<16x128xf32>, vector<128x384xf32>, vector<16x384xf32> -> vector<16x384xf32>
    %158 = vector.extract_strided_slice %157 {offsets = [0, 0], sizes = [16, 128], strides = [1, 1]} : vector<16x384xf32> to vector<16x128xf32>
    %159 = arith.mulf %158, %0 : vector<16x128xf32>
    %cst_68 = arith.constant dense<0.000000e+00> : vector<16x128xf32>
    %160 = tpu.matmul %158, %2, %cst_68 {dimension_numbers = #tpu.dot_dimension_numbers<[1], [0], [0], [1], [0, 0, 1, 1], [], []>} : vector<16x128xf32>, vector<128x128xf32>, vector<16x128xf32> -> vector<16x128xf32>
    %161 = arith.mulf %160, %1 : vector<16x128xf32>
    %162 = arith.addf %159, %161 : vector<16x128xf32>
    %163 = vector.extract_strided_slice %157 {offsets = [0, 128], sizes = [16, 128], strides = [1, 1]} : vector<16x384xf32> to vector<16x128xf32>
    %164 = arith.mulf %163, %0 : vector<16x128xf32>
    %cst_69 = arith.constant dense<0.000000e+00> : vector<16x128xf32>
    %165 = tpu.matmul %163, %2, %cst_69 {dimension_numbers = #tpu.dot_dimension_numbers<[1], [0], [0], [1], [0, 0, 1, 1], [], []>} : vector<16x128xf32>, vector<128x128xf32>, vector<16x128xf32> -> vector<16x128xf32>
    %166 = arith.mulf %165, %1 : vector<16x128xf32>
    %167 = arith.addf %164, %166 : vector<16x128xf32>
    %168 = vector.extract_strided_slice %157 {offsets = [0, 256], sizes = [16, 128], strides = [1, 1]} : vector<16x384xf32> to vector<16x128xf32>
    %169 = vector.extract_strided_slice %162 {offsets = [0, 0], sizes = [16, 8], strides = [1, 1]} : vector<16x128xf32> to vector<16x8xf32>
    %170 = vector.extract_strided_slice %162 {offsets = [0, 8], sizes = [16, 8], strides = [1, 1]} : vector<16x128xf32> to vector<16x8xf32>
    %171 = vector.extract_strided_slice %162 {offsets = [0, 16], sizes = [16, 8], strides = [1, 1]} : vector<16x128xf32> to vector<16x8xf32>
    %172 = vector.extract_strided_slice %162 {offsets = [0, 24], sizes = [16, 8], strides = [1, 1]} : vector<16x128xf32> to vector<16x8xf32>
    %173 = tpu.concatenate %169, %170, %171, %172 in 0 : vector<16x8xf32>, vector<16x8xf32>, vector<16x8xf32>, vector<16x8xf32> -> vector<64x8xf32>
    %174 = vector.shape_cast %173 : vector<64x8xf32> to vector<8x8x8xf32>
    %175 = vector.extract_strided_slice %167 {offsets = [0, 0], sizes = [16, 8], strides = [1, 1]} : vector<16x128xf32> to vector<16x8xf32>
    %176 = vector.extract_strided_slice %167 {offsets = [0, 8], sizes = [16, 8], strides = [1, 1]} : vector<16x128xf32> to vector<16x8xf32>
    %177 = vector.extract_strided_slice %167 {offsets = [0, 16], sizes = [16, 8], strides = [1, 1]} : vector<16x128xf32> to vector<16x8xf32>
    %178 = vector.extract_strided_slice %167 {offsets = [0, 24], sizes = [16, 8], strides = [1, 1]} : vector<16x128xf32> to vector<16x8xf32>
    %179 = tpu.concatenate %175, %176, %177, %178 in 0 : vector<16x8xf32>, vector<16x8xf32>, vector<16x8xf32>, vector<16x8xf32> -> vector<64x8xf32>
    %180 = vector.shape_cast %179 : vector<64x8xf32> to vector<8x8x8xf32>
    %181 = vector.extract_strided_slice %168 {offsets = [0, 0], sizes = [16, 8], strides = [1, 1]} : vector<16x128xf32> to vector<16x8xf32>
    %182 = vector.extract_strided_slice %168 {offsets = [0, 8], sizes = [16, 8], strides = [1, 1]} : vector<16x128xf32> to vector<16x8xf32>
    %183 = vector.extract_strided_slice %168 {offsets = [0, 16], sizes = [16, 8], strides = [1, 1]} : vector<16x128xf32> to vector<16x8xf32>
    %184 = vector.extract_strided_slice %168 {offsets = [0, 24], sizes = [16, 8], strides = [1, 1]} : vector<16x128xf32> to vector<16x8xf32>
    %185 = tpu.concatenate %181, %182, %183, %184 in 0 : vector<16x8xf32>, vector<16x8xf32>, vector<16x8xf32>, vector<16x8xf32> -> vector<64x8xf32>
    %186 = vector.shape_cast %185 : vector<64x8xf32> to vector<8x8x8xf32>
    "tpu.trace_start"() <{level = 10 : i32, message = "gqd,gkd->gqk"}> : () -> ()
    %cst_70 = arith.constant dense<0.000000e+00> : vector<8x8x8xf32>
    %187 = tpu.matmul %174, %180, %cst_70 {dimension_numbers = #tpu.dot_dimension_numbers<[2], [2], [1], [1], [0, 0, 0, 1, 1, 1], [0], [0]>} : vector<8x8x8xf32>, vector<8x8x8xf32>, vector<8x8x8xf32> -> vector<8x8x8xf32>
    "tpu.trace_stop"() : () -> ()
    %188 = arith.addf %187, %25 : vector<8x8x8xf32>
    %cst_71 = arith.constant dense<0xFF800000> : vector<8x8xf32>
    %189 = vector.multi_reduction <maximumf>, %188, %cst_71 [2] : vector<8x8x8xf32> to vector<8x8xf32>
    %190 = vector.shape_cast %189 : vector<8x8xf32> to vector<8x8x1xf32>
    %191 = vector.broadcast %190 : vector<8x8x1xf32> to vector<8x8x8xf32>
    %192 = arith.subf %188, %191 : vector<8x8x8xf32>
    %193 = math.exp %192 : vector<8x8x8xf32>
    %cst_72 = arith.constant dense<0.000000e+00> : vector<8x8xf32>
    %194 = vector.multi_reduction <add>, %193, %cst_72 [2] : vector<8x8x8xf32> to vector<8x8xf32>
    %195 = vector.shape_cast %194 : vector<8x8xf32> to vector<8x8x1xf32>
    %196 = tpu.reciprocal %195 {approx = true} : vector<8x8x1xf32> -> vector<8x8x1xf32>
    %197 = vector.broadcast %196 : vector<8x8x1xf32> to vector<8x8x8xf32>
    %198 = arith.mulf %193, %197 : vector<8x8x8xf32>
    "tpu.trace_start"() <{level = 10 : i32, message = "gqk,gkd->gqd"}> : () -> ()
    %cst_73 = arith.constant dense<0.000000e+00> : vector<8x8x8xf32>
    %199 = tpu.matmul %198, %186, %cst_73 {dimension_numbers = #tpu.dot_dimension_numbers<[2], [1], [1], [2], [0, 0, 0, 1, 1, 2], [0], [0]>} : vector<8x8x8xf32>, vector<8x8x8xf32>, vector<8x8x8xf32> -> vector<8x8x8xf32>
    %cst_74 = arith.constant 0.000000e+00 : f32
    "tpu.trace_stop"() : () -> ()
    %200 = vector.broadcast %cst_74 : f32 to vector<16x128xf32>
    %201 = vector.extract_strided_slice %199 {offsets = [0, 0, 0], sizes = [2, 8, 8], strides = [1, 1, 1]} : vector<8x8x8xf32> to vector<2x8x8xf32>
    %202 = vector.shape_cast %201 : vector<2x8x8xf32> to vector<16x8xf32>
    %c4 = arith.constant 4 : index
    %c0_75 = arith.constant 0 : index
    %c0_76 = arith.constant 0 : index
    %203 = vector.load %arg9[%c4, %c0_75, %c0_76] : memref<8x8x128xf32, #tpu.memory_space<vmem>>, vector<1x8x128xf32>
    %204 = vector.shape_cast %203 : vector<1x8x128xf32> to vector<8x128xf32>
    %cst_77 = arith.constant dense<0.000000e+00> : vector<16x128xf32>
    %205 = tpu.matmul %202, %204, %cst_77 {dimension_numbers = #tpu.dot_dimension_numbers<[1], [0], [0], [1], [0, 0, 1, 1], [], []>} : vector<16x8xf32>, vector<8x128xf32>, vector<16x128xf32> -> vector<16x128xf32>
    %206 = arith.addf %200, %205 : vector<16x128xf32>
    %207 = vector.extract_strided_slice %199 {offsets = [2, 0, 0], sizes = [2, 8, 8], strides = [1, 1, 1]} : vector<8x8x8xf32> to vector<2x8x8xf32>
    %208 = vector.shape_cast %207 : vector<2x8x8xf32> to vector<16x8xf32>
    %c5 = arith.constant 5 : index
    %c0_78 = arith.constant 0 : index
    %c0_79 = arith.constant 0 : index
    %209 = vector.load %arg9[%c5, %c0_78, %c0_79] : memref<8x8x128xf32, #tpu.memory_space<vmem>>, vector<1x8x128xf32>
    %210 = vector.shape_cast %209 : vector<1x8x128xf32> to vector<8x128xf32>
    %cst_80 = arith.constant dense<0.000000e+00> : vector<16x128xf32>
    %211 = tpu.matmul %208, %210, %cst_80 {dimension_numbers = #tpu.dot_dimension_numbers<[1], [0], [0], [1], [0, 0, 1, 1], [], []>} : vector<16x8xf32>, vector<8x128xf32>, vector<16x128xf32> -> vector<16x128xf32>
    %212 = arith.addf %206, %211 : vector<16x128xf32>
    %213 = vector.extract_strided_slice %199 {offsets = [4, 0, 0], sizes = [2, 8, 8], strides = [1, 1, 1]} : vector<8x8x8xf32> to vector<2x8x8xf32>
    %214 = vector.shape_cast %213 : vector<2x8x8xf32> to vector<16x8xf32>
    %c6 = arith.constant 6 : index
    %c0_81 = arith.constant 0 : index
    %c0_82 = arith.constant 0 : index
    %215 = vector.load %arg9[%c6, %c0_81, %c0_82] : memref<8x8x128xf32, #tpu.memory_space<vmem>>, vector<1x8x128xf32>
    %216 = vector.shape_cast %215 : vector<1x8x128xf32> to vector<8x128xf32>
    %cst_83 = arith.constant dense<0.000000e+00> : vector<16x128xf32>
    %217 = tpu.matmul %214, %216, %cst_83 {dimension_numbers = #tpu.dot_dimension_numbers<[1], [0], [0], [1], [0, 0, 1, 1], [], []>} : vector<16x8xf32>, vector<8x128xf32>, vector<16x128xf32> -> vector<16x128xf32>
    %218 = arith.addf %212, %217 : vector<16x128xf32>
    %219 = vector.extract_strided_slice %199 {offsets = [6, 0, 0], sizes = [2, 8, 8], strides = [1, 1, 1]} : vector<8x8x8xf32> to vector<2x8x8xf32>
    %220 = vector.shape_cast %219 : vector<2x8x8xf32> to vector<16x8xf32>
    %c7 = arith.constant 7 : index
    %c0_84 = arith.constant 0 : index
    %c0_85 = arith.constant 0 : index
    %221 = vector.load %arg9[%c7, %c0_84, %c0_85] : memref<8x8x128xf32, #tpu.memory_space<vmem>>, vector<1x8x128xf32>
    %222 = vector.shape_cast %221 : vector<1x8x128xf32> to vector<8x128xf32>
    %cst_86 = arith.constant dense<0.000000e+00> : vector<16x128xf32>
    %223 = tpu.matmul %220, %222, %cst_86 {dimension_numbers = #tpu.dot_dimension_numbers<[1], [0], [0], [1], [0, 0, 1, 1], [], []>} : vector<16x8xf32>, vector<8x128xf32>, vector<16x128xf32> -> vector<16x128xf32>
    %224 = arith.addf %218, %223 : vector<16x128xf32>
    %225 = arith.addf %140, %224 : vector<16x128xf32>
    %c1_87 = arith.constant 1 : index
    %c0_88 = arith.constant 0 : index
    %c0_89 = arith.constant 0 : index
    %226 = vector.load %arg7[%c1_87, %c0_88, %c0_89] : memref<2x1x128xf32, #tpu.memory_space<vmem>>, vector<1x1x128xf32>
    %227 = vector.shape_cast %226 : vector<1x1x128xf32> to vector<1x128xf32>
    %228 = arith.mulf %225, %225 : vector<16x128xf32>
    %cst_90 = arith.constant dense<0.000000e+00> : vector<16xf32>
    %229 = vector.multi_reduction <add>, %228, %cst_90 [1] : vector<16x128xf32> to vector<16xf32>
    %230 = vector.shape_cast %229 : vector<16xf32> to vector<16x1xf32>
    %cst_91 = arith.constant 3.125000e-02 : f32
    %231 = vector.broadcast %cst_91 : f32 to vector<16x1xf32>
    %232 = arith.mulf %230, %231 : vector<16x1xf32>
    %cst_92 = arith.constant 9.99999997E-7 : f32
    %233 = vector.broadcast %cst_92 : f32 to vector<16x1xf32>
    %234 = arith.addf %232, %233 : vector<16x1xf32>
    %235 = math.rsqrt %234 : vector<16x1xf32>
    %236 = vector.broadcast %235 : vector<16x1xf32> to vector<16x128xf32>
    %237 = arith.mulf %225, %236 : vector<16x128xf32>
    %238 = vector.broadcast %227 : vector<1x128xf32> to vector<16x128xf32>
    %239 = arith.mulf %237, %238 : vector<16x128xf32>
    %c1_93 = arith.constant 1 : index
    %c0_94 = arith.constant 0 : index
    %c0_95 = arith.constant 0 : index
    %240 = vector.load %arg10[%c1_93, %c0_94, %c0_95] : memref<2x128x256xf32, #tpu.memory_space<vmem>>, vector<1x128x256xf32>
    %241 = vector.shape_cast %240 : vector<1x128x256xf32> to vector<128x256xf32>
    %cst_96 = arith.constant dense<0.000000e+00> : vector<16x256xf32>
    %242 = tpu.matmul %239, %241, %cst_96 {dimension_numbers = #tpu.dot_dimension_numbers<[1], [0], [0], [1], [0, 0, 1, 1], [], []>} : vector<16x128xf32>, vector<128x256xf32>, vector<16x256xf32> -> vector<16x256xf32>
    %243 = vector.extract_strided_slice %242 {offsets = [0, 0], sizes = [16, 128], strides = [1, 1]} : vector<16x256xf32> to vector<16x128xf32>
    %244 = vector.extract_strided_slice %242 {offsets = [0, 128], sizes = [16, 128], strides = [1, 1]} : vector<16x256xf32> to vector<16x128xf32>
    %245 = arith.negf %243 : vector<16x128xf32>
    %246 = math.exp %245 : vector<16x128xf32>
    %cst_97 = arith.constant 1.000000e+00 : f32
    %247 = vector.broadcast %cst_97 : f32 to vector<16x128xf32>
    %248 = arith.addf %247, %246 : vector<16x128xf32>
    %249 = arith.divf %247, %248 : vector<16x128xf32>
    %250 = arith.mulf %243, %249 : vector<16x128xf32>
    %251 = arith.mulf %250, %244 : vector<16x128xf32>
    %c1_98 = arith.constant 1 : index
    %c0_99 = arith.constant 0 : index
    %c0_100 = arith.constant 0 : index
    %252 = vector.load %arg11[%c1_98, %c0_99, %c0_100] : memref<2x128x128xf32, #tpu.memory_space<vmem>>, vector<1x128x128xf32>
    %253 = vector.shape_cast %252 : vector<1x128x128xf32> to vector<128x128xf32>
    %cst_101 = arith.constant dense<0.000000e+00> : vector<16x128xf32>
    %254 = tpu.matmul %251, %253, %cst_101 {dimension_numbers = #tpu.dot_dimension_numbers<[1], [0], [0], [1], [0, 0, 1, 1], [], []>} : vector<16x128xf32>, vector<128x128xf32>, vector<16x128xf32> -> vector<16x128xf32>
    %255 = arith.addf %225, %254 : vector<16x128xf32>
    %c0_102 = arith.constant 0 : index
    %c0_103 = arith.constant 0 : index
    %256 = vector.load %arg12[%c0_102, %c0_103] : memref<1x128xf32, #tpu.memory_space<vmem>>, vector<1x128xf32>
    %257 = arith.mulf %255, %255 : vector<16x128xf32>
    %cst_104 = arith.constant dense<0.000000e+00> : vector<16xf32>
    %258 = vector.multi_reduction <add>, %257, %cst_104 [1] : vector<16x128xf32> to vector<16xf32>
    %259 = vector.shape_cast %258 : vector<16xf32> to vector<16x1xf32>
    %cst_105 = arith.constant 3.125000e-02 : f32
    %260 = vector.broadcast %cst_105 : f32 to vector<16x1xf32>
    %261 = arith.mulf %259, %260 : vector<16x1xf32>
    %cst_106 = arith.constant 9.99999997E-7 : f32
    %262 = vector.broadcast %cst_106 : f32 to vector<16x1xf32>
    %263 = arith.addf %261, %262 : vector<16x1xf32>
    %264 = math.rsqrt %263 : vector<16x1xf32>
    %265 = vector.broadcast %264 : vector<16x1xf32> to vector<16x128xf32>
    %266 = arith.mulf %255, %265 : vector<16x128xf32>
    %267 = vector.broadcast %256 : vector<1x128xf32> to vector<16x128xf32>
    %268 = arith.mulf %266, %267 : vector<16x128xf32>
    %269 = vector.shape_cast %268 : vector<16x128xf32> to vector<2x8x128xf32>
    %270 = vector.extract_strided_slice %269 {offsets = [0, 0, 0], sizes = [2, 1, 128], strides = [1, 1, 1]} : vector<2x8x128xf32> to vector<2x1x128xf32>
    %271 = vector.shape_cast %270 : vector<2x1x128xf32> to vector<2x128xf32>
    %c0_107 = arith.constant 0 : index
    %c0_108 = arith.constant 0 : index
    %272 = vector.load %arg13[%c0_107, %c0_108] : memref<128x128xf32, #tpu.memory_space<vmem>>, vector<128x128xf32>
    %cst_109 = arith.constant dense<0.000000e+00> : vector<2x128xf32>
    %273 = tpu.matmul %271, %272, %cst_109 {dimension_numbers = #tpu.dot_dimension_numbers<[1], [0], [0], [1], [0, 0, 1, 1], [], []>} : vector<2x128xf32>, vector<128x128xf32>, vector<2x128xf32> -> vector<2x128xf32>
    %c0_110 = arith.constant 0 : index
    %c0_111 = arith.constant 0 : index
    %274 = vector.load %arg14[%c0_110, %c0_111] : memref<1x128xf32, #tpu.memory_space<vmem>>, vector<1x128xf32>
    %275 = vector.broadcast %274 : vector<1x128xf32> to vector<2x128xf32>
    %276 = arith.addf %273, %275 : vector<2x128xf32>
    %c0_112 = arith.constant 0 : index
    %c0_113 = arith.constant 0 : index
    %277 = vector.load %arg15[%c0_112, %c0_113] : memref<2x128xf32, #tpu.memory_space<vmem>>, vector<2x128xf32>
    tpu.vector_store %arg15[%c0_112, %c0_113], %276 {strides = array<i32>} : memref<2x128xf32, #tpu.memory_space<vmem>>, vector<2x128xf32>,
    return
  }
}

</mosaic_0001>

<llo_original>
// kernel: tile.13
$region0: #{tile.13}
  #allocation0 [shape = 's32[1]{0}', space=sflag, size = 0x4, scoped, tag = 'scoped memory for tile.13']
  %s0 = inlined_call_operand.vmem [shape: f32[8,8], index: 0, kind: input, shape index: {}]
  %s1 = inlined_call_operand.vmem [shape: f32[2,8,16,8], index: 1, kind: output, shape index: {}]
  // Predicated region
  $region2: #{tile.13} parent=0 // pred_check
    _
  $region3: #{tile.13} parent=0 // pred_check_branch
    %3 = sbr.rel (0) target = $region5
  $region4: #{tile.13} parent=0 // pred_region
    _
  $region5: #{tile.13} parent=0 // pred_fallthru
    _
  %v4 = vld [vmem:[%s0] ss:$0 sm:$0xff]
  %5 = vst [vmem:[%s1] sm:$0xff] %v4
  %s6 = scalar_lea.vmem %s1, 128
  %7 = vst [vmem:[%s6] sm:$0xff] %v4
  %s8 = scalar_lea.vmem %s0, 1
  %v9 = vld [vmem:[%s8] ss:$0 sm:$0xff]
  %s10 = scalar_lea.vmem %s1, 16
  %11 = vst [vmem:[%s10] sm:$0xff] %v9
  %s12 = scalar_lea.vmem %s1, 144
  %13 = vst [vmem:[%s12] sm:$0xff] %v9
  %s14 = scalar_lea.vmem %s0, 2
  %v15 = vld [vmem:[%s14] ss:$0 sm:$0xff]
  %s16 = scalar_lea.vmem %s1, 32
  %17 = vst [vmem:[%s16] sm:$0xff] %v15
  %s18 = scalar_lea.vmem %s1, 160
  %19 = vst [vmem:[%s18] sm:$0xff] %v15
  %s20 = scalar_lea.vmem %s0, 3
  %v21 = vld [vmem:[%s20] ss:$0 sm:$0xff]
  %s22 = scalar_lea.vmem %s1, 48
  %23 = vst [vmem:[%s22] sm:$0xff] %v21
  %s24 = scalar_lea.vmem %s1, 176
  %25 = vst [vmem:[%s24] sm:$0xff] %v21
  %s26 = scalar_lea.vmem %s0, 4
  %v27 = vld [vmem:[%s26] ss:$0 sm:$0xff]
  %s28 = scalar_lea.vmem %s1, 64
  %29 = vst [vmem:[%s28] sm:$0xff] %v27
  %s30 = scalar_lea.vmem %s1, 192
  %31 = vst [vmem:[%s30] sm:$0xff] %v27
  %s32 = scalar_lea.vmem %s0, 5
  %v33 = vld [vmem:[%s32] ss:$0 sm:$0xff]
  %s34 = scalar_lea.vmem %s1, 80
  %35 = vst [vmem:[%s34] sm:$0xff] %v33
  %s36 = scalar_lea.vmem %s1, 208
  %37 = vst [vmem:[%s36] sm:$0xff] %v33
  %s38 = scalar_lea.vmem %s0, 6
  %v39 = vld [vmem:[%s38] ss:$0 sm:$0xff]
  %s40 = scalar_lea.vmem %s1, 96
  %41 = vst [vmem:[%s40] sm:$0xff] %v39
  %s42 = scalar_lea.vmem %s1, 224
  %43 = vst [vmem:[%s42] sm:$0xff] %v39
  %s44 = scalar_lea.vmem %s0, 7
  %v45 = vld [vmem:[%s44] ss:$0 sm:$0xff]
  %s46 = scalar_lea.vmem %s1, 112
  %47 = vst [vmem:[%s46] sm:$0xff] %v45
  %s48 = scalar_lea.vmem %s1, 240
  %49 = vst [vmem:[%s48] sm:$0xff] %v45
  %s50 = scalar_lea.vmem %s1, 8
  %51 = vst [vmem:[%s50] sm:$0xff] %v4
  %s52 = scalar_lea.vmem %s1, 136
  %53 = vst [vmem:[%s52] sm:$0xff] %v4
  %s54 = scalar_lea.vmem %s1, 24
  %55 = vst [vmem:[%s54] sm:$0xff] %v9
  %s56 = scalar_lea.vmem %s1, 152
  %57 = vst [vmem:[%s56] sm:$0xff] %v9
  %s58 = scalar_lea.vmem %s1, 40
  %59 = vst [vmem:[%s58] sm:$0xff] %v15
  %s60 = scalar_lea.vmem %s1, 168
  %61 = vst [vmem:[%s60] sm:$0xff] %v15
  %s62 = scalar_lea.vmem %s1, 56
  %63 = vst [vmem:[%s62] sm:$0xff] %v21
  %s64 = scalar_lea.vmem %s1, 184
  %65 = vst [vmem:[%s64] sm:$0xff] %v21
  %s66 = scalar_lea.vmem %s1, 72
  %67 = vst [vmem:[%s66] sm:$0xff] %v27
  %s68 = scalar_lea.vmem %s1, 200
  %69 = vst [vmem:[%s68] sm:$0xff] %v27
  %s70 = scalar_lea.vmem %s1, 88
  %71 = vst [vmem:[%s70] sm:$0xff] %v33
  %s72 = scalar_lea.vmem %s1, 216
  %73 = vst [vmem:[%s72] sm:$0xff] %v33
  %s74 = scalar_lea.vmem %s1, 104
  %75 = vst [vmem:[%s74] sm:$0xff] %v39
  %s76 = scalar_lea.vmem %s1, 232
  %77 = vst [vmem:[%s76] sm:$0xff] %v39
  %s78 = scalar_lea.vmem %s1, 120
  %79 = vst [vmem:[%s78] sm:$0xff] %v45
  %s80 = scalar_lea.vmem %s1, 248
  %81 = vst [vmem:[%s80] sm:$0xff] %v45

// kernel: tile.14
$region0: #{tile.14}
  %s0 = inlined_call_operand.vmem [shape: f32[2,8,16,8], index: 0, kind: input, shape index: {}]
  %s1 = inlined_call_operand.vmem [shape: f32[16,128], index: 1, kind: output, shape index: {}]
  %s2 = smov 3
  %v3 = vld [vmem:[%s0] ss:$16 sm:%s2]
  %s4 = smov 12
  %v5 = vld [vmem:[%s0] ss:$16 sm:%s4]
  %vm6 = vcmask 1043458
  %v7 = vsel %vm6, %v5, %v3
  %s8 = smov 48
  %v9 = vld [vmem:[%s0] ss:$16 sm:%s8]
  %vm10 = vcmask 1045508
  %v11 = vsel %vm10, %v9, %v7
  %s12 = smov 192
  %v13 = vld [vmem:[%s0] ss:$16 sm:%s12]
  %vm14 = vcmask 1047558
  %v15 = vsel %vm14, %v13, %v11
  %vm16 = vcmask 64512
  %17 = vst.msk [vmem:[%s1] sm:$0xff] %vm16, %v15
  %s18 = scalar_lea.vmem %s0, 128
  %s19 = smov 3
  %v20 = vld [vmem:[%s18] ss:$16 sm:%s19]
  %s21 = scalar_lea.vmem %s0, 128
  %s22 = smov 12
  %v23 = vld [vmem:[%s21] ss:$16 sm:%s22]
  %vm24 = vcmask 1043458
  %v25 = vsel %vm24, %v23, %v20
  %s26 = scalar_lea.vmem %s0, 128
  %s27 = smov 48
  %v28 = vld [vmem:[%s26] ss:$16 sm:%s27]
  %vm29 = vcmask 1045508
  %v30 = vsel %vm29, %v28, %v25
  %s31 = scalar_lea.vmem %s0, 128
  %s32 = smov 192
  %v33 = vld [vmem:[%s31] ss:$16 sm:%s32]
  %vm34 = vcmask 1047558
  %v35 = vsel %vm34, %v33, %v30
  %vm36 = vcmask 64512
  %s37 = scalar_lea.vmem %s1, 8
  %38 = vst.msk [vmem:[%s37] sm:$0xff] %vm36, %v35
  %s39 = scalar_lea.vmem %s0, 15
  %s40 = smov 3
  %v41 = vld [vmem:[%s39] ss:$16 sm:%s40]
  %s42 = scalar_lea.vmem %s0, 15
  %s43 = smov 12
  %v44 = vld [vmem:[%s42] ss:$16 sm:%s43]
  %vm45 = vcmask 1043458
  %v46 = vsel %vm45, %v44, %v41
  %s47 = scalar_lea.vmem %s0, 15
  %s48 = smov 48
  %v49 = vld [vmem:[%s47] ss:$16 sm:%s48]
  %vm50 = vcmask 1045508
  %v51 = vsel %vm50, %v49, %v46
  %s52 = scalar_lea.vmem %s0, 15
  %s53 = smov 192
  %v54 = vld [vmem:[%s52] ss:$16 sm:%s53]
  %vm55 = vcmask 1047558
  %v56 = vsel %vm55, %v54, %v51
  %57 = vrot.lane.b32.xlu0 %v56, 120
  %v58 = vpop.permute.xlu0 %57
  %vm59 = vcmask 1048512
  %60 = vst.msk [vmem:[%s1] sm:$0xff] %vm59, %v58
  %s61 = scalar_lea.vmem %s0, 143
  %s62 = smov 3
  %v63 = vld [vmem:[%s61] ss:$16 sm:%s62]
  %s64 = scalar_lea.vmem %s0, 143
  %s65 = smov 12
  %v66 = vld [vmem:[%s64] ss:$16 sm:%s65]
  %vm67 = vcmask 1043458
  %v68 = vsel %vm67, %v66, %v63
  %s69 = scalar_lea.vmem %s0, 143
  %s70 = smov 48
  %v71 = vld [vmem:[%s69] ss:$16 sm:%s70]
  %vm72 = vcmask 1045508
  %v73 = vsel %vm72, %v71, %v68
  %s74 = scalar_lea.vmem %s0, 143
  %s75 = smov 192
  %v76 = vld [vmem:[%s74] ss:$16 sm:%s75]
  %vm77 = vcmask 1047558
  %v78 = vsel %vm77, %v76, %v73
  %79 = vrot.lane.b32.xlu0 %v78, 120
  %v80 = vpop.permute.xlu0 %79
  %vm81 = vcmask 1048512
  %s82 = scalar_lea.vmem %s1, 8
  %83 = vst.msk [vmem:[%s82] sm:$0xff] %vm81, %v80
  %s84 = scalar_lea.vmem %s0, 14
  %s85 = smov 3
  %v86 = vld [vmem:[%s84] ss:$16 sm:%s85]
  %s87 = scalar_lea.vmem %s0, 14
  %s88 = smov 12
  %v89 = vld [vmem:[%s87] ss:$16 sm:%s88]
  %vm90 = vcmask 1043458
  %v91 = vsel %vm90, %v89, %v86
  %s92 = scalar_lea.vmem %s0, 14
  %s93 = smov 48
  %v94 = vld [vmem:[%s92] ss:$16 sm:%s93]
  %vm95 = vcmask 1045508
  %v96 = vsel %vm95, %v94, %v91
  %s97 = scalar_lea.vmem %s0, 14
  %s98 = smov 192
  %v99 = vld [vmem:[%s97] ss:$16 sm:%s98]
  %vm100 = vcmask 1047558
  %v101 = vsel %vm100, %v99, %v96
  %102 = vrot.lane.b32.xlu0 %v101, 112
  %v103 = vpop.permute.xlu0 %102
  %vm104 = vcmask 982912
  %105 = vst.msk [vmem:[%s1] sm:$0xff] %vm104, %v103
  %s106 = scalar_lea.vmem %s0, 142
  %s107 = smov 3
  %v108 = vld [vmem:[%s106] ss:$16 sm:%s107]
  %s109 = scalar_lea.vmem %s0, 142
  %s110 = smov 12
  %v111 = vld [vmem:[%s109] ss:$16 sm:%s110]
  %vm112 = vcmask 1043458
  %v113 = vsel %vm112, %v111, %v108
  %s114 = scalar_lea.vmem %s0, 142
  %s115 = smov 48
  %v116 = vld [vmem:[%s114] ss:$16 sm:%s115]
  %vm117 = vcmask 1045508
  %v118 = vsel %vm117, %v116, %v113
  %s119 = scalar_lea.vmem %s0, 142
  %s120 = smov 192
  %v121 = vld [vmem:[%s119] ss:$16 sm:%s120]
  %vm122 = vcmask 1047558
  %v123 = vsel %vm122, %v121, %v118
  %124 = vrot.lane.b32.xlu0 %v123, 112
  %v125 = vpop.permute.xlu0 %124
  %vm126 = vcmask 982912
  %s127 = scalar_lea.vmem %s1, 8
  %128 = vst.msk [vmem:[%s127] sm:$0xff] %vm126, %v125
  %s129 = scalar_lea.vmem %s0, 13
  %s130 = smov 3
  %v131 = vld [vmem:[%s129] ss:$16 sm:%s130]
  %s132 = scalar_lea.vmem %s0, 13
  %s133 = smov 12
  %v134 = vld [vmem:[%s132] ss:$16 sm:%s133]
  %vm135 = vcmask 1043458
  %v136 = vsel %vm135, %v134, %v131
  %s137 = scalar_lea.vmem %s0, 13
  %s138 = smov 48
  %v139 = vld [vmem:[%s137] ss:$16 sm:%s138]
  %vm140 = vcmask 1045508
  %v141 = vsel %vm140, %v139, %v136
  %s142 = scalar_lea.vmem %s0, 13
  %s143 = smov 192
  %v144 = vld [vmem:[%s142] ss:$16 sm:%s143]
  %vm145 = vcmask 1047558
  %v146 = vsel %vm145, %v144, %v141
  %147 = vrot.lane.b32.xlu0 %v146, 104
  %v148 = vpop.permute.xlu0 %147
  %vm149 = vcmask 917312
  %150 = vst.msk [vmem:[%s1] sm:$0xff] %vm149, %v148
  %s151 = scalar_lea.vmem %s0, 141
  %s152 = smov 3
  %v153 = vld [vmem:[%s151] ss:$16 sm:%s152]
  %s154 = scalar_lea.vmem %s0, 141
  %s155 = smov 12
  %v156 = vld [vmem:[%s154] ss:$16 sm:%s155]
  %vm157 = vcmask 1043458
  %v158 = vsel %vm157, %v156, %v153
  %s159 = scalar_lea.vmem %s0, 141
  %s160 = smov 48
  %v161 = vld [vmem:[%s159] ss:$16 sm:%s160]
  %vm162 = vcmask 1045508
  %v163 = vsel %vm162, %v161, %v158
  %s164 = scalar_lea.vmem %s0, 141
  %s165 = smov 192
  %v166 = vld [vmem:[%s164] ss:$16 sm:%s165]
  %vm167 = vcmask 1047558
  %v168 = vsel %vm167, %v166, %v163
  %169 = vrot.lane.b32.xlu0 %v168, 104
  %v170 = vpop.permute.xlu0 %169
  %vm171 = vcmask 917312
  %s172 = scalar_lea.vmem %s1, 8
  %173 = vst.msk [vmem:[%s172] sm:$0xff] %vm171, %v170
  %s174 = scalar_lea.vmem %s0, 12
  %s175 = smov 3
  %v176 = vld [vmem:[%s174] ss:$16 sm:%s175]
  %s177 = scalar_lea.vmem %s0, 12
  %s178 = smov 12
  %v179 = vld [vmem:[%s177] ss:$16 sm:%s178]
  %vm180 = vcmask 1043458
  %v181 = vsel %vm180, %v179, %v176
  %s182 = scalar_lea.vmem %s0, 12
  %s183 = smov 48
  %v184 = vld [vmem:[%s182] ss:$16 sm:%s183]
  %vm185 = vcmask 1045508
  %v186 = vsel %vm185, %v184, %v181
  %s187 = scalar_lea.vmem %s0, 12
  %s188 = smov 192
  %v189 = vld [vmem:[%s187] ss:$16 sm:%s188]
  %vm190 = vcmask 1047558
  %v191 = vsel %vm190, %v189, %v186
  %192 = vrot.lane.b32.xlu0 %v191, 96
  %v193 = vpop.permute.xlu0 %192
  %vm194 = vcmask 851712
  %195 = vst.msk [vmem:[%s1] sm:$0xff] %vm194, %v193
  %s196 = scalar_lea.vmem %s0, 140
  %s197 = smov 3
  %v198 = vld [vmem:[%s196] ss:$16 sm:%s197]
  %s199 = scalar_lea.vmem %s0, 140
  %s200 = smov 12
  %v201 = vld [vmem:[%s199] ss:$16 sm:%s200]
  %vm202 = vcmask 1043458
  %v203 = vsel %vm202, %v201, %v198
  %s204 = scalar_lea.vmem %s0, 140
  %s205 = smov 48
  %v206 = vld [vmem:[%s204] ss:$16 sm:%s205]
  %vm207 = vcmask 1045508
  %v208 = vsel %vm207, %v206, %v203
  %s209 = scalar_lea.vmem %s0, 140
  %s210 = smov 192
  %v211 = vld [vmem:[%s209] ss:$16 sm:%s210]
  %vm212 = vcmask 1047558
  %v213 = vsel %vm212, %v211, %v208
  %214 = vrot.lane.b32.xlu0 %v213, 96
  %v215 = vpop.permute.xlu0 %214
  %vm216 = vcmask 851712
  %s217 = scalar_lea.vmem %s1, 8
  %218 = vst.msk [vmem:[%s217] sm:$0xff] %vm216, %v215
  %s219 = scalar_lea.vmem %s0, 11
  %s220 = smov 3
  %v221 = vld [vmem:[%s219] ss:$16 sm:%s220]
  %s222 = scalar_lea.vmem %s0, 11
  %s223 = smov 12
  %v224 = vld [vmem:[%s222] ss:$16 sm:%s223]
  %vm225 = vcmask 1043458
  %v226 = vsel %vm225, %v224, %v221
  %s227 = scalar_lea.vmem %s0, 11
  %s228 = smov 48
  %v229 = vld [vmem:[%s227] ss:$16 sm:%s228]
  %vm230 = vcmask 1045508
  %v231 = vsel %vm230, %v229, %v226
  %s232 = scalar_lea.vmem %s0, 11
  %s233 = smov 192
  %v234 = vld [vmem:[%s232] ss:$16 sm:%s233]
  %vm235 = vcmask 1047558
  %v236 = vsel %vm235, %v234, %v231
  %237 = vrot.lane.b32.xlu0 %v236, 88
  %v238 = vpop.permute.xlu0 %237
  %vm239 = vcmask 786112
  %240 = vst.msk [vmem:[%s1] sm:$0xff] %vm239, %v238
  %s241 = scalar_lea.vmem %s0, 139
  %s242 = smov 3
  %v243 = vld [vmem:[%s241] ss:$16 sm:%s242]
  %s244 = scalar_lea.vmem %s0, 139
  %s245 = smov 12
  %v246 = vld [vmem:[%s244] ss:$16 sm:%s245]
  %vm247 = vcmask 1043458
  %v248 = vsel %vm247, %v246, %v243
  %s249 = scalar_lea.vmem %s0, 139
  %s250 = smov 48
  %v251 = vld [vmem:[%s249] ss:$16 sm:%s250]
  %vm252 = vcmask 1045508
  %v253 = vsel %vm252, %v251, %v248
  %s254 = scalar_lea.vmem %s0, 139
  %s255 = smov 192
  %v256 = vld [vmem:[%s254] ss:$16 sm:%s255]
  %vm257 = vcmask 1047558
  %v258 = vsel %vm257, %v256, %v253
  %259 = vrot.lane.b32.xlu0 %v258, 88
  %v260 = vpop.permute.xlu0 %259
  %vm261 = vcmask 786112
  %s262 = scalar_lea.vmem %s1, 8
  %263 = vst.msk [vmem:[%s262] sm:$0xff] %vm261, %v260
  %s264 = scalar_lea.vmem %s0, 10
  %s265 = smov 3
  %v266 = vld [vmem:[%s264] ss:$16 sm:%s265]
  %s267 = scalar_lea.vmem %s0, 10
  %s268 = smov 12
  %v269 = vld [vmem:[%s267] ss:$16 sm:%s268]
  %vm270 = vcmask 1043458
  %v271 = vsel %vm270, %v269, %v266
  %s272 = scalar_lea.vmem %s0, 10
  %s273 = smov 48
  %v274 = vld [vmem:[%s272] ss:$16 sm:%s273]
  %vm275 = vcmask 1045508
  %v276 = vsel %vm275, %v274, %v271
  %s277 = scalar_lea.vmem %s0, 10
  %s278 = smov 192
  %v279 = vld [vmem:[%s277] ss:$16 sm:%s278]
  %vm280 = vcmask 1047558
  %v281 = vsel %vm280, %v279, %v276
  %282 = vrot.lane.b32.xlu0 %v281, 80
  %v283 = vpop.permute.xlu0 %282
  %vm284 = vcmask 720512
  %285 = vst.msk [vmem:[%s1] sm:$0xff] %vm284, %v283
  %s286 = scalar_lea.vmem %s0, 138
  %s287 = smov 3
  %v288 = vld [vmem:[%s286] ss:$16 sm:%s287]
  %s289 = scalar_lea.vmem %s0, 138
  %s290 = smov 12
  %v291 = vld [vmem:[%s289] ss:$16 sm:%s290]
  %vm292 = vcmask 1043458
  %v293 = vsel %vm292, %v291, %v288
  %s294 = scalar_lea.vmem %s0, 138
  %s295 = smov 48
  %v296 = vld [vmem:[%s294] ss:$16 sm:%s295]
  %vm297 = vcmask 1045508
  %v298 = vsel %vm297, %v296, %v293
  %s299 = scalar_lea.vmem %s0, 138
  %s300 = smov 192
  %v301 = vld [vmem:[%s299] ss:$16 sm:%s300]
  %vm302 = vcmask 1047558
  %v303 = vsel %vm302, %v301, %v298
  %304 = vrot.lane.b32.xlu0 %v303, 80
  %v305 = vpop.permute.xlu0 %304
  %vm306 = vcmask 720512
  %s307 = scalar_lea.vmem %s1, 8
  %308 = vst.msk [vmem:[%s307] sm:$0xff] %vm306, %v305
  %s309 = scalar_lea.vmem %s0, 9
  %s310 = smov 3
  %v311 = vld [vmem:[%s309] ss:$16 sm:%s310]
  %s312 = scalar_lea.vmem %s0, 9
  %s313 = smov 12
  %v314 = vld [vmem:[%s312] ss:$16 sm:%s313]
  %vm315 = vcmask 1043458
  %v316 = vsel %vm315, %v314, %v311
  %s317 = scalar_lea.vmem %s0, 9
  %s318 = smov 48
  %v319 = vld [vmem:[%s317] ss:$16 sm:%s318]
  %vm320 = vcmask 1045508
  %v321 = vsel %vm320, %v319, %v316
  %s322 = scalar_lea.vmem %s0, 9
  %s323 = smov 192
  %v324 = vld [vmem:[%s322] ss:$16 sm:%s323]
  %vm325 = vcmask 1047558
  %v326 = vsel %vm325, %v324, %v321
  %327 = vrot.lane.b32.xlu0 %v326, 72
  %v328 = vpop.permute.xlu0 %327
  %vm329 = vcmask 654912
  %330 = vst.msk [vmem:[%s1] sm:$0xff] %vm329, %v328
  %s331 = scalar_lea.vmem %s0, 137
  %s332 = smov 3
  %v333 = vld [vmem:[%s331] ss:$16 sm:%s332]
  %s334 = scalar_lea.vmem %s0, 137
  %s335 = smov 12
  %v336 = vld [vmem:[%s334] ss:$16 sm:%s335]
  %vm337 = vcmask 1043458
  %v338 = vsel %vm337, %v336, %v333
  %s339 = scalar_lea.vmem %s0, 137
  %s340 = smov 48
  %v341 = vld [vmem:[%s339] ss:$16 sm:%s340]
  %vm342 = vcmask 1045508
  %v343 = vsel %vm342, %v341, %v338
  %s344 = scalar_lea.vmem %s0, 137
  %s345 = smov 192
  %v346 = vld [vmem:[%s344] ss:$16 sm:%s345]
  %vm347 = vcmask 1047558
  %v348 = vsel %vm347, %v346, %v343
  %349 = vrot.lane.b32.xlu0 %v348, 72
  %v350 = vpop.permute.xlu0 %349
  %vm351 = vcmask 654912
  %s352 = scalar_lea.vmem %s1, 8
  %353 = vst.msk [vmem:[%s352] sm:$0xff] %vm351, %v350
  %s354 = scalar_lea.vmem %s0, 8
  %s355 = smov 3
  %v356 = vld [vmem:[%s354] ss:$16 sm:%s355]
  %s357 = scalar_lea.vmem %s0, 8
  %s358 = smov 12
  %v359 = vld [vmem:[%s357] ss:$16 sm:%s358]
  %vm360 = vcmask 1043458
  %v361 = vsel %vm360, %v359, %v356
  %s362 = scalar_lea.vmem %s0, 8
  %s363 = smov 48
  %v364 = vld [vmem:[%s362] ss:$16 sm:%s363]
  %vm365 = vcmask 1045508
  %v366 = vsel %vm365, %v364, %v361
  %s367 = scalar_lea.vmem %s0, 8
  %s368 = smov 192
  %v369 = vld [vmem:[%s367] ss:$16 sm:%s368]
  %vm370 = vcmask 1047558
  %v371 = vsel %vm370, %v369, %v366
  %372 = vrot.lane.b32.xlu0 %v371, 64
  %v373 = vpop.permute.xlu0 %372
  %vm374 = vcmask 589312
  %375 = vst.msk [vmem:[%s1] sm:$0xff] %vm374, %v373
  %s376 = scalar_lea.vmem %s0, 136
  %s377 = smov 3
  %v378 = vld [vmem:[%s376] ss:$16 sm:%s377]
  %s379 = scalar_lea.vmem %s0, 136
  %s380 = smov 12
  %v381 = vld [vmem:[%s379] ss:$16 sm:%s380]
  %vm382 = vcmask 1043458
  %v383 = vsel %vm382, %v381, %v378
  %s384 = scalar_lea.vmem %s0, 136
  %s385 = smov 48
  %v386 = vld [vmem:[%s384] ss:$16 sm:%s385]
  %vm387 = vcmask 1045508
  %v388 = vsel %vm387, %v386, %v383
  %s389 = scalar_lea.vmem %s0, 136
  %s390 = smov 192
  %v391 = vld [vmem:[%s389] ss:$16 sm:%s390]
  %vm392 = vcmask 1047558
  %v393 = vsel %vm392, %v391, %v388
  %394 = vrot.lane.b32.xlu0 %v393, 64
  %v395 = vpop.permute.xlu0 %394
  %vm396 = vcmask 589312
  %s397 = scalar_lea.vmem %s1, 8
  %398 = vst.msk [vmem:[%s397] sm:$0xff] %vm396, %v395
  %s399 = scalar_lea.vmem %s0, 7
  %s400 = smov 3
  %v401 = vld [vmem:[%s399] ss:$16 sm:%s400]
  %s402 = scalar_lea.vmem %s0, 7
  %s403 = smov 12
  %v404 = vld [vmem:[%s402] ss:$16 sm:%s403]
  %vm405 = vcmask 1043458
  %v406 = vsel %vm405, %v404, %v401
  %s407 = scalar_lea.vmem %s0, 7
  %s408 = smov 48
  %v409 = vld [vmem:[%s407] ss:$16 sm:%s408]
  %vm410 = vcmask 1045508
  %v411 = vsel %vm410, %v409, %v406
  %s412 = scalar_lea.vmem %s0, 7
  %s413 = smov 192
  %v414 = vld [vmem:[%s412] ss:$16 sm:%s413]
  %vm415 = vcmask 1047558
  %v416 = vsel %vm415, %v414, %v411
  %417 = vrot.lane.b32.xlu0 %v416, 56
  %v418 = vpop.permute.xlu0 %417
  %vm419 = vcmask 523712
  %420 = vst.msk [vmem:[%s1] sm:$0xff] %vm419, %v418
  %s421 = scalar_lea.vmem %s0, 135
  %s422 = smov 3
  %v423 = vld [vmem:[%s421] ss:$16 sm:%s422]
  %s424 = scalar_lea.vmem %s0, 135
  %s425 = smov 12
  %v426 = vld [vmem:[%s424] ss:$16 sm:%s425]
  %vm427 = vcmask 1043458
  %v428 = vsel %vm427, %v426, %v423
  %s429 = scalar_lea.vmem %s0, 135
  %s430 = smov 48
  %v431 = vld [vmem:[%s429] ss:$16 sm:%s430]
  %vm432 = vcmask 1045508
  %v433 = vsel %vm432, %v431, %v428
  %s434 = scalar_lea.vmem %s0, 135
  %s435 = smov 192
  %v436 = vld [vmem:[%s434] ss:$16 sm:%s435]
  %vm437 = vcmask 1047558
  %v438 = vsel %vm437, %v436, %v433
  %439 = vrot.lane.b32.xlu0 %v438, 56
  %v440 = vpop.permute.xlu0 %439
  %vm441 = vcmask 523712
  %s442 = scalar_lea.vmem %s1, 8
  %443 = vst.msk [vmem:[%s442] sm:$0xff] %vm441, %v440
  %s444 = scalar_lea.vmem %s0, 6
  %s445 = smov 3
  %v446 = vld [vmem:[%s444] ss:$16 sm:%s445]
  %s447 = scalar_lea.vmem %s0, 6
  %s448 = smov 12
  %v449 = vld [vmem:[%s447] ss:$16 sm:%s448]
  %vm450 = vcmask 1043458
  %v451 = vsel %vm450, %v449, %v446
  %s452 = scalar_lea.vmem %s0, 6
  %s453 = smov 48
  %v454 = vld [vmem:[%s452] ss:$16 sm:%s453]
  %vm455 = vcmask 1045508
  %v456 = vsel %vm455, %v454, %v451
  %s457 = scalar_lea.vmem %s0, 6
  %s458 = smov 192
  %v459 = vld [vmem:[%s457] ss:$16 sm:%s458]
  %vm460 = vcmask 1047558
  %v461 = vsel %vm460, %v459, %v456
  %462 = vrot.lane.b32.xlu0 %v461, 48
  %v463 = vpop.permute.xlu0 %462
  %vm464 = vcmask 458112
  %465 = vst.msk [vmem:[%s1] sm:$0xff] %vm464, %v463
  %s466 = scalar_lea.vmem %s0, 134
  %s467 = smov 3
  %v468 = vld [vmem:[%s466] ss:$16 sm:%s467]
  %s469 = scalar_lea.vmem %s0, 134
  %s470 = smov 12
  %v471 = vld [vmem:[%s469] ss:$16 sm:%s470]
  %vm472 = vcmask 1043458
  %v473 = vsel %vm472, %v471, %v468
  %s474 = scalar_lea.vmem %s0, 134
  %s475 = smov 48
  %v476 = vld [vmem:[%s474] ss:$16 sm:%s475]
  %vm477 = vcmask 1045508
  %v478 = vsel %vm477, %v476, %v473
  %s479 = scalar_lea.vmem %s0, 134
  %s480 = smov 192
  %v481 = vld [vmem:[%s479] ss:$16 sm:%s480]
  %vm482 = vcmask 1047558
  %v483 = vsel %vm482, %v481, %v478
  %484 = vrot.lane.b32.xlu0 %v483, 48
  %v485 = vpop.permute.xlu0 %484
  %vm486 = vcmask 458112
  %s487 = scalar_lea.vmem %s1, 8
  %488 = vst.msk [vmem:[%s487] sm:$0xff] %vm486, %v485
  %s489 = scalar_lea.vmem %s0, 5
  %s490 = smov 3
  %v491 = vld [vmem:[%s489] ss:$16 sm:%s490]
  %s492 = scalar_lea.vmem %s0, 5
  %s493 = smov 12
  %v494 = vld [vmem:[%s492] ss:$16 sm:%s493]
  %vm495 = vcmask 1043458
  %v496 = vsel %vm495, %v494, %v491
  %s497 = scalar_lea.vmem %s0, 5
  %s498 = smov 48
  %v499 = vld [vmem:[%s497] ss:$16 sm:%s498]
  %vm500 = vcmask 1045508
  %v501 = vsel %vm500, %v499, %v496
  %s502 = scalar_lea.vmem %s0, 5
  %s503 = smov 192
  %v504 = vld [vmem:[%s502] ss:$16 sm:%s503]
  %vm505 = vcmask 1047558
  %v506 = vsel %vm505, %v504, %v501
  %507 = vrot.lane.b32.xlu0 %v506, 40
  %v508 = vpop.permute.xlu0 %507
  %vm509 = vcmask 392512
  %510 = vst.msk [vmem:[%s1] sm:$0xff] %vm509, %v508
  %s511 = scalar_lea.vmem %s0, 133
  %s512 = smov 3
  %v513 = vld [vmem:[%s511] ss:$16 sm:%s512]
  %s514 = scalar_lea.vmem %s0, 133
  %s515 = smov 12
  %v516 = vld [vmem:[%s514] ss:$16 sm:%s515]
  %vm517 = vcmask 1043458
  %v518 = vsel %vm517, %v516, %v513
  %s519 = scalar_lea.vmem %s0, 133
  %s520 = smov 48
  %v521 = vld [vmem:[%s519] ss:$16 sm:%s520]
  %vm522 = vcmask 1045508
  %v523 = vsel %vm522, %v521, %v518
  %s524 = scalar_lea.vmem %s0, 133
  %s525 = smov 192
  %v526 = vld [vmem:[%s524] ss:$16 sm:%s525]
  %vm527 = vcmask 1047558
  %v528 = vsel %vm527, %v526, %v523
  %529 = vrot.lane.b32.xlu0 %v528, 40
  %v530 = vpop.permute.xlu0 %529
  %vm531 = vcmask 392512
  %s532 = scalar_lea.vmem %s1, 8
  %533 = vst.msk [vmem:[%s532] sm:$0xff] %vm531, %v530
  %s534 = scalar_lea.vmem %s0, 4
  %s535 = smov 3
  %v536 = vld [vmem:[%s534] ss:$16 sm:%s535]
  %s537 = scalar_lea.vmem %s0, 4
  %s538 = smov 12
  %v539 = vld [vmem:[%s537] ss:$16 sm:%s538]
  %vm540 = vcmask 1043458
  %v541 = vsel %vm540, %v539, %v536
  %s542 = scalar_lea.vmem %s0, 4
  %s543 = smov 48
  %v544 = vld [vmem:[%s542] ss:$16 sm:%s543]
  %vm545 = vcmask 1045508
  %v546 = vsel %vm545, %v544, %v541
  %s547 = scalar_lea.vmem %s0, 4
  %s548 = smov 192
  %v549 = vld [vmem:[%s547] ss:$16 sm:%s548]
  %vm550 = vcmask 1047558
  %v551 = vsel %vm550, %v549, %v546
  %552 = vrot.lane.b32.xlu0 %v551, 32
  %v553 = vpop.permute.xlu0 %552
  %vm554 = vcmask 326912
  %555 = vst.msk [vmem:[%s1] sm:$0xff] %vm554, %v553
  %s556 = scalar_lea.vmem %s0, 132
  %s557 = smov 3
  %v558 = vld [vmem:[%s556] ss:$16 sm:%s557]
  %s559 = scalar_lea.vmem %s0, 132
  %s560 = smov 12
  %v561 = vld [vmem:[%s559] ss:$16 sm:%s560]
  %vm562 = vcmask 1043458
  %v563 = vsel %vm562, %v561, %v558
  %s564 = scalar_lea.vmem %s0, 132
  %s565 = smov 48
  %v566 = vld [vmem:[%s564] ss:$16 sm:%s565]
  %vm567 = vcmask 1045508
  %v568 = vsel %vm567, %v566, %v563
  %s569 = scalar_lea.vmem %s0, 132
  %s570 = smov 192
  %v571 = vld [vmem:[%s569] ss:$16 sm:%s570]
  %vm572 = vcmask 1047558
  %v573 = vsel %vm572, %v571, %v568
  %574 = vrot.lane.b32.xlu0 %v573, 32
  %v575 = vpop.permute.xlu0 %574
  %vm576 = vcmask 326912
  %s577 = scalar_lea.vmem %s1, 8
  %578 = vst.msk [vmem:[%s577] sm:$0xff] %vm576, %v575
  %s579 = scalar_lea.vmem %s0, 3
  %s580 = smov 3
  %v581 = vld [vmem:[%s579] ss:$16 sm:%s580]
  %s582 = scalar_lea.vmem %s0, 3
  %s583 = smov 12
  %v584 = vld [vmem:[%s582] ss:$16 sm:%s583]
  %vm585 = vcmask 1043458
  %v586 = vsel %vm585, %v584, %v581
  %s587 = scalar_lea.vmem %s0, 3
  %s588 = smov 48
  %v589 = vld [vmem:[%s587] ss:$16 sm:%s588]
  %vm590 = vcmask 1045508
  %v591 = vsel %vm590, %v589, %v586
  %s592 = scalar_lea.vmem %s0, 3
  %s593 = smov 192
  %v594 = vld [vmem:[%s592] ss:$16 sm:%s593]
  %vm595 = vcmask 1047558
  %v596 = vsel %vm595, %v594, %v591
  %597 = vrot.lane.b32.xlu0 %v596, 24
  %v598 = vpop.permute.xlu0 %597
  %vm599 = vcmask 261312
  %600 = vst.msk [vmem:[%s1] sm:$0xff] %vm599, %v598
  %s601 = scalar_lea.vmem %s0, 131
  %s602 = smov 3
  %v603 = vld [vmem:[%s601] ss:$16 sm:%s602]
  %s604 = scalar_lea.vmem %s0, 131
  %s605 = smov 12
  %v606 = vld [vmem:[%s604] ss:$16 sm:%s605]
  %vm607 = vcmask 1043458
  %v608 = vsel %vm607, %v606, %v603
  %s609 = scalar_lea.vmem %s0, 131
  %s610 = smov 48
  %v611 = vld [vmem:[%s609] ss:$16 sm:%s610]
  %vm612 = vcmask 1045508
  %v613 = vsel %vm612, %v611, %v608
  %s614 = scalar_lea.vmem %s0, 131
  %s615 = smov 192
  %v616 = vld [vmem:[%s614] ss:$16 sm:%s615]
  %vm617 = vcmask 1047558
  %v618 = vsel %vm617, %v616, %v613
  %619 = vrot.lane.b32.xlu0 %v618, 24
  %v620 = vpop.permute.xlu0 %619
  %vm621 = vcmask 261312
  %s622 = scalar_lea.vmem %s1, 8
  %623 = vst.msk [vmem:[%s622] sm:$0xff] %vm621, %v620
  %s624 = scalar_lea.vmem %s0, 2
  %s625 = smov 3
  %v626 = vld [vmem:[%s624] ss:$16 sm:%s625]
  %s627 = scalar_lea.vmem %s0, 2
  %s628 = smov 12
  %v629 = vld [vmem:[%s627] ss:$16 sm:%s628]
  %vm630 = vcmask 1043458
  %v631 = vsel %vm630, %v629, %v626
  %s632 = scalar_lea.vmem %s0, 2
  %s633 = smov 48
  %v634 = vld [vmem:[%s632] ss:$16 sm:%s633]
  %vm635 = vcmask 1045508
  %v636 = vsel %vm635, %v634, %v631
  %s637 = scalar_lea.vmem %s0, 2
  %s638 = smov 192
  %v639 = vld [vmem:[%s637] ss:$16 sm:%s638]
  %vm640 = vcmask 1047558
  %v641 = vsel %vm640, %v639, %v636
  %642 = vrot.lane.b32.xlu0 %v641, 16
  %v643 = vpop.permute.xlu0 %642
  %vm644 = vcmask 195712
  %645 = vst.msk [vmem:[%s1] sm:$0xff] %vm644, %v643
  %s646 = scalar_lea.vmem %s0, 130
  %s647 = smov 3
  %v648 = vld [vmem:[%s646] ss:$16 sm:%s647]
  %s649 = scalar_lea.vmem %s0, 130
  %s650 = smov 12
  %v651 = vld [vmem:[%s649] ss:$16 sm:%s650]
  %vm652 = vcmask 1043458
  %v653 = vsel %vm652, %v651, %v648
  %s654 = scalar_lea.vmem %s0, 130
  %s655 = smov 48
  %v656 = vld [vmem:[%s654] ss:$16 sm:%s655]
  %vm657 = vcmask 1045508
  %v658 = vsel %vm657, %v656, %v653
  %s659 = scalar_lea.vmem %s0, 130
  %s660 = smov 192
  %v661 = vld [vmem:[%s659] ss:$16 sm:%s660]
  %vm662 = vcmask 1047558
  %v663 = vsel %vm662, %v661, %v658
  %664 = vrot.lane.b32.xlu0 %v663, 16
  %v665 = vpop.permute.xlu0 %664
  %vm666 = vcmask 195712
  %s667 = scalar_lea.vmem %s1, 8
  %668 = vst.msk [vmem:[%s667] sm:$0xff] %vm666, %v665
  %s669 = scalar_lea.vmem %s0, 1
  %s670 = smov 3
  %v671 = vld [vmem:[%s669] ss:$16 sm:%s670]
  %s672 = scalar_lea.vmem %s0, 1
  %s673 = smov 12
  %v674 = vld [vmem:[%s672] ss:$16 sm:%s673]
  %vm675 = vcmask 1043458
  %v676 = vsel %vm675, %v674, %v671
  %s677 = scalar_lea.vmem %s0, 1
  %s678 = smov 48
  %v679 = vld [vmem:[%s677] ss:$16 sm:%s678]
  %vm680 = vcmask 1045508
  %v681 = vsel %vm680, %v679, %v676
  %s682 = scalar_lea.vmem %s0, 1
  %s683 = smov 192
  %v684 = vld [vmem:[%s682] ss:$16 sm:%s683]
  %vm685 = vcmask 1047558
  %v686 = vsel %vm685, %v684, %v681
  %687 = vrot.lane.b32.xlu0 %v686, 8
  %v688 = vpop.permute.xlu0 %687
  %vm689 = vcmask 130112
  %690 = vst.msk [vmem:[%s1] sm:$0xff] %vm689, %v688
  %s691 = scalar_lea.vmem %s0, 129
  %s692 = smov 3
  %v693 = vld [vmem:[%s691] ss:$16 sm:%s692]
  %s694 = scalar_lea.vmem %s0, 129
  %s695 = smov 12
  %v696 = vld [vmem:[%s694] ss:$16 sm:%s695]
  %vm697 = vcmask 1043458
  %v698 = vsel %vm697, %v696, %v693
  %s699 = scalar_lea.vmem %s0, 129
  %s700 = smov 48
  %v701 = vld [vmem:[%s699] ss:$16 sm:%s700]
  %vm702 = vcmask 1045508
  %v703 = vsel %vm702, %v701, %v698
  %s704 = scalar_lea.vmem %s0, 129
  %s705 = smov 192
  %v706 = vld [vmem:[%s704] ss:$16 sm:%s705]
  %vm707 = vcmask 1047558
  %v708 = vsel %vm707, %v706, %v703
  %709 = vrot.lane.b32.xlu0 %v708, 8
  %v710 = vpop.permute.xlu0 %709
  %vm711 = vcmask 130112
  %s712 = scalar_lea.vmem %s1, 8
  %713 = vst.msk [vmem:[%s712] sm:$0xff] %vm711, %v710

// kernel: llama_classifier_forward.1
$region0: #{llama_classifier_forward.1}
  #allocation0 [shape = 'u32[]', space=smem, size = 0x4, offset = 0x4, fixed_abs, tag = 'smem constant byte address 0x4 - core index']
  #allocation1 [shape = 'u32[144,128]{1,0:T(1,128)}', space=vmem, size = 0x12000, scoped, tag = 'internal scratch']
  %s0 = inlined_call_operand.vmem [shape: s32[16,1], index: 0, kind: input, shape index: {}]
  %s1 = inlined_call_operand.vmem [shape: s32[2,8], index: 1, kind: input, shape index: {}]
  %s2 = inlined_call_operand.vmem [shape: f32[16,128], index: 2, kind: input, shape index: {}]
  %s3 = inlined_call_operand.vmem [shape: f32[16,128], index: 3, kind: input, shape index: {}]
  %s4 = inlined_call_operand.vmem [shape: f32[128,128], index: 4, kind: input, shape index: {}]
  %s5 = inlined_call_operand.vmem [shape: f32[128,128], index: 5, kind: input, shape index: {}]
  %s6 = inlined_call_operand.vmem [shape: f32[2,1,128], index: 6, kind: input, shape index: {}]
  %s7 = inlined_call_operand.vmem [shape: f32[2,1,128], index: 7, kind: input, shape index: {}]
  %s8 = inlined_call_operand.vmem [shape: f32[2,128,384], index: 8, kind: input, shape index: {}]
  %s9 = inlined_call_operand.vmem [shape: f32[8,8,128], index: 9, kind: input, shape index: {}]
  %s10 = inlined_call_operand.vmem [shape: f32[2,128,256], index: 10, kind: input, shape index: {}]
  %s11 = inlined_call_operand.vmem [shape: f32[2,128,128], index: 11, kind: input, shape index: {}]
  %s12 = inlined_call_operand.vmem [shape: f32[1,128], index: 12, kind: input, shape index: {}]
  %s13 = inlined_call_operand.vmem [shape: f32[128,128], index: 13, kind: input, shape index: {}]
  %s14 = inlined_call_operand.vmem [shape: f32[1,128], index: 14, kind: input, shape index: {}]
  %s15 = inlined_call_operand.hbm [shape: f32[2,128], index: 15, kind: output, shape index: {}]
  %s16 = sld [smem:[#allocation0]]
  $region70: #{llama_classifier_forward.1} parent=0
    _
  %s18 = ssub.s32 1, %s16
  %s19 = scalar_select 0, %s18, %s16
  $region1: #{llama_classifier_forward.1} parent=0
    #allocation2 [shape = 'u8[1024]{0}', space=vmem, size = 0x400, scoped, tag = 'output window, operand 0, single buffered']
    #allocation3 [shape = 's32[1]{0}', space=sflag, size = 0x4, scoped, tag = 'scoped memory for llama_classifier_forward.1']
    %20 = vsyncpa [#allocation3], 0
    // Predicated region
    $region2: #{llama_classifier_forward.1} parent=1 // pred_check
      _
    $region3: #{llama_classifier_forward.1} parent=1 // pred_check_branch
      %22 = sbr.rel (0) target = $region5
    $region4: #{llama_classifier_forward.1} parent=1 // pred_region
      _
    $region5: #{llama_classifier_forward.1} parent=1 // pred_fallthru
      _
    // Predicated region
    $region6: #{llama_classifier_forward.1} parent=1 // pred_check
      _
    $region7: #{llama_classifier_forward.1} parent=1 // pred_check_branch
      %24 = sbr.rel (0) target = $region9
    $region8: #{llama_classifier_forward.1} parent=1 // pred_region
      _
    $region9: #{llama_classifier_forward.1} parent=1 // pred_fallthru
      _
    // Predicated region
    $region10: #{llama_classifier_forward.1} parent=1 // pred_check
      _
    $region11: #{llama_classifier_forward.1} parent=1 // pred_check_branch
      %26 = sbr.rel (0) target = $region13
    $region12: #{llama_classifier_forward.1} parent=1 // pred_region
      _
    $region13: #{llama_classifier_forward.1} parent=1 // pred_fallthru
      _
    // Predicated region
    $region14: #{llama_classifier_forward.1} parent=1 // pred_check
      _
    $region15: #{llama_classifier_forward.1} parent=1 // pred_check_branch
      %28 = sbr.rel (0) target = $region17
    $region16: #{llama_classifier_forward.1} parent=1 // pred_region
      _
    $region17: #{llama_classifier_forward.1} parent=1 // pred_fallthru
      _
    // Predicated region
    $region18: #{llama_classifier_forward.1} parent=1 // pred_check
      _
    $region19: #{llama_classifier_forward.1} parent=1 // pred_check_branch
      %30 = sbr.rel (0) target = $region21
    $region20: #{llama_classifier_forward.1} parent=1 // pred_region
      _
    $region21: #{llama_classifier_forward.1} parent=1 // pred_fallthru
      _
    // Predicated region
    $region22: #{llama_classifier_forward.1} parent=1 // pred_check
      _
    $region23: #{llama_classifier_forward.1} parent=1 // pred_check_branch
      %32 = sbr.rel (0) target = $region25
    $region24: #{llama_classifier_forward.1} parent=1 // pred_region
      _
    $region25: #{llama_classifier_forward.1} parent=1 // pred_fallthru
      _
    // Predicated region
    $region26: #{llama_classifier_forward.1} parent=1 // pred_check
      _
    $region27: #{llama_classifier_forward.1} parent=1 // pred_check_branch
      %34 = sbr.rel (0) target = $region29
    $region28: #{llama_classifier_forward.1} parent=1 // pred_region
      _
    $region29: #{llama_classifier_forward.1} parent=1 // pred_fallthru
      _
    // Predicated region
    $region30: #{llama_classifier_forward.1} parent=1 // pred_check
      _
    $region31: #{llama_classifier_forward.1} parent=1 // pred_check_branch
      %36 = sbr.rel (0) target = $region33
    $region32: #{llama_classifier_forward.1} parent=1 // pred_region
      _
    $region33: #{llama_classifier_forward.1} parent=1 // pred_fallthru
      _
    // Predicated region
    $region34: #{llama_classifier_forward.1} parent=1 // pred_check
      _
    $region35: #{llama_classifier_forward.1} parent=1 // pred_check_branch
      %38 = sbr.rel (0) target = $region37
    $region36: #{llama_classifier_forward.1} parent=1 // pred_region
      _
    $region37: #{llama_classifier_forward.1} parent=1 // pred_fallthru
      _
    // Predicated region
    $region38: #{llama_classifier_forward.1} parent=1 // pred_check
      _
    $region39: #{llama_classifier_forward.1} parent=1 // pred_check_branch
      %40 = sbr.rel (0) target = $region41
    $region40: #{llama_classifier_forward.1} parent=1 // pred_region
      _
    $region41: #{llama_classifier_forward.1} parent=1 // pred_fallthru
      _
    // Predicated region
    $region42: #{llama_classifier_forward.1} parent=1 // pred_check
      _
    $region43: #{llama_classifier_forward.1} parent=1 // pred_check_branch
      %42 = sbr.rel (0) target = $region45
    $region44: #{llama_classifier_forward.1} parent=1 // pred_region
      _
    $region45: #{llama_classifier_forward.1} parent=1 // pred_fallthru
      _
    // Predicated region
    $region46: #{llama_classifier_forward.1} parent=1 // pred_check
      _
    $region47: #{llama_classifier_forward.1} parent=1 // pred_check_branch
      %44 = sbr.rel (0) target = $region49
    $region48: #{llama_classifier_forward.1} parent=1 // pred_region
      _
    $region49: #{llama_classifier_forward.1} parent=1 // pred_fallthru
      _
    // Predicated region
    $region50: #{llama_classifier_forward.1} parent=1 // pred_check
      _
    $region51: #{llama_classifier_forward.1} parent=1 // pred_check_branch
      %46 = sbr.rel (0) target = $region53
    $region52: #{llama_classifier_forward.1} parent=1 // pred_region
      _
    $region53: #{llama_classifier_forward.1} parent=1 // pred_fallthru
      _
    // Predicated region
    $region54: #{llama_classifier_forward.1} parent=1 // pred_check
      _
    $region55: #{llama_classifier_forward.1} parent=1 // pred_check_branch
      %48 = sbr.rel (0) target = $region57
    $region56: #{llama_classifier_forward.1} parent=1 // pred_region
      _
    $region57: #{llama_classifier_forward.1} parent=1 // pred_fallthru
      _
    // Predicated region
    $region58: #{llama_classifier_forward.1} parent=1 // pred_check
      _
    $region59: #{llama_classifier_forward.1} parent=1 // pred_check_branch
      %50 = sbr.rel (0) target = $region61
    $region60: #{llama_classifier_forward.1} parent=1 // pred_region
      _
    $region61: #{llama_classifier_forward.1} parent=1 // pred_fallthru
      _
    %v51 = vld [vmem:[%s2] sm:$0xff]
    %v52 = vld [vmem:[%s2 + $0x8] sm:$0xff]
    %v53 = vld [vmem:[%s3] sm:$0xff]
    %v54 = vld [vmem:[%s3 + $0x8] sm:$0xff]
    %v55 = vld [vmem:[%s4] sm:$0xff]
    %v56 = vld [vmem:[%s4 + $0x8] sm:$0xff]
    %v57 = vld [vmem:[%s4 + $0x10] sm:$0xff]
    %v58 = vld [vmem:[%s4 + $0x18] sm:$0xff]
    %v59 = vld [vmem:[%s4 + $0x20] sm:$0xff]
    %v60 = vld [vmem:[%s4 + $0x28] sm:$0xff]
    %v61 = vld [vmem:[%s4 + $0x30] sm:$0xff]
    %v62 = vld [vmem:[%s4 + $0x38] sm:$0xff]
    %v63 = vld [vmem:[%s4 + $0x40] sm:$0xff]
    %v64 = vld [vmem:[%s4 + $0x48] sm:$0xff]
    %v65 = vld [vmem:[%s4 + $0x50] sm:$0xff]
    %v66 = vld [vmem:[%s4 + $0x58] sm:$0xff]
    %v67 = vld [vmem:[%s4 + $0x60] sm:$0xff]
    %v68 = vld [vmem:[%s4 + $0x68] sm:$0xff]
    %v69 = vld [vmem:[%s4 + $0x70] sm:$0xff]
    %v70 = vld [vmem:[%s4 + $0x78] sm:$0xff]
    %v71 = vld [vmem:[%s0] sm:$0xff]
    %v72 = vld [vmem:[%s0 + $0x8] sm:$0xff]
    %v73 = vlaneseq
    %v74 = vand.u32 %v73, 127
    %75 = vset.pattern.permute.xlu0 0
    %76 = vperm.xlu0 %75, %v71
    %v77 = vpop.permute.xlu0 %76
    %78 = vset.pattern.permute.xlu0 0
    %79 = vperm.xlu0 %78, %v72
    %v80 = vpop.permute.xlu0 %79
    %vm81 = vcmp.eq.s32.totalorder %v74, %v77
    %vm82 = vcmp.eq.s32.totalorder %v74, %v80
    %v83 = vsel %vm81, 1, 0
    %v84 = vsel %vm82, 1, 0
    %v85 = vcvt.s32.f32 %v83
    %v86 = vcvt.s32.f32 %v84
    %v87 = vld [vmem:[%s5] sm:$0xff]
    %v88 = vld [vmem:[%s5 + $0x8] sm:$0xff]
    %v89 = vld [vmem:[%s5 + $0x10] sm:$0xff]
    %v90 = vld [vmem:[%s5 + $0x18] sm:$0xff]
    %v91 = vld [vmem:[%s5 + $0x20] sm:$0xff]
    %v92 = vld [vmem:[%s5 + $0x28] sm:$0xff]
    %v93 = vld [vmem:[%s5 + $0x30] sm:$0xff]
    %v94 = vld [vmem:[%s5 + $0x38] sm:$0xff]
    %v95 = vld [vmem:[%s5 + $0x40] sm:$0xff]
    %v96 = vld [vmem:[%s5 + $0x48] sm:$0xff]
    %v97 = vld [vmem:[%s5 + $0x50] sm:$0xff]
    %v98 = vld [vmem:[%s5 + $0x58] sm:$0xff]
    %v99 = vld [vmem:[%s5 + $0x60] sm:$0xff]
    %v100 = vld [vmem:[%s5 + $0x68] sm:$0xff]
    %v101 = vld [vmem:[%s5 + $0x70] sm:$0xff]
    %v102 = vld [vmem:[%s5 + $0x78] sm:$0xff]
    %103 = vmatprep.subr.mxu0 0.0
    %104 = vmatpush1.msra.mxu0 %v87
    %105 = vmatprep.subr.mxu0 0.0
    %106 = vmatpush1.msra.mxu0 %v88
    %107 = vmatprep.subr.mxu0 0.0
    %108 = vmatpush1.msra.mxu0 %v89
    %109 = vmatprep.subr.mxu0 0.0
    %110 = vmatpush1.msra.mxu0 %v90
    %111 = vmatprep.subr.mxu0 0.0
    %112 = vmatpush1.msra.mxu0 %v91
    %113 = vmatprep.subr.mxu0 0.0
    %114 = vmatpush1.msra.mxu0 %v92
    %115 = vmatprep.subr.mxu0 0.0
    %116 = vmatpush1.msra.mxu0 %v93
    %117 = vmatprep.subr.mxu0 0.0
    %118 = vmatpush1.msra.mxu0 %v94
    %119 = vmatprep.subr.mxu0 0.0
    %120 = vmatpush1.msra.mxu0 %v95
    %121 = vmatprep.subr.mxu0 0.0
    %122 = vmatpush1.msra.mxu0 %v96
    %123 = vmatprep.subr.mxu0 0.0
    %124 = vmatpush1.msra.mxu0 %v97
    %125 = vmatprep.subr.mxu0 0.0
    %126 = vmatpush1.msra.mxu0 %v98
    %127 = vmatprep.subr.mxu0 0.0
    %128 = vmatpush1.msra.mxu0 %v99
    %129 = vmatprep.subr.mxu0 0.0
    %130 = vmatpush1.msra.mxu0 %v100
    %131 = vmatprep.subr.mxu0 0.0
    %132 = vmatpush1.msra.mxu0 %v101
    %133 = vmatprep.subr.mxu0 0.0
    %134 = vmatpush1.msra.mxu0 %v102
    %135 = vmatprep.subr.mxu0 0.0
    %136 = vmatpush1.msra.mxu0 0.0
    %137 = vmatprep.subr.mxu0 0.0
    %138 = vmatpush1.msra.mxu0 0.0
    %139 = vmatprep.subr.mxu0 0.0
    %140 = vmatpush1.msra.mxu0 0.0
    %141 = vmatprep.subr.mxu0 0.0
    %142 = vmatpush1.msra.mxu0 0.0
    %143 = vmatprep.subr.mxu0 0.0
    %144 = vmatpush1.msra.mxu0 0.0
    %145 = vmatprep.subr.mxu0 0.0
    %146 = vmatpush1.msra.mxu0 0.0
    %147 = vmatprep.subr.mxu0 0.0
    %148 = vmatpush1.msra.mxu0 0.0
    %149 = vmatprep.subr.mxu0 0.0
    %150 = vmatpush1.msra.mxu0 0.0
    %151 = vmatprep.subr.mxu0 0.0
    %152 = vmatpush1.msra.mxu0 0.0
    %153 = vmatprep.subr.mxu0 0.0
    %154 = vmatpush1.msra.mxu0 0.0
    %155 = vmatprep.subr.mxu0 0.0
    %156 = vmatpush1.msra.mxu0 0.0
    %157 = vmatprep.subr.mxu0 0.0
    %158 = vmatpush1.msra.mxu0 0.0
    %159 = vmatprep.subr.mxu0 0.0
    %160 = vmatpush1.msra.mxu0 0.0
    %161 = vmatprep.subr.mxu0 0.0
    %162 = vmatpush1.msra.mxu0 0.0
    %163 = vmatprep.subr.mxu0 0.0
    %164 = vmatpush1.msra.mxu0 0.0
    %165 = vmatprep.subr.mxu0 0.0
    %166 = vmatpush1.msra.mxu0 0.0
    %167 = vmatprep.mubr.f32.mxu0 0.0
    %168 = vmatmul.mubr.f32.gmra.mrb[0].mxu0 %v85
    %v169 = vpop.f32.mrb[0].mxu0
    %v170 = vadd.f32 0.0, %v169
    %v171 = vpop.f32.mrb[0].mxu0
    %172 = vmatprep.mubr.f32.mxu0 0.0
    %173 = vmatmul.mubr.f32.gmra.mrb[0].mxu0 %v86
    %v174 = vpop.f32.mrb[0].mxu0
    %v175 = vadd.f32 0.0, %v174
    %v176 = vpop.f32.mrb[0].mxu0
    %177 = vdwg.mxu0
    %v178 = vlaneseq
    %v179 = vshrl.u32 %v178, 7
    %vm180 = vcmp.ge.s32.totalorder %v179, %v74
    %v181 = vld [vmem:[%s1] sm:$0x3]
    %vm182 = vcmp.gt.s32.totalorder %v181, 0
    %v183 = vsel %vm182, 1, 0
    %v185 = vunpack.c.l.s4 1966171168
    %v186 = vunpack.c.0.s8 %v185
    %v187 = vlaneseq
    %v188 = vshrl.u32 %v187, 7
    %v189 = vsub.s32 %v186, %v188
    %v190 = vrot.slane %v183, %v189
    %v191 = vcombine.high %v190, %v190
    %v193 = vunpack.c.l.s4 1966171168
    %v194 = vunpack.c.0.s8 %v193
    %v195 = vlaneseq
    %v196 = vshrl.u32 %v195, 7
    %v197 = vsub.s32 %v194, %v196
    %v198 = vrot.slane %v190, %v197
    %v200 = vunpack.c.l.s4 1966171168
    %v201 = vunpack.c.0.s8 %v200
    %v202 = vlaneseq
    %v203 = vshrl.u32 %v202, 7
    %v204 = vsub.s32 %v201, %v203
    %v205 = vrot.slane %v191, %v204
    %vm206 = vcmp.ne.s32.totalorder %v198, 0
    %vm207 = vcmp.ne.s32.totalorder %v205, 0
    %v208 = vsel %vm180, 1, 0
    %vm209 = vcmp.eq.s32.totalorder %v208, 1
    %v210 = vsel %vm206, 1, 0
    %v211 = vsel %vm207, 1, 0
    %v212 = vlaneseq
    %v213 = vshrl.u32 %v212, 7
    %v214 = vsub.s32 0, %v213
    %v215 = vrot.slane %v210, %v214
    %v216 = vlaneseq
    %v217 = vshrl.u32 %v216, 7
    %v218 = vsub.s32 0, %v217
    %v219 = vrot.slane %v211, %v218
    %vm220 = vcmp.eq.s32.totalorder %v215, 1
    %vm221 = vcmp.eq.s32.totalorder %v219, 1
    %vm222 = vmand %vm209, %vm220
    %vm223 = vmand %vm209, %vm221
    %v224 = vsel %vm222, 0.0, -1e+09
    %v225 = vsel %vm223, 0.0, -1e+09
    %v226 = vld [vmem:[%s6] sm:$0x1]
    %v227 = vmul.f32 %v170, %v170
    %v228 = vmul.f32 %v175, %v175
    %229 = vadd.xlane.f32.xlu0 %v227
    %v230 = vpop.xlane.xlu0 %229
    %231 = vadd.xlane.f32.xlu0 %v228
    %v232 = vpop.xlane.xlu0 %231
    %v233 = vmul.f32 %v230, 0.03125
    %v234 = vmul.f32 %v232, 0.03125
    %v235 = vadd.f32 %v233, 1e-06
    %v236 = vadd.f32 %v234, 1e-06
    %v237 = vrsqrt.pop %v235
    %v238 = vrsqrt.pop %v236
    %v239 = vmul.f32 %v170, %v237
    %v240 = vmul.f32 %v175, %v238
    %v242 = vlaneseq
    %v243 = vshrl.u32 %v242, 7
    %v244 = vsub.s32 0, %v243
    %v245 = vrot.slane %v226, %v244
    %v247 = vmul.f32 %v239, %v245
    %v248 = vmul.f32 %v240, %v245
    %v249 = vld [vmem:[%s8] sm:$0xff]
    %v250 = vld [vmem:[%s8 + $0x8] sm:$0xff]
    %v251 = vld [vmem:[%s8 + $0x10] sm:$0xff]
    %v252 = vld [vmem:[%s8 + $0x18] sm:$0xff]
    %v253 = vld [vmem:[%s8 + $0x20] sm:$0xff]
    %v254 = vld [vmem:[%s8 + $0x28] sm:$0xff]
    %v255 = vld [vmem:[%s8 + $0x30] sm:$0xff]
    %v256 = vld [vmem:[%s8 + $0x38] sm:$0xff]
    %v257 = vld [vmem:[%s8 + $0x40] sm:$0xff]
    %v258 = vld [vmem:[%s8 + $0x48] sm:$0xff]
    %v259 = vld [vmem:[%s8 + $0x50] sm:$0xff]
    %v260 = vld [vmem:[%s8 + $0x58] sm:$0xff]
    %v261 = vld [vmem:[%s8 + $0x60] sm:$0xff]
    %v262 = vld [vmem:[%s8 + $0x68] sm:$0xff]
    %v263 = vld [vmem:[%s8 + $0x70] sm:$0xff]
    %v264 = vld [vmem:[%s8 + $0x78] sm:$0xff]
    %v265 = vld [vmem:[%s8 + $0x80] sm:$0xff]
    %v266 = vld [vmem:[%s8 + $0x88] sm:$0xff]
    %v267 = vld [vmem:[%s8 + $0x90] sm:$0xff]
    %v268 = vld [vmem:[%s8 + $0x98] sm:$0xff]
    %v269 = vld [vmem:[%s8 + $0xa0] sm:$0xff]
    %v270 = vld [vmem:[%s8 + $0xa8] sm:$0xff]
    %v271 = vld [vmem:[%s8 + $0xb0] sm:$0xff]
    %v272 = vld [vmem:[%s8 + $0xb8] sm:$0xff]
    %v273 = vld [vmem:[%s8 + $0xc0] sm:$0xff]
    %v274 = vld [vmem:[%s8 + $0xc8] sm:$0xff]
    %v275 = vld [vmem:[%s8 + $0xd0] sm:$0xff]
    %v276 = vld [vmem:[%s8 + $0xd8] sm:$0xff]
    %v277 = vld [vmem:[%s8 + $0xe0] sm:$0xff]
    %v278 = vld [vmem:[%s8 + $0xe8] sm:$0xff]
    %v279 = vld [vmem:[%s8 + $0xf0] sm:$0xff]
    %v280 = vld [vmem:[%s8 + $0xf8] sm:$0xff]
    %v281 = vld [vmem:[%s8 + $0x100] sm:$0xff]
    %v282 = vld [vmem:[%s8 + $0x108] sm:$0xff]
    %v283 = vld [vmem:[%s8 + $0x110] sm:$0xff]
    %v284 = vld [vmem:[%s8 + $0x118] sm:$0xff]
    %v285 = vld [vmem:[%s8 + $0x120] sm:$0xff]
    %v286 = vld [vmem:[%s8 + $0x128] sm:$0xff]
    %v287 = vld [vmem:[%s8 + $0x130] sm:$0xff]
    %v288 = vld [vmem:[%s8 + $0x138] sm:$0xff]
    %v289 = vld [vmem:[%s8 + $0x140] sm:$0xff]
    %v290 = vld [vmem:[%s8 + $0x148] sm:$0xff]
    %v291 = vld [vmem:[%s8 + $0x150] sm:$0xff]
    %v292 = vld [vmem:[%s8 + $0x158] sm:$0xff]
    %v293 = vld [vmem:[%s8 + $0x160] sm:$0xff]
    %v294 = vld [vmem:[%s8 + $0x168] sm:$0xff]
    %v295 = vld [vmem:[%s8 + $0x170] sm:$0xff]
    %v296 = vld [vmem:[%s8 + $0x178] sm:$0xff]
    %297 = vmatprep.subr.mxu0 %v250
    %298 = vmatpush1.msra.mxu0 %v249
    %299 = vmatprep.subr.mxu0 %v253
    %300 = vmatpush1.msra.mxu0 %v252
    %301 = vmatprep.subr.mxu0 %v256
    %302 = vmatpush1.msra.mxu0 %v255
    %303 = vmatprep.subr.mxu0 %v259
    %304 = vmatpush1.msra.mxu0 %v258
    %305 = vmatprep.subr.mxu0 %v262
    %306 = vmatpush1.msra.mxu0 %v261
    %307 = vmatprep.subr.mxu0 %v265
    %308 = vmatpush1.msra.mxu0 %v264
    %309 = vmatprep.subr.mxu0 %v268
    %310 = vmatpush1.msra.mxu0 %v267
    %311 = vmatprep.subr.mxu0 %v271
    %312 = vmatpush1.msra.mxu0 %v270
    %313 = vmatprep.subr.mxu0 %v274
    %314 = vmatpush1.msra.mxu0 %v273
    %315 = vmatprep.subr.mxu0 %v277
    %316 = vmatpush1.msra.mxu0 %v276
    %317 = vmatprep.subr.mxu0 %v280
    %318 = vmatpush1.msra.mxu0 %v279
    %319 = vmatprep.subr.mxu0 %v283
    %320 = vmatpush1.msra.mxu0 %v282
    %321 = vmatprep.subr.mxu0 %v286
    %322 = vmatpush1.msra.mxu0 %v285
    %323 = vmatprep.subr.mxu0 %v289
    %324 = vmatpush1.msra.mxu0 %v288
    %325 = vmatprep.subr.mxu0 %v292
    %326 = vmatpush1.msra.mxu0 %v291
    %327 = vmatprep.subr.mxu0 %v295
    %328 = vmatpush1.msra.mxu0 %v294
    %329 = vmatprep.subr.mxu0 0.0
    %330 = vmatpush1.msra.mxu0 0.0
    %331 = vmatprep.subr.mxu0 0.0
    %332 = vmatpush1.msra.mxu0 0.0
    %333 = vmatprep.subr.mxu0 0.0
    %334 = vmatpush1.msra.mxu0 0.0
    %335 = vmatprep.subr.mxu0 0.0
    %336 = vmatpush1.msra.mxu0 0.0
    %337 = vmatprep.subr.mxu0 0.0
    %338 = vmatpush1.msra.mxu0 0.0
    %339 = vmatprep.subr.mxu0 0.0
    %340 = vmatpush1.msra.mxu0 0.0
    %341 = vmatprep.subr.mxu0 0.0
    %342 = vmatpush1.msra.mxu0 0.0
    %343 = vmatprep.subr.mxu0 0.0
    %344 = vmatpush1.msra.mxu0 0.0
    %345 = vmatprep.subr.mxu0 0.0
    %346 = vmatpush1.msra.mxu0 0.0
    %347 = vmatprep.subr.mxu0 0.0
    %348 = vmatpush1.msra.mxu0 0.0
    %349 = vmatprep.subr.mxu0 0.0
    %350 = vmatpush1.msra.mxu0 0.0
    %351 = vmatprep.subr.mxu0 0.0
    %352 = vmatpush1.msra.mxu0 0.0
    %353 = vmatprep.subr.mxu0 0.0
    %354 = vmatpush1.msra.mxu0 0.0
    %355 = vmatprep.subr.mxu0 0.0
    %356 = vmatpush1.msra.mxu0 0.0
    %357 = vmatprep.subr.mxu0 0.0
    %358 = vmatpush1.msra.mxu0 0.0
    %359 = vmatprep.subr.mxu0 0.0
    %360 = vmatpush1.msra.mxu0 0.0
    %361 = vmatprep.mubr.f32.mxu0 0.0
    %362 = vmatmul.mubr.f32.gmra.mrb[0].mxu0 %v247
    %v363 = vpop.f32.mrb[0].mxu0
    %v364 = vadd.f32 0.0, %v363
    %v365 = vpop.f32.mrb[0].mxu0
    %v366 = vadd.f32 0.0, %v365
    %367 = vmatprep.mubr.f32.mxu0 0.0
    %368 = vmatmul.mubr.f32.gmra.mrb[0].mxu0 %v248
    %v369 = vpop.f32.mrb[0].mxu0
    %v370 = vadd.f32 0.0, %v369
    %v371 = vpop.f32.mrb[0].mxu0
    %v372 = vadd.f32 0.0, %v371
    %373 = vdwg.mxu0
    %374 = vmatprep.subr.mxu0 0.0
    %375 = vmatpush1.msra.mxu0 %v251
    %376 = vmatprep.subr.mxu0 0.0
    %377 = vmatpush1.msra.mxu0 %v254
    %378 = vmatprep.subr.mxu0 0.0
    %379 = vmatpush1.msra.mxu0 %v257
    %380 = vmatprep.subr.mxu0 0.0
    %381 = vmatpush1.msra.mxu0 %v260
    %382 = vmatprep.subr.mxu0 0.0
    %383 = vmatpush1.msra.mxu0 %v263
    %384 = vmatprep.subr.mxu0 0.0
    %385 = vmatpush1.msra.mxu0 %v266
    %386 = vmatprep.subr.mxu0 0.0
    %387 = vmatpush1.msra.mxu0 %v269
    %388 = vmatprep.subr.mxu0 0.0
    %389 = vmatpush1.msra.mxu0 %v272
    %390 = vmatprep.subr.mxu0 0.0
    %391 = vmatpush1.msra.mxu0 %v275
    %392 = vmatprep.subr.mxu0 0.0
    %393 = vmatpush1.msra.mxu0 %v278
    %394 = vmatprep.subr.mxu0 0.0
    %395 = vmatpush1.msra.mxu0 %v281
    %396 = vmatprep.subr.mxu0 0.0
    %397 = vmatpush1.msra.mxu0 %v284
    %398 = vmatprep.subr.mxu0 0.0
    %399 = vmatpush1.msra.mxu0 %v287
    %400 = vmatprep.subr.mxu0 0.0
    %401 = vmatpush1.msra.mxu0 %v290
    %402 = vmatprep.subr.mxu0 0.0
    %403 = vmatpush1.msra.mxu0 %v293
    %404 = vmatprep.subr.mxu0 0.0
    %405 = vmatpush1.msra.mxu0 %v296
    %406 = vmatprep.subr.mxu0 0.0
    %407 = vmatpush1.msra.mxu0 0.0
    %408 = vmatprep.subr.mxu0 0.0
    %409 = vmatpush1.msra.mxu0 0.0
    %410 = vmatprep.subr.mxu0 0.0
    %411 = vmatpush1.msra.mxu0 0.0
    %412 = vmatprep.subr.mxu0 0.0
    %413 = vmatpush1.msra.mxu0 0.0
    %414 = vmatprep.subr.mxu0 0.0
    %415 = vmatpush1.msra.mxu0 0.0
    %416 = vmatprep.subr.mxu0 0.0
    %417 = vmatpush1.msra.mxu0 0.0
    %418 = vmatprep.subr.mxu0 0.0
    %419 = vmatpush1.msra.mxu0 0.0
    %420 = vmatprep.subr.mxu0 0.0
    %421 = vmatpush1.msra.mxu0 0.0
    %422 = vmatprep.subr.mxu0 0.0
    %423 = vmatpush1.msra.mxu0 0.0
    %424 = vmatprep.subr.mxu0 0.0
    %425 = vmatpush1.msra.mxu0 0.0
    %426 = vmatprep.subr.mxu0 0.0
    %427 = vmatpush1.msra.mxu0 0.0
    %428 = vmatprep.subr.mxu0 0.0
    %429 = vmatpush1.msra.mxu0 0.0
    %430 = vmatprep.subr.mxu0 0.0
    %431 = vmatpush1.msra.mxu0 0.0
    %432 = vmatprep.subr.mxu0 0.0
    %433 = vmatpush1.msra.mxu0 0.0
    %434 = vmatprep.subr.mxu0 0.0
    %435 = vmatpush1.msra.mxu0 0.0
    %436 = vmatprep.subr.mxu0 0.0
    %437 = vmatpush1.msra.mxu0 0.0
    %438 = vmatprep.mubr.f32.mxu0 0.0
    %439 = vmatmul.mubr.f32.gmra.mrb[0].mxu0 %v247
    %v440 = vpop.f32.mrb[0].mxu0
    %v441 = vadd.f32 0.0, %v440
    %v442 = vpop.f32.mrb[0].mxu0
    %443 = vmatprep.mubr.f32.mxu0 0.0
    %444 = vmatmul.mubr.f32.gmra.mrb[0].mxu0 %v248
    %v445 = vpop.f32.mrb[0].mxu0
    %v446 = vadd.f32 0.0, %v445
    %v447 = vpop.f32.mrb[0].mxu0
    %448 = vdwg.mxu0
    %v449 = vmul.f32 %v364, %v51
    %v450 = vmul.f32 %v370, %v52
    %451 = vmatprep.subr.mxu0 0.0
    %452 = vmatpush1.msra.mxu0 %v55
    %453 = vmatprep.subr.mxu0 0.0
    %454 = vmatpush1.msra.mxu0 %v56
    %455 = vmatprep.subr.mxu0 0.0
    %456 = vmatpush1.msra.mxu0 %v57
    %457 = vmatprep.subr.mxu0 0.0
    %458 = vmatpush1.msra.mxu0 %v58
    %459 = vmatprep.subr.mxu0 0.0
    %460 = vmatpush1.msra.mxu0 %v59
    %461 = vmatprep.subr.mxu0 0.0
    %462 = vmatpush1.msra.mxu0 %v60
    %463 = vmatprep.subr.mxu0 0.0
    %464 = vmatpush1.msra.mxu0 %v61
    %465 = vmatprep.subr.mxu0 0.0
    %466 = vmatpush1.msra.mxu0 %v62
    %467 = vmatprep.subr.mxu0 0.0
    %468 = vmatpush1.msra.mxu0 %v63
    %469 = vmatprep.subr.mxu0 0.0
    %470 = vmatpush1.msra.mxu0 %v64
    %471 = vmatprep.subr.mxu0 0.0
    %472 = vmatpush1.msra.mxu0 %v65
    %473 = vmatprep.subr.mxu0 0.0
    %474 = vmatpush1.msra.mxu0 %v66
    %475 = vmatprep.subr.mxu0 0.0
    %476 = vmatpush1.msra.mxu0 %v67
    %477 = vmatprep.subr.mxu0 0.0
    %478 = vmatpush1.msra.mxu0 %v68
    %479 = vmatprep.subr.mxu0 0.0
    %480 = vmatpush1.msra.mxu0 %v69
    %481 = vmatprep.subr.mxu0 0.0
    %482 = vmatpush1.msra.mxu0 %v70
    %483 = vmatprep.subr.mxu0 0.0
    %484 = vmatpush1.msra.mxu0 0.0
    %485 = vmatprep.subr.mxu0 0.0
    %486 = vmatpush1.msra.mxu0 0.0
    %487 = vmatprep.subr.mxu0 0.0
    %488 = vmatpush1.msra.mxu0 0.0
    %489 = vmatprep.subr.mxu0 0.0
    %490 = vmatpush1.msra.mxu0 0.0
    %491 = vmatprep.subr.mxu0 0.0
    %492 = vmatpush1.msra.mxu0 0.0
    %493 = vmatprep.subr.mxu0 0.0
    %494 = vmatpush1.msra.mxu0 0.0
    %495 = vmatprep.subr.mxu0 0.0
    %496 = vmatpush1.msra.mxu0 0.0
    %497 = vmatprep.subr.mxu0 0.0
    %498 = vmatpush1.msra.mxu0 0.0
    %499 = vmatprep.subr.mxu0 0.0
    %500 = vmatpush1.msra.mxu0 0.0
    %501 = vmatprep.subr.mxu0 0.0
    %502 = vmatpush1.msra.mxu0 0.0
    %503 = vmatprep.subr.mxu0 0.0
    %504 = vmatpush1.msra.mxu0 0.0
    %505 = vmatprep.subr.mxu0 0.0
    %506 = vmatpush1.msra.mxu0 0.0
    %507 = vmatprep.subr.mxu0 0.0
    %508 = vmatpush1.msra.mxu0 0.0
    %509 = vmatprep.subr.mxu0 0.0
    %510 = vmatpush1.msra.mxu0 0.0
    %511 = vmatprep.subr.mxu0 0.0
    %512 = vmatpush1.msra.mxu0 0.0
    %513 = vmatprep.subr.mxu0 0.0
    %514 = vmatpush1.msra.mxu0 0.0
    %515 = vmatprep.mubr.f32.mxu0 0.0
    %516 = vmatmul.mubr.f32.gmra.mrb[0].mxu0 %v364
    %v517 = vpop.f32.mrb[0].mxu0
    %v518 = vadd.f32 0.0, %v517
    %v519 = vpop.f32.mrb[0].mxu0
    %520 = vmatprep.mubr.f32.mxu0 0.0
    %521 = vmatmul.mubr.f32.gmra.mrb[0].mxu0 %v370
    %v522 = vpop.f32.mrb[0].mxu0
    %v523 = vadd.f32 0.0, %v522
    %v524 = vpop.f32.mrb[0].mxu0
    %525 = vdwg.mxu0
    %v526 = vmul.f32 %v518, %v53
    %v527 = vmul.f32 %v523, %v54
    %v528 = vadd.f32 %v449, %v526
    %v529 = vadd.f32 %v450, %v527
    %v530 = vmul.f32 %v366, %v51
    %v531 = vmul.f32 %v372, %v52
    %532 = vmatprep.subr.mxu0 0.0
    %533 = vmatpush1.msra.mxu0 %v55
    %534 = vmatprep.subr.mxu0 0.0
    %535 = vmatpush1.msra.mxu0 %v56
    %536 = vmatprep.subr.mxu0 0.0
    %537 = vmatpush1.msra.mxu0 %v57
    %538 = vmatprep.subr.mxu0 0.0
    %539 = vmatpush1.msra.mxu0 %v58
    %540 = vmatprep.subr.mxu0 0.0
    %541 = vmatpush1.msra.mxu0 %v59
    %542 = vmatprep.subr.mxu0 0.0
    %543 = vmatpush1.msra.mxu0 %v60
    %544 = vmatprep.subr.mxu0 0.0
    %545 = vmatpush1.msra.mxu0 %v61
    %546 = vmatprep.subr.mxu0 0.0
    %547 = vmatpush1.msra.mxu0 %v62
    %548 = vmatprep.subr.mxu0 0.0
    %549 = vmatpush1.msra.mxu0 %v63
    %550 = vmatprep.subr.mxu0 0.0
    %551 = vmatpush1.msra.mxu0 %v64
    %552 = vmatprep.subr.mxu0 0.0
    %553 = vmatpush1.msra.mxu0 %v65
    %554 = vmatprep.subr.mxu0 0.0
    %555 = vmatpush1.msra.mxu0 %v66
    %556 = vmatprep.subr.mxu0 0.0
    %557 = vmatpush1.msra.mxu0 %v67
    %558 = vmatprep.subr.mxu0 0.0
    %559 = vmatpush1.msra.mxu0 %v68
    %560 = vmatprep.subr.mxu0 0.0
    %561 = vmatpush1.msra.mxu0 %v69
    %562 = vmatprep.subr.mxu0 0.0
    %563 = vmatpush1.msra.mxu0 %v70
    %564 = vmatprep.subr.mxu0 0.0
    %565 = vmatpush1.msra.mxu0 0.0
    %566 = vmatprep.subr.mxu0 0.0
    %567 = vmatpush1.msra.mxu0 0.0
    %568 = vmatprep.subr.mxu0 0.0
    %569 = vmatpush1.msra.mxu0 0.0
    %570 = vmatprep.subr.mxu0 0.0
    %571 = vmatpush1.msra.mxu0 0.0
    %572 = vmatprep.subr.mxu0 0.0
    %573 = vmatpush1.msra.mxu0 0.0
    %574 = vmatprep.subr.mxu0 0.0
    %575 = vmatpush1.msra.mxu0 0.0
    %576 = vmatprep.subr.mxu0 0.0
    %577 = vmatpush1.msra.mxu0 0.0
    %578 = vmatprep.subr.mxu0 0.0
    %579 = vmatpush1.msra.mxu0 0.0
    %580 = vmatprep.subr.mxu0 0.0
    %581 = vmatpush1.msra.mxu0 0.0
    %582 = vmatprep.subr.mxu0 0.0
    %583 = vmatpush1.msra.mxu0 0.0
    %584 = vmatprep.subr.mxu0 0.0
    %585 = vmatpush1.msra.mxu0 0.0
    %586 = vmatprep.subr.mxu0 0.0
    %587 = vmatpush1.msra.mxu0 0.0
    %588 = vmatprep.subr.mxu0 0.0
    %589 = vmatpush1.msra.mxu0 0.0
    %590 = vmatprep.subr.mxu0 0.0
    %591 = vmatpush1.msra.mxu0 0.0
    %592 = vmatprep.subr.mxu0 0.0
    %593 = vmatpush1.msra.mxu0 0.0
    %594 = vmatprep.subr.mxu0 0.0
    %595 = vmatpush1.msra.mxu0 0.0
    %596 = vmatprep.mubr.f32.mxu0 0.0
    %597 = vmatmul.mubr.f32.gmra.mrb[0].mxu0 %v366
    %v598 = vpop.f32.mrb[0].mxu0
    %v599 = vadd.f32 0.0, %v598
    %v600 = vpop.f32.mrb[0].mxu0
    %601 = vmatprep.mubr.f32.mxu0 0.0
    %602 = vmatmul.mubr.f32.gmra.mrb[0].mxu0 %v372
    %v603 = vpop.f32.mrb[0].mxu0
    %v604 = vadd.f32 0.0, %v603
    %v605 = vpop.f32.mrb[0].mxu0
    %606 = vdwg.mxu0
    %v607 = vmul.f32 %v599, %v53
    %v608 = vmul.f32 %v604, %v54
    %v609 = vadd.f32 %v530, %v607
    %v610 = vadd.f32 %v531, %v608
    %613 = vrot.lane.b32.xlu0 %v528, 120
    %v614 = vpop.permute.xlu0 %613
    %615 = vrot.lane.b32.xlu0 %v529, 120
    %v616 = vpop.permute.xlu0 %615
    %617 = vrot.lane.b32.xlu0 %v528, 112
    %v618 = vpop.permute.xlu0 %617
    %619 = vrot.lane.b32.xlu0 %v529, 112
    %v620 = vpop.permute.xlu0 %619
    %621 = vrot.lane.b32.xlu0 %v528, 104
    %v622 = vpop.permute.xlu0 %621
    %623 = vrot.lane.b32.xlu0 %v529, 104
    %v624 = vpop.permute.xlu0 %623
    %627 = vrot.lane.b32.xlu0 %v609, 120
    %v628 = vpop.permute.xlu0 %627
    %629 = vrot.lane.b32.xlu0 %v610, 120
    %v630 = vpop.permute.xlu0 %629
    %631 = vrot.lane.b32.xlu0 %v609, 112
    %v632 = vpop.permute.xlu0 %631
    %633 = vrot.lane.b32.xlu0 %v610, 112
    %v634 = vpop.permute.xlu0 %633
    %635 = vrot.lane.b32.xlu0 %v609, 104
    %v636 = vpop.permute.xlu0 %635
    %637 = vrot.lane.b32.xlu0 %v610, 104
    %v638 = vpop.permute.xlu0 %637
    %641 = vrot.lane.b32.xlu0 %v441, 120
    %v642 = vpop.permute.xlu0 %641
    %643 = vrot.lane.b32.xlu0 %v446, 120
    %v644 = vpop.permute.xlu0 %643
    %647 = vrot.lane.b32.xlu0 %v441, 112
    %v648 = vpop.permute.xlu0 %647
    %649 = vrot.lane.b32.xlu0 %v446, 112
    %v650 = vpop.permute.xlu0 %649
    %653 = vrot.lane.b32.xlu0 %v441, 104
    %v654 = vpop.permute.xlu0 %653
    %655 = vrot.lane.b32.xlu0 %v446, 104
    %v656 = vpop.permute.xlu0 %655
    %vm659 = vcmask 64512
    %v660 = vsel %vm659, %v528, 0
    %v662 = vsel %vm659, %v609, 0
    %664 = vmatprep.subr.mxu0 0.0
    %665 = vmatpush1.xpose.msra.mxu0 %v662
    %666 = vmatprep.subr.mxu0 0.0
    %667 = vmatpush1.xpose.msra.mxu0 0.0
    %668 = vmatprep.subr.mxu0 0.0
    %669 = vmatpush1.xpose.msra.mxu0 0.0
    %670 = vmatprep.subr.mxu0 0.0
    %671 = vmatpush1.xpose.msra.mxu0 0.0
    %672 = vmatprep.subr.mxu0 0.0
    %673 = vmatpush1.xpose.msra.mxu0 0.0
    %674 = vmatprep.subr.mxu0 0.0
    %675 = vmatpush1.xpose.msra.mxu0 0.0
    %676 = vmatprep.subr.mxu0 0.0
    %677 = vmatpush1.xpose.msra.mxu0 0.0
    %678 = vmatprep.subr.mxu0 0.0
    %679 = vmatpush1.xpose.msra.mxu0 0.0
    %680 = vmatprep.subr.mxu0 0.0
    %681 = vmatpush1.xpose.msra.mxu0 0.0
    %682 = vmatprep.subr.mxu0 0.0
    %683 = vmatpush1.xpose.msra.mxu0 0.0
    %684 = vmatprep.subr.mxu0 0.0
    %685 = vmatpush1.xpose.msra.mxu0 0.0
    %686 = vmatprep.subr.mxu0 0.0
    %687 = vmatpush1.xpose.msra.mxu0 0.0
    %688 = vmatprep.subr.mxu0 0.0
    %689 = vmatpush1.xpose.msra.mxu0 0.0
    %690 = vmatprep.subr.mxu0 0.0
    %691 = vmatpush1.xpose.msra.mxu0 0.0
    %692 = vmatprep.subr.mxu0 0.0
    %693 = vmatpush1.xpose.msra.mxu0 0.0
    %694 = vmatprep.subr.mxu0 0.0
    %695 = vmatpush1.xpose.msra.mxu0 0.0
    %696 = vmatprep.subr.mxu0 0.0
    %697 = vmatpush1.xpose.msra.mxu0 0.0
    %698 = vmatprep.subr.mxu0 0.0
    %699 = vmatpush1.xpose.msra.mxu0 0.0
    %700 = vmatprep.subr.mxu0 0.0
    %701 = vmatpush1.xpose.msra.mxu0 0.0
    %702 = vmatprep.subr.mxu0 0.0
    %703 = vmatpush1.xpose.msra.mxu0 0.0
    %704 = vmatprep.subr.mxu0 0.0
    %705 = vmatpush1.xpose.msra.mxu0 0.0
    %706 = vmatprep.subr.mxu0 0.0
    %707 = vmatpush1.xpose.msra.mxu0 0.0
    %708 = vmatprep.subr.mxu0 0.0
    %709 = vmatpush1.xpose.msra.mxu0 0.0
    %710 = vmatprep.subr.mxu0 0.0
    %711 = vmatpush1.xpose.msra.mxu0 0.0
    %712 = vmatprep.subr.mxu0 0.0
    %713 = vmatpush1.xpose.msra.mxu0 0.0
    %714 = vmatprep.subr.mxu0 0.0
    %715 = vmatpush1.xpose.msra.mxu0 0.0
    %716 = vmatprep.subr.mxu0 0.0
    %717 = vmatpush1.xpose.msra.mxu0 0.0
    %718 = vmatprep.subr.mxu0 0.0
    %719 = vmatpush1.xpose.msra.mxu0 0.0
    %720 = vmatprep.subr.mxu0 0.0
    %721 = vmatpush1.xpose.msra.mxu0 0.0
    %722 = vmatprep.subr.mxu0 0.0
    %723 = vmatpush1.xpose.msra.mxu0 0.0
    %724 = vmatprep.subr.mxu0 0.0
    %725 = vmatpush1.xpose.msra.mxu0 0.0
    %726 = vmatprep.subr.mxu0 0.0
    %727 = vmatpush1.xpose.msra.mxu0 0.0
    %728 = vmatprep.mubr.f32.mxu0 0.0
    %729 = vmatmul.mubr.f32.gmra.mrb[0].mxu0 %v660
    %v730 = vpop.f32.mrb[0].mxu0
    %v731 = vadd.f32 %v224, %v730
    %v732 = vpop.f32.mrb[0].mxu0
    %733 = vdwg.mxu0
    %v734 = vsel %vm659, %v529, 0
    %v736 = vsel %vm659, %v610, 0
    %738 = vmatprep.subr.mxu0 0.0
    %739 = vmatpush1.xpose.msra.mxu0 %v736
    %740 = vmatprep.subr.mxu0 0.0
    %741 = vmatpush1.xpose.msra.mxu0 0.0
    %742 = vmatprep.subr.mxu0 0.0
    %743 = vmatpush1.xpose.msra.mxu0 0.0
    %744 = vmatprep.subr.mxu0 0.0
    %745 = vmatpush1.xpose.msra.mxu0 0.0
    %746 = vmatprep.subr.mxu0 0.0
    %747 = vmatpush1.xpose.msra.mxu0 0.0
    %748 = vmatprep.subr.mxu0 0.0
    %749 = vmatpush1.xpose.msra.mxu0 0.0
    %750 = vmatprep.subr.mxu0 0.0
    %751 = vmatpush1.xpose.msra.mxu0 0.0
    %752 = vmatprep.subr.mxu0 0.0
    %753 = vmatpush1.xpose.msra.mxu0 0.0
    %754 = vmatprep.subr.mxu0 0.0
    %755 = vmatpush1.xpose.msra.mxu0 0.0
    %756 = vmatprep.subr.mxu0 0.0
    %757 = vmatpush1.xpose.msra.mxu0 0.0
    %758 = vmatprep.subr.mxu0 0.0
    %759 = vmatpush1.xpose.msra.mxu0 0.0
    %760 = vmatprep.subr.mxu0 0.0
    %761 = vmatpush1.xpose.msra.mxu0 0.0
    %762 = vmatprep.subr.mxu0 0.0
    %763 = vmatpush1.xpose.msra.mxu0 0.0
    %764 = vmatprep.subr.mxu0 0.0
    %765 = vmatpush1.xpose.msra.mxu0 0.0
    %766 = vmatprep.subr.mxu0 0.0
    %767 = vmatpush1.xpose.msra.mxu0 0.0
    %768 = vmatprep.subr.mxu0 0.0
    %769 = vmatpush1.xpose.msra.mxu0 0.0
    %770 = vmatprep.subr.mxu0 0.0
    %771 = vmatpush1.xpose.msra.mxu0 0.0
    %772 = vmatprep.subr.mxu0 0.0
    %773 = vmatpush1.xpose.msra.mxu0 0.0
    %774 = vmatprep.subr.mxu0 0.0
    %775 = vmatpush1.xpose.msra.mxu0 0.0
    %776 = vmatprep.subr.mxu0 0.0
    %777 = vmatpush1.xpose.msra.mxu0 0.0
    %778 = vmatprep.subr.mxu0 0.0
    %779 = vmatpush1.xpose.msra.mxu0 0.0
    %780 = vmatprep.subr.mxu0 0.0
    %781 = vmatpush1.xpose.msra.mxu0 0.0
    %782 = vmatprep.subr.mxu0 0.0
    %783 = vmatpush1.xpose.msra.mxu0 0.0
    %784 = vmatprep.subr.mxu0 0.0
    %785 = vmatpush1.xpose.msra.mxu0 0.0
    %786 = vmatprep.subr.mxu0 0.0
    %787 = vmatpush1.xpose.msra.mxu0 0.0
    %788 = vmatprep.subr.mxu0 0.0
    %789 = vmatpush1.xpose.msra.mxu0 0.0
    %790 = vmatprep.subr.mxu0 0.0
    %791 = vmatpush1.xpose.msra.mxu0 0.0
    %792 = vmatprep.subr.mxu0 0.0
    %793 = vmatpush1.xpose.msra.mxu0 0.0
    %794 = vmatprep.subr.mxu0 0.0
    %795 = vmatpush1.xpose.msra.mxu0 0.0
    %796 = vmatprep.subr.mxu0 0.0
    %797 = vmatpush1.xpose.msra.mxu0 0.0
    %798 = vmatprep.subr.mxu0 0.0
    %799 = vmatpush1.xpose.msra.mxu0 0.0
    %800 = vmatprep.subr.mxu0 0.0
    %801 = vmatpush1.xpose.msra.mxu0 0.0
    %802 = vmatprep.mubr.f32.mxu0 0.0
    %803 = vmatmul.mubr.f32.gmra.mrb[0].mxu0 %v734
    %v804 = vpop.f32.mrb[0].mxu0
    %v805 = vadd.f32 %v225, %v804
    %v806 = vpop.f32.mrb[0].mxu0
    %807 = vdwg.mxu0
    %v808 = vsel %vm659, %v614, 0
    %v810 = vsel %vm659, %v628, 0
    %812 = vmatprep.subr.mxu0 0.0
    %813 = vmatpush1.xpose.msra.mxu0 %v810
    %814 = vmatprep.subr.mxu0 0.0
    %815 = vmatpush1.xpose.msra.mxu0 0.0
    %816 = vmatprep.subr.mxu0 0.0
    %817 = vmatpush1.xpose.msra.mxu0 0.0
    %818 = vmatprep.subr.mxu0 0.0
    %819 = vmatpush1.xpose.msra.mxu0 0.0
    %820 = vmatprep.subr.mxu0 0.0
    %821 = vmatpush1.xpose.msra.mxu0 0.0
    %822 = vmatprep.subr.mxu0 0.0
    %823 = vmatpush1.xpose.msra.mxu0 0.0
    %824 = vmatprep.subr.mxu0 0.0
    %825 = vmatpush1.xpose.msra.mxu0 0.0
    %826 = vmatprep.subr.mxu0 0.0
    %827 = vmatpush1.xpose.msra.mxu0 0.0
    %828 = vmatprep.subr.mxu0 0.0
    %829 = vmatpush1.xpose.msra.mxu0 0.0
    %830 = vmatprep.subr.mxu0 0.0
    %831 = vmatpush1.xpose.msra.mxu0 0.0
    %832 = vmatprep.subr.mxu0 0.0
    %833 = vmatpush1.xpose.msra.mxu0 0.0
    %834 = vmatprep.subr.mxu0 0.0
    %835 = vmatpush1.xpose.msra.mxu0 0.0
    %836 = vmatprep.subr.mxu0 0.0
    %837 = vmatpush1.xpose.msra.mxu0 0.0
    %838 = vmatprep.subr.mxu0 0.0
    %839 = vmatpush1.xpose.msra.mxu0 0.0
    %840 = vmatprep.subr.mxu0 0.0
    %841 = vmatpush1.xpose.msra.mxu0 0.0
    %842 = vmatprep.subr.mxu0 0.0
    %843 = vmatpush1.xpose.msra.mxu0 0.0
    %844 = vmatprep.subr.mxu0 0.0
    %845 = vmatpush1.xpose.msra.mxu0 0.0
    %846 = vmatprep.subr.mxu0 0.0
    %847 = vmatpush1.xpose.msra.mxu0 0.0
    %848 = vmatprep.subr.mxu0 0.0
    %849 = vmatpush1.xpose.msra.mxu0 0.0
    %850 = vmatprep.subr.mxu0 0.0
    %851 = vmatpush1.xpose.msra.mxu0 0.0
    %852 = vmatprep.subr.mxu0 0.0
    %853 = vmatpush1.xpose.msra.mxu0 0.0
    %854 = vmatprep.subr.mxu0 0.0
    %855 = vmatpush1.xpose.msra.mxu0 0.0
    %856 = vmatprep.subr.mxu0 0.0
    %857 = vmatpush1.xpose.msra.mxu0 0.0
    %858 = vmatprep.subr.mxu0 0.0
    %859 = vmatpush1.xpose.msra.mxu0 0.0
    %860 = vmatprep.subr.mxu0 0.0
    %861 = vmatpush1.xpose.msra.mxu0 0.0
    %862 = vmatprep.subr.mxu0 0.0
    %863 = vmatpush1.xpose.msra.mxu0 0.0
    %864 = vmatprep.subr.mxu0 0.0
    %865 = vmatpush1.xpose.msra.mxu0 0.0
    %866 = vmatprep.subr.mxu0 0.0
    %867 = vmatpush1.xpose.msra.mxu0 0.0
    %868 = vmatprep.subr.mxu0 0.0
    %869 = vmatpush1.xpose.msra.mxu0 0.0
    %870 = vmatprep.subr.mxu0 0.0
    %871 = vmatpush1.xpose.msra.mxu0 0.0
    %872 = vmatprep.subr.mxu0 0.0
    %873 = vmatpush1.xpose.msra.mxu0 0.0
    %874 = vmatprep.subr.mxu0 0.0
    %875 = vmatpush1.xpose.msra.mxu0 0.0
    %876 = vmatprep.mubr.f32.mxu0 0.0
    %877 = vmatmul.mubr.f32.gmra.mrb[0].mxu0 %v808
    %v878 = vpop.f32.mrb[0].mxu0
    %v879 = vadd.f32 %v224, %v878
    %v880 = vpop.f32.mrb[0].mxu0
    %881 = vdwg.mxu0
    %v882 = vsel %vm659, %v616, 0
    %v884 = vsel %vm659, %v630, 0
    %886 = vmatprep.subr.mxu0 0.0
    %887 = vmatpush1.xpose.msra.mxu0 %v884
    %888 = vmatprep.subr.mxu0 0.0
    %889 = vmatpush1.xpose.msra.mxu0 0.0
    %890 = vmatprep.subr.mxu0 0.0
    %891 = vmatpush1.xpose.msra.mxu0 0.0
    %892 = vmatprep.subr.mxu0 0.0
    %893 = vmatpush1.xpose.msra.mxu0 0.0
    %894 = vmatprep.subr.mxu0 0.0
    %895 = vmatpush1.xpose.msra.mxu0 0.0
    %896 = vmatprep.subr.mxu0 0.0
    %897 = vmatpush1.xpose.msra.mxu0 0.0
    %898 = vmatprep.subr.mxu0 0.0
    %899 = vmatpush1.xpose.msra.mxu0 0.0
    %900 = vmatprep.subr.mxu0 0.0
    %901 = vmatpush1.xpose.msra.mxu0 0.0
    %902 = vmatprep.subr.mxu0 0.0
    %903 = vmatpush1.xpose.msra.mxu0 0.0
    %904 = vmatprep.subr.mxu0 0.0
    %905 = vmatpush1.xpose.msra.mxu0 0.0
    %906 = vmatprep.subr.mxu0 0.0
    %907 = vmatpush1.xpose.msra.mxu0 0.0
    %908 = vmatprep.subr.mxu0 0.0
    %909 = vmatpush1.xpose.msra.mxu0 0.0
    %910 = vmatprep.subr.mxu0 0.0
    %911 = vmatpush1.xpose.msra.mxu0 0.0
    %912 = vmatprep.subr.mxu0 0.0
    %913 = vmatpush1.xpose.msra.mxu0 0.0
    %914 = vmatprep.subr.mxu0 0.0
    %915 = vmatpush1.xpose.msra.mxu0 0.0
    %916 = vmatprep.subr.mxu0 0.0
    %917 = vmatpush1.xpose.msra.mxu0 0.0
    %918 = vmatprep.subr.mxu0 0.0
    %919 = vmatpush1.xpose.msra.mxu0 0.0
    %920 = vmatprep.subr.mxu0 0.0
    %921 = vmatpush1.xpose.msra.mxu0 0.0
    %922 = vmatprep.subr.mxu0 0.0
    %923 = vmatpush1.xpose.msra.mxu0 0.0
    %924 = vmatprep.subr.mxu0 0.0
    %925 = vmatpush1.xpose.msra.mxu0 0.0
    %926 = vmatprep.subr.mxu0 0.0
    %927 = vmatpush1.xpose.msra.mxu0 0.0
    %928 = vmatprep.subr.mxu0 0.0
    %929 = vmatpush1.xpose.msra.mxu0 0.0
    %930 = vmatprep.subr.mxu0 0.0
    %931 = vmatpush1.xpose.msra.mxu0 0.0
    %932 = vmatprep.subr.mxu0 0.0
    %933 = vmatpush1.xpose.msra.mxu0 0.0
    %934 = vmatprep.subr.mxu0 0.0
    %935 = vmatpush1.xpose.msra.mxu0 0.0
    %936 = vmatprep.subr.mxu0 0.0
    %937 = vmatpush1.xpose.msra.mxu0 0.0
    %938 = vmatprep.subr.mxu0 0.0
    %939 = vmatpush1.xpose.msra.mxu0 0.0
    %940 = vmatprep.subr.mxu0 0.0
    %941 = vmatpush1.xpose.msra.mxu0 0.0
    %942 = vmatprep.subr.mxu0 0.0
    %943 = vmatpush1.xpose.msra.mxu0 0.0
    %944 = vmatprep.subr.mxu0 0.0
    %945 = vmatpush1.xpose.msra.mxu0 0.0
    %946 = vmatprep.subr.mxu0 0.0
    %947 = vmatpush1.xpose.msra.mxu0 0.0
    %948 = vmatprep.subr.mxu0 0.0
    %949 = vmatpush1.xpose.msra.mxu0 0.0
    %950 = vmatprep.mubr.f32.mxu0 0.0
    %951 = vmatmul.mubr.f32.gmra.mrb[0].mxu0 %v882
    %v952 = vpop.f32.mrb[0].mxu0
    %v953 = vadd.f32 %v225, %v952
    %v954 = vpop.f32.mrb[0].mxu0
    %955 = vdwg.mxu0
    %v956 = vsel %vm659, %v618, 0
    %v958 = vsel %vm659, %v632, 0
    %960 = vmatprep.subr.mxu0 0.0
    %961 = vmatpush1.xpose.msra.mxu0 %v958
    %962 = vmatprep.subr.mxu0 0.0
    %963 = vmatpush1.xpose.msra.mxu0 0.0
    %964 = vmatprep.subr.mxu0 0.0
    %965 = vmatpush1.xpose.msra.mxu0 0.0
    %966 = vmatprep.subr.mxu0 0.0
    %967 = vmatpush1.xpose.msra.mxu0 0.0
    %968 = vmatprep.subr.mxu0 0.0
    %969 = vmatpush1.xpose.msra.mxu0 0.0
    %970 = vmatprep.subr.mxu0 0.0
    %971 = vmatpush1.xpose.msra.mxu0 0.0
    %972 = vmatprep.subr.mxu0 0.0
    %973 = vmatpush1.xpose.msra.mxu0 0.0
    %974 = vmatprep.subr.mxu0 0.0
    %975 = vmatpush1.xpose.msra.mxu0 0.0
    %976 = vmatprep.subr.mxu0 0.0
    %977 = vmatpush1.xpose.msra.mxu0 0.0
    %978 = vmatprep.subr.mxu0 0.0
    %979 = vmatpush1.xpose.msra.mxu0 0.0
    %980 = vmatprep.subr.mxu0 0.0
    %981 = vmatpush1.xpose.msra.mxu0 0.0
    %982 = vmatprep.subr.mxu0 0.0
    %983 = vmatpush1.xpose.msra.mxu0 0.0
    %984 = vmatprep.subr.mxu0 0.0
    %985 = vmatpush1.xpose.msra.mxu0 0.0
    %986 = vmatprep.subr.mxu0 0.0
    %987 = vmatpush1.xpose.msra.mxu0 0.0
    %988 = vmatprep.subr.mxu0 0.0
    %989 = vmatpush1.xpose.msra.mxu0 0.0
    %990 = vmatprep.subr.mxu0 0.0
    %991 = vmatpush1.xpose.msra.mxu0 0.0
    %992 = vmatprep.subr.mxu0 0.0
    %993 = vmatpush1.xpose.msra.mxu0 0.0
    %994 = vmatprep.subr.mxu0 0.0
    %995 = vmatpush1.xpose.msra.mxu0 0.0
    %996 = vmatprep.subr.mxu0 0.0
    %997 = vmatpush1.xpose.msra.mxu0 0.0
    %998 = vmatprep.subr.mxu0 0.0
    %999 = vmatpush1.xpose.msra.mxu0 0.0
    %1000 = vmatprep.subr.mxu0 0.0
    %1001 = vmatpush1.xpose.msra.mxu0 0.0
    %1002 = vmatprep.subr.mxu0 0.0
    %1003 = vmatpush1.xpose.msra.mxu0 0.0
    %1004 = vmatprep.subr.mxu0 0.0
    %1005 = vmatpush1.xpose.msra.mxu0 0.0
    %1006 = vmatprep.subr.mxu0 0.0
    %1007 = vmatpush1.xpose.msra.mxu0 0.0
    %1008 = vmatprep.subr.mxu0 0.0
    %1009 = vmatpush1.xpose.msra.mxu0 0.0
    %1010 = vmatprep.subr.mxu0 0.0
    %1011 = vmatpush1.xpose.msra.mxu0 0.0
    %1012 = vmatprep.subr.mxu0 0.0
    %1013 = vmatpush1.xpose.msra.mxu0 0.0
    %1014 = vmatprep.subr.mxu0 0.0
    %1015 = vmatpush1.xpose.msra.mxu0 0.0
    %1016 = vmatprep.subr.mxu0 0.0
    %1017 = vmatpush1.xpose.msra.mxu0 0.0
    %1018 = vmatprep.subr.mxu0 0.0
    %1019 = vmatpush1.xpose.msra.mxu0 0.0
    %1020 = vmatprep.subr.mxu0 0.0
    %1021 = vmatpush1.xpose.msra.mxu0 0.0
    %1022 = vmatprep.subr.mxu0 0.0
    %1023 = vmatpush1.xpose.msra.mxu0 0.0
    %1024 = vmatprep.mubr.f32.mxu0 0.0
    %1025 = vmatmul.mubr.f32.gmra.mrb[0].mxu0 %v956
    %v1026 = vpop.f32.mrb[0].mxu0
    %v1027 = vadd.f32 %v224, %v1026
    %v1028 = vpop.f32.mrb[0].mxu0
    %1029 = vdwg.mxu0
    %v1030 = vsel %vm659, %v620, 0
    %v1032 = vsel %vm659, %v634, 0
    %1034 = vmatprep.subr.mxu0 0.0
    %1035 = vmatpush1.xpose.msra.mxu0 %v1032
    %1036 = vmatprep.subr.mxu0 0.0
    %1037 = vmatpush1.xpose.msra.mxu0 0.0
    %1038 = vmatprep.subr.mxu0 0.0
    %1039 = vmatpush1.xpose.msra.mxu0 0.0
    %1040 = vmatprep.subr.mxu0 0.0
    %1041 = vmatpush1.xpose.msra.mxu0 0.0
    %1042 = vmatprep.subr.mxu0 0.0
    %1043 = vmatpush1.xpose.msra.mxu0 0.0
    %1044 = vmatprep.subr.mxu0 0.0
    %1045 = vmatpush1.xpose.msra.mxu0 0.0
    %1046 = vmatprep.subr.mxu0 0.0
    %1047 = vmatpush1.xpose.msra.mxu0 0.0
    %1048 = vmatprep.subr.mxu0 0.0
    %1049 = vmatpush1.xpose.msra.mxu0 0.0
    %1050 = vmatprep.subr.mxu0 0.0
    %1051 = vmatpush1.xpose.msra.mxu0 0.0
    %1052 = vmatprep.subr.mxu0 0.0
    %1053 = vmatpush1.xpose.msra.mxu0 0.0
    %1054 = vmatprep.subr.mxu0 0.0
    %1055 = vmatpush1.xpose.msra.mxu0 0.0
    %1056 = vmatprep.subr.mxu0 0.0
    %1057 = vmatpush1.xpose.msra.mxu0 0.0
    %1058 = vmatprep.subr.mxu0 0.0
    %1059 = vmatpush1.xpose.msra.mxu0 0.0
    %1060 = vmatprep.subr.mxu0 0.0
    %1061 = vmatpush1.xpose.msra.mxu0 0.0
    %1062 = vmatprep.subr.mxu0 0.0
    %1063 = vmatpush1.xpose.msra.mxu0 0.0
    %1064 = vmatprep.subr.mxu0 0.0
    %1065 = vmatpush1.xpose.msra.mxu0 0.0
    %1066 = vmatprep.subr.mxu0 0.0
    %1067 = vmatpush1.xpose.msra.mxu0 0.0
    %1068 = vmatprep.subr.mxu0 0.0
    %1069 = vmatpush1.xpose.msra.mxu0 0.0
    %1070 = vmatprep.subr.mxu0 0.0
    %1071 = vmatpush1.xpose.msra.mxu0 0.0
    %1072 = vmatprep.subr.mxu0 0.0
    %1073 = vmatpush1.xpose.msra.mxu0 0.0
    %1074 = vmatprep.subr.mxu0 0.0
    %1075 = vmatpush1.xpose.msra.mxu0 0.0
    %1076 = vmatprep.subr.mxu0 0.0
    %1077 = vmatpush1.xpose.msra.mxu0 0.0
    %1078 = vmatprep.subr.mxu0 0.0
    %1079 = vmatpush1.xpose.msra.mxu0 0.0
    %1080 = vmatprep.subr.mxu0 0.0
    %1081 = vmatpush1.xpose.msra.mxu0 0.0
    %1082 = vmatprep.subr.mxu0 0.0
    %1083 = vmatpush1.xpose.msra.mxu0 0.0
    %1084 = vmatprep.subr.mxu0 0.0
    %1085 = vmatpush1.xpose.msra.mxu0 0.0
    %1086 = vmatprep.subr.mxu0 0.0
    %1087 = vmatpush1.xpose.msra.mxu0 0.0
    %1088 = vmatprep.subr.mxu0 0.0
    %1089 = vmatpush1.xpose.msra.mxu0 0.0
    %1090 = vmatprep.subr.mxu0 0.0
    %1091 = vmatpush1.xpose.msra.mxu0 0.0
    %1092 = vmatprep.subr.mxu0 0.0
    %1093 = vmatpush1.xpose.msra.mxu0 0.0
    %1094 = vmatprep.subr.mxu0 0.0
    %1095 = vmatpush1.xpose.msra.mxu0 0.0
    %1096 = vmatprep.subr.mxu0 0.0
    %1097 = vmatpush1.xpose.msra.mxu0 0.0
    %1098 = vmatprep.mubr.f32.mxu0 0.0
    %1099 = vmatmul.mubr.f32.gmra.mrb[0].mxu0 %v1030
    %v1100 = vpop.f32.mrb[0].mxu0
    %v1101 = vadd.f32 %v225, %v1100
    %v1102 = vpop.f32.mrb[0].mxu0
    %1103 = vdwg.mxu0
    %v1104 = vsel %vm659, %v622, 0
    %v1106 = vsel %vm659, %v636, 0
    %1108 = vmatprep.subr.mxu0 0.0
    %1109 = vmatpush1.xpose.msra.mxu0 %v1106
    %1110 = vmatprep.subr.mxu0 0.0
    %1111 = vmatpush1.xpose.msra.mxu0 0.0
    %1112 = vmatprep.subr.mxu0 0.0
    %1113 = vmatpush1.xpose.msra.mxu0 0.0
    %1114 = vmatprep.subr.mxu0 0.0
    %1115 = vmatpush1.xpose.msra.mxu0 0.0
    %1116 = vmatprep.subr.mxu0 0.0
    %1117 = vmatpush1.xpose.msra.mxu0 0.0
    %1118 = vmatprep.subr.mxu0 0.0
    %1119 = vmatpush1.xpose.msra.mxu0 0.0
    %1120 = vmatprep.subr.mxu0 0.0
    %1121 = vmatpush1.xpose.msra.mxu0 0.0
    %1122 = vmatprep.subr.mxu0 0.0
    %1123 = vmatpush1.xpose.msra.mxu0 0.0
    %1124 = vmatprep.subr.mxu0 0.0
    %1125 = vmatpush1.xpose.msra.mxu0 0.0
    %1126 = vmatprep.subr.mxu0 0.0
    %1127 = vmatpush1.xpose.msra.mxu0 0.0
    %1128 = vmatprep.subr.mxu0 0.0
    %1129 = vmatpush1.xpose.msra.mxu0 0.0
    %1130 = vmatprep.subr.mxu0 0.0
    %1131 = vmatpush1.xpose.msra.mxu0 0.0
    %1132 = vmatprep.subr.mxu0 0.0
    %1133 = vmatpush1.xpose.msra.mxu0 0.0
    %1134 = vmatprep.subr.mxu0 0.0
    %1135 = vmatpush1.xpose.msra.mxu0 0.0
    %1136 = vmatprep.subr.mxu0 0.0
    %1137 = vmatpush1.xpose.msra.mxu0 0.0
    %1138 = vmatprep.subr.mxu0 0.0
    %1139 = vmatpush1.xpose.msra.mxu0 0.0
    %1140 = vmatprep.subr.mxu0 0.0
    %1141 = vmatpush1.xpose.msra.mxu0 0.0
    %1142 = vmatprep.subr.mxu0 0.0
    %1143 = vmatpush1.xpose.msra.mxu0 0.0
    %1144 = vmatprep.subr.mxu0 0.0
    %1145 = vmatpush1.xpose.msra.mxu0 0.0
    %1146 = vmatprep.subr.mxu0 0.0
    %1147 = vmatpush1.xpose.msra.mxu0 0.0
    %1148 = vmatprep.subr.mxu0 0.0
    %1149 = vmatpush1.xpose.msra.mxu0 0.0
    %1150 = vmatprep.subr.mxu0 0.0
    %1151 = vmatpush1.xpose.msra.mxu0 0.0
    %1152 = vmatprep.subr.mxu0 0.0
    %1153 = vmatpush1.xpose.msra.mxu0 0.0
    %1154 = vmatprep.subr.mxu0 0.0
    %1155 = vmatpush1.xpose.msra.mxu0 0.0
    %1156 = vmatprep.subr.mxu0 0.0
    %1157 = vmatpush1.xpose.msra.mxu0 0.0
    %1158 = vmatprep.subr.mxu0 0.0
    %1159 = vmatpush1.xpose.msra.mxu0 0.0
    %1160 = vmatprep.subr.mxu0 0.0
    %1161 = vmatpush1.xpose.msra.mxu0 0.0
    %1162 = vmatprep.subr.mxu0 0.0
    %1163 = vmatpush1.xpose.msra.mxu0 0.0
    %1164 = vmatprep.subr.mxu0 0.0
    %1165 = vmatpush1.xpose.msra.mxu0 0.0
    %1166 = vmatprep.subr.mxu0 0.0
    %1167 = vmatpush1.xpose.msra.mxu0 0.0
    %1168 = vmatprep.subr.mxu0 0.0
    %1169 = vmatpush1.xpose.msra.mxu0 0.0
    %1170 = vmatprep.subr.mxu0 0.0
    %1171 = vmatpush1.xpose.msra.mxu0 0.0
    %1172 = vmatprep.mubr.f32.mxu0 0.0
    %1173 = vmatmul.mubr.f32.gmra.mrb[0].mxu0 %v1104
    %v1174 = vpop.f32.mrb[0].mxu0
    %v1175 = vadd.f32 %v224, %v1174
    %v1176 = vpop.f32.mrb[0].mxu0
    %1177 = vdwg.mxu0
    %v1178 = vsel %vm659, %v624, 0
    %v1180 = vsel %vm659, %v638, 0
    %1182 = vmatprep.subr.mxu0 0.0
    %1183 = vmatpush1.xpose.msra.mxu0 %v1180
    %1184 = vmatprep.subr.mxu0 0.0
    %1185 = vmatpush1.xpose.msra.mxu0 0.0
    %1186 = vmatprep.subr.mxu0 0.0
    %1187 = vmatpush1.xpose.msra.mxu0 0.0
    %1188 = vmatprep.subr.mxu0 0.0
    %1189 = vmatpush1.xpose.msra.mxu0 0.0
    %1190 = vmatprep.subr.mxu0 0.0
    %1191 = vmatpush1.xpose.msra.mxu0 0.0
    %1192 = vmatprep.subr.mxu0 0.0
    %1193 = vmatpush1.xpose.msra.mxu0 0.0
    %1194 = vmatprep.subr.mxu0 0.0
    %1195 = vmatpush1.xpose.msra.mxu0 0.0
    %1196 = vmatprep.subr.mxu0 0.0
    %1197 = vmatpush1.xpose.msra.mxu0 0.0
    %1198 = vmatprep.subr.mxu0 0.0
    %1199 = vmatpush1.xpose.msra.mxu0 0.0
    %1200 = vmatprep.subr.mxu0 0.0
    %1201 = vmatpush1.xpose.msra.mxu0 0.0
    %1202 = vmatprep.subr.mxu0 0.0
    %1203 = vmatpush1.xpose.msra.mxu0 0.0
    %1204 = vmatprep.subr.mxu0 0.0
    %1205 = vmatpush1.xpose.msra.mxu0 0.0
    %1206 = vmatprep.subr.mxu0 0.0
    %1207 = vmatpush1.xpose.msra.mxu0 0.0
    %1208 = vmatprep.subr.mxu0 0.0
    %1209 = vmatpush1.xpose.msra.mxu0 0.0
    %1210 = vmatprep.subr.mxu0 0.0
    %1211 = vmatpush1.xpose.msra.mxu0 0.0
    %1212 = vmatprep.subr.mxu0 0.0
    %1213 = vmatpush1.xpose.msra.mxu0 0.0
    %1214 = vmatprep.subr.mxu0 0.0
    %1215 = vmatpush1.xpose.msra.mxu0 0.0
    %1216 = vmatprep.subr.mxu0 0.0
    %1217 = vmatpush1.xpose.msra.mxu0 0.0
    %1218 = vmatprep.subr.mxu0 0.0
    %1219 = vmatpush1.xpose.msra.mxu0 0.0
    %1220 = vmatprep.subr.mxu0 0.0
    %1221 = vmatpush1.xpose.msra.mxu0 0.0
    %1222 = vmatprep.subr.mxu0 0.0
    %1223 = vmatpush1.xpose.msra.mxu0 0.0
    %1224 = vmatprep.subr.mxu0 0.0
    %1225 = vmatpush1.xpose.msra.mxu0 0.0
    %1226 = vmatprep.subr.mxu0 0.0
    %1227 = vmatpush1.xpose.msra.mxu0 0.0
    %1228 = vmatprep.subr.mxu0 0.0
    %1229 = vmatpush1.xpose.msra.mxu0 0.0
    %1230 = vmatprep.subr.mxu0 0.0
    %1231 = vmatpush1.xpose.msra.mxu0 0.0
    %1232 = vmatprep.subr.mxu0 0.0
    %1233 = vmatpush1.xpose.msra.mxu0 0.0
    %1234 = vmatprep.subr.mxu0 0.0
    %1235 = vmatpush1.xpose.msra.mxu0 0.0
    %1236 = vmatprep.subr.mxu0 0.0
    %1237 = vmatpush1.xpose.msra.mxu0 0.0
    %1238 = vmatprep.subr.mxu0 0.0
    %1239 = vmatpush1.xpose.msra.mxu0 0.0
    %1240 = vmatprep.subr.mxu0 0.0
    %1241 = vmatpush1.xpose.msra.mxu0 0.0
    %1242 = vmatprep.subr.mxu0 0.0
    %1243 = vmatpush1.xpose.msra.mxu0 0.0
    %1244 = vmatprep.subr.mxu0 0.0
    %1245 = vmatpush1.xpose.msra.mxu0 0.0
    %1246 = vmatprep.mubr.f32.mxu0 0.0
    %1247 = vmatmul.mubr.f32.gmra.mrb[0].mxu0 %v1178
    %v1248 = vpop.f32.mrb[0].mxu0
    %v1249 = vadd.f32 %v225, %v1248
    %v1250 = vpop.f32.mrb[0].mxu0
    %1251 = vdwg.mxu0
    %v1252 = vsel %vm659, %v731, -inf
    %1253 = vmax.xlane.f32.xlu0 %v1252
    %v1254 = vpop.xlane.xlu0 %1253
    %v1255 = vsel %vm659, %v805, -inf
    %1256 = vmax.xlane.f32.xlu0 %v1255
    %v1257 = vpop.xlane.xlu0 %1256
    %v1258 = vsel %vm659, %v879, -inf
    %1259 = vmax.xlane.f32.xlu0 %v1258
    %v1260 = vpop.xlane.xlu0 %1259
    %v1261 = vsel %vm659, %v953, -inf
    %1262 = vmax.xlane.f32.xlu0 %v1261
    %v1263 = vpop.xlane.xlu0 %1262
    %v1264 = vsel %vm659, %v1027, -inf
    %1265 = vmax.xlane.f32.xlu0 %v1264
    %v1266 = vpop.xlane.xlu0 %1265
    %v1267 = vsel %vm659, %v1101, -inf
    %1268 = vmax.xlane.f32.xlu0 %v1267
    %v1269 = vpop.xlane.xlu0 %1268
    %v1270 = vsel %vm659, %v1175, -inf
    %1271 = vmax.xlane.f32.xlu0 %v1270
    %v1272 = vpop.xlane.xlu0 %1271
    %v1273 = vsel %vm659, %v1249, -inf
    %1274 = vmax.xlane.f32.xlu0 %v1273
    %v1275 = vpop.xlane.xlu0 %1274
    %v1276 = vsub.f32 %v731, %v1254
    %v1277 = vsub.f32 %v805, %v1257
    %v1278 = vsub.f32 %v879, %v1260
    %v1279 = vsub.f32 %v953, %v1263
    %v1280 = vsub.f32 %v1027, %v1266
    %v1281 = vsub.f32 %v1101, %v1269
    %v1282 = vsub.f32 %v1175, %v1272
    %v1283 = vsub.f32 %v1249, %v1275
    %v1284 = vmul.f32 %v1276, 1.442695
    %v1285 = vpow.pop %v1284
    %v1286 = vmul.f32 %v1277, 1.442695
    %v1287 = vpow.pop %v1286
    %v1288 = vmul.f32 %v1278, 1.442695
    %v1289 = vpow.pop %v1288
    %v1290 = vmul.f32 %v1279, 1.442695
    %v1291 = vpow.pop %v1290
    %v1292 = vmul.f32 %v1280, 1.442695
    %v1293 = vpow.pop %v1292
    %v1294 = vmul.f32 %v1281, 1.442695
    %v1295 = vpow.pop %v1294
    %v1296 = vmul.f32 %v1282, 1.442695
    %v1297 = vpow.pop %v1296
    %v1298 = vmul.f32 %v1283, 1.442695
    %v1299 = vpow.pop %v1298
    %v1300 = vsel %vm659, %v1285, 0.0
    %1301 = vadd.xlane.f32.xlu0 %v1300
    %v1302 = vpop.xlane.xlu0 %1301
    %v1303 = vsel %vm659, %v1287, 0.0
    %1304 = vadd.xlane.f32.xlu0 %v1303
    %v1305 = vpop.xlane.xlu0 %1304
    %v1306 = vsel %vm659, %v1289, 0.0
    %1307 = vadd.xlane.f32.xlu0 %v1306
    %v1308 = vpop.xlane.xlu0 %1307
    %v1309 = vsel %vm659, %v1291, 0.0
    %1310 = vadd.xlane.f32.xlu0 %v1309
    %v1311 = vpop.xlane.xlu0 %1310
    %v1312 = vsel %vm659, %v1293, 0.0
    %1313 = vadd.xlane.f32.xlu0 %v1312
    %v1314 = vpop.xlane.xlu0 %1313
    %v1315 = vsel %vm659, %v1295, 0.0
    %1316 = vadd.xlane.f32.xlu0 %v1315
    %v1317 = vpop.xlane.xlu0 %1316
    %v1318 = vsel %vm659, %v1297, 0.0
    %1319 = vadd.xlane.f32.xlu0 %v1318
    %v1320 = vpop.xlane.xlu0 %1319
    %v1321 = vsel %vm659, %v1299, 0.0
    %1322 = vadd.xlane.f32.xlu0 %v1321
    %v1323 = vpop.xlane.xlu0 %1322
    %v1324 = vrcp.pop %v1302
    %v1325 = vrcp.pop %v1305
    %v1326 = vrcp.pop %v1308
    %v1327 = vrcp.pop %v1311
    %v1328 = vrcp.pop %v1314
    %v1329 = vrcp.pop %v1317
    %v1330 = vrcp.pop %v1320
    %v1331 = vrcp.pop %v1323
    %v1332 = vmul.f32 %v1285, %v1324
    %v1333 = vmul.f32 %v1287, %v1325
    %v1334 = vmul.f32 %v1289, %v1326
    %v1335 = vmul.f32 %v1291, %v1327
    %v1336 = vmul.f32 %v1293, %v1328
    %v1337 = vmul.f32 %v1295, %v1329
    %v1338 = vmul.f32 %v1297, %v1330
    %v1339 = vmul.f32 %v1299, %v1331
    %v1341 = vsel %vm659, %v1332, 0
    %1343 = vmatprep.subr.mxu0 0.0
    %1344 = vmatpush1.msra.mxu0 %v441
    %1345 = vmatprep.subr.mxu0 0.0
    %1346 = vmatpush1.msra.mxu0 0.0
    %1347 = vmatprep.subr.mxu0 0.0
    %1348 = vmatpush1.msra.mxu0 0.0
    %1349 = vmatprep.subr.mxu0 0.0
    %1350 = vmatpush1.msra.mxu0 0.0
    %1351 = vmatprep.subr.mxu0 0.0
    %1352 = vmatpush1.msra.mxu0 0.0
    %1353 = vmatprep.subr.mxu0 0.0
    %1354 = vmatpush1.msra.mxu0 0.0
    %1355 = vmatprep.subr.mxu0 0.0
    %1356 = vmatpush1.msra.mxu0 0.0
    %1357 = vmatprep.subr.mxu0 0.0
    %1358 = vmatpush1.msra.mxu0 0.0
    %1359 = vmatprep.subr.mxu0 0.0
    %1360 = vmatpush1.msra.mxu0 0.0
    %1361 = vmatprep.subr.mxu0 0.0
    %1362 = vmatpush1.msra.mxu0 0.0
    %1363 = vmatprep.subr.mxu0 0.0
    %1364 = vmatpush1.msra.mxu0 0.0
    %1365 = vmatprep.subr.mxu0 0.0
    %1366 = vmatpush1.msra.mxu0 0.0
    %1367 = vmatprep.subr.mxu0 0.0
    %1368 = vmatpush1.msra.mxu0 0.0
    %1369 = vmatprep.subr.mxu0 0.0
    %1370 = vmatpush1.msra.mxu0 0.0
    %1371 = vmatprep.subr.mxu0 0.0
    %1372 = vmatpush1.msra.mxu0 0.0
    %1373 = vmatprep.subr.mxu0 0.0
    %1374 = vmatpush1.msra.mxu0 0.0
    %1375 = vmatprep.subr.mxu0 0.0
    %1376 = vmatpush1.msra.mxu0 0.0
    %1377 = vmatprep.subr.mxu0 0.0
    %1378 = vmatpush1.msra.mxu0 0.0
    %1379 = vmatprep.subr.mxu0 0.0
    %1380 = vmatpush1.msra.mxu0 0.0
    %1381 = vmatprep.subr.mxu0 0.0
    %1382 = vmatpush1.msra.mxu0 0.0
    %1383 = vmatprep.subr.mxu0 0.0
    %1384 = vmatpush1.msra.mxu0 0.0
    %1385 = vmatprep.subr.mxu0 0.0
    %1386 = vmatpush1.msra.mxu0 0.0
    %1387 = vmatprep.subr.mxu0 0.0
    %1388 = vmatpush1.msra.mxu0 0.0
    %1389 = vmatprep.subr.mxu0 0.0
    %1390 = vmatpush1.msra.mxu0 0.0
    %1391 = vmatprep.subr.mxu0 0.0
    %1392 = vmatpush1.msra.mxu0 0.0
    %1393 = vmatprep.subr.mxu0 0.0
    %1394 = vmatpush1.msra.mxu0 0.0
    %1395 = vmatprep.subr.mxu0 0.0
    %1396 = vmatpush1.msra.mxu0 0.0
    %1397 = vmatprep.subr.mxu0 0.0
    %1398 = vmatpush1.msra.mxu0 0.0
    %1399 = vmatprep.subr.mxu0 0.0
    %1400 = vmatpush1.msra.mxu0 0.0
    %1401 = vmatprep.subr.mxu0 0.0
    %1402 = vmatpush1.msra.mxu0 0.0
    %1403 = vmatprep.subr.mxu0 0.0
    %1404 = vmatpush1.msra.mxu0 0.0
    %1405 = vmatprep.subr.mxu0 0.0
    %1406 = vmatpush1.msra.mxu0 0.0
    %1407 = vmatprep.mubr.f32.mxu0 0.0
    %1408 = vmatmul.mubr.f32.gmra.mrb[0].mxu0 %v1341
    %v1409 = vpop.f32.mrb[0].mxu0
    %v1410 = vadd.f32 0.0, %v1409
    %v1411 = vpop.f32.mrb[0].mxu0
    %1412 = vdwg.mxu0
    %v1414 = vsel %vm659, %v1333, 0
    %1416 = vmatprep.subr.mxu0 0.0
    %1417 = vmatpush1.msra.mxu0 %v446
    %1418 = vmatprep.subr.mxu0 0.0
    %1419 = vmatpush1.msra.mxu0 0.0
    %1420 = vmatprep.subr.mxu0 0.0
    %1421 = vmatpush1.msra.mxu0 0.0
    %1422 = vmatprep.subr.mxu0 0.0
    %1423 = vmatpush1.msra.mxu0 0.0
    %1424 = vmatprep.subr.mxu0 0.0
    %1425 = vmatpush1.msra.mxu0 0.0
    %1426 = vmatprep.subr.mxu0 0.0
    %1427 = vmatpush1.msra.mxu0 0.0
    %1428 = vmatprep.subr.mxu0 0.0
    %1429 = vmatpush1.msra.mxu0 0.0
    %1430 = vmatprep.subr.mxu0 0.0
    %1431 = vmatpush1.msra.mxu0 0.0
    %1432 = vmatprep.subr.mxu0 0.0
    %1433 = vmatpush1.msra.mxu0 0.0
    %1434 = vmatprep.subr.mxu0 0.0
    %1435 = vmatpush1.msra.mxu0 0.0
    %1436 = vmatprep.subr.mxu0 0.0
    %1437 = vmatpush1.msra.mxu0 0.0
    %1438 = vmatprep.subr.mxu0 0.0
    %1439 = vmatpush1.msra.mxu0 0.0
    %1440 = vmatprep.subr.mxu0 0.0
    %1441 = vmatpush1.msra.mxu0 0.0
    %1442 = vmatprep.subr.mxu0 0.0
    %1443 = vmatpush1.msra.mxu0 0.0
    %1444 = vmatprep.subr.mxu0 0.0
    %1445 = vmatpush1.msra.mxu0 0.0
    %1446 = vmatprep.subr.mxu0 0.0
    %1447 = vmatpush1.msra.mxu0 0.0
    %1448 = vmatprep.subr.mxu0 0.0
    %1449 = vmatpush1.msra.mxu0 0.0
    %1450 = vmatprep.subr.mxu0 0.0
    %1451 = vmatpush1.msra.mxu0 0.0
    %1452 = vmatprep.subr.mxu0 0.0
    %1453 = vmatpush1.msra.mxu0 0.0
    %1454 = vmatprep.subr.mxu0 0.0
    %1455 = vmatpush1.msra.mxu0 0.0
    %1456 = vmatprep.subr.mxu0 0.0
    %1457 = vmatpush1.msra.mxu0 0.0
    %1458 = vmatprep.subr.mxu0 0.0
    %1459 = vmatpush1.msra.mxu0 0.0
    %1460 = vmatprep.subr.mxu0 0.0
    %1461 = vmatpush1.msra.mxu0 0.0
    %1462 = vmatprep.subr.mxu0 0.0
    %1463 = vmatpush1.msra.mxu0 0.0
    %1464 = vmatprep.subr.mxu0 0.0
    %1465 = vmatpush1.msra.mxu0 0.0
    %1466 = vmatprep.subr.mxu0 0.0
    %1467 = vmatpush1.msra.mxu0 0.0
    %1468 = vmatprep.subr.mxu0 0.0
    %1469 = vmatpush1.msra.mxu0 0.0
    %1470 = vmatprep.subr.mxu0 0.0
    %1471 = vmatpush1.msra.mxu0 0.0
    %1472 = vmatprep.subr.mxu0 0.0
    %1473 = vmatpush1.msra.mxu0 0.0
    %1474 = vmatprep.subr.mxu0 0.0
    %1475 = vmatpush1.msra.mxu0 0.0
    %1476 = vmatprep.subr.mxu0 0.0
    %1477 = vmatpush1.msra.mxu0 0.0
    %1478 = vmatprep.subr.mxu0 0.0
    %1479 = vmatpush1.msra.mxu0 0.0
    %1480 = vmatprep.mubr.f32.mxu0 0.0
    %1481 = vmatmul.mubr.f32.gmra.mrb[0].mxu0 %v1414
    %v1482 = vpop.f32.mrb[0].mxu0
    %v1483 = vadd.f32 0.0, %v1482
    %v1484 = vpop.f32.mrb[0].mxu0
    %1485 = vdwg.mxu0
    %v1487 = vsel %vm659, %v1334, 0
    %1489 = vmatprep.subr.mxu0 0.0
    %1490 = vmatpush1.msra.mxu0 %v642
    %1491 = vmatprep.subr.mxu0 0.0
    %1492 = vmatpush1.msra.mxu0 0.0
    %1493 = vmatprep.subr.mxu0 0.0
    %1494 = vmatpush1.msra.mxu0 0.0
    %1495 = vmatprep.subr.mxu0 0.0
    %1496 = vmatpush1.msra.mxu0 0.0
    %1497 = vmatprep.subr.mxu0 0.0
    %1498 = vmatpush1.msra.mxu0 0.0
    %1499 = vmatprep.subr.mxu0 0.0
    %1500 = vmatpush1.msra.mxu0 0.0
    %1501 = vmatprep.subr.mxu0 0.0
    %1502 = vmatpush1.msra.mxu0 0.0
    %1503 = vmatprep.subr.mxu0 0.0
    %1504 = vmatpush1.msra.mxu0 0.0
    %1505 = vmatprep.subr.mxu0 0.0
    %1506 = vmatpush1.msra.mxu0 0.0
    %1507 = vmatprep.subr.mxu0 0.0
    %1508 = vmatpush1.msra.mxu0 0.0
    %1509 = vmatprep.subr.mxu0 0.0
    %1510 = vmatpush1.msra.mxu0 0.0
    %1511 = vmatprep.subr.mxu0 0.0
    %1512 = vmatpush1.msra.mxu0 0.0
    %1513 = vmatprep.subr.mxu0 0.0
    %1514 = vmatpush1.msra.mxu0 0.0
    %1515 = vmatprep.subr.mxu0 0.0
    %1516 = vmatpush1.msra.mxu0 0.0
    %1517 = vmatprep.subr.mxu0 0.0
    %1518 = vmatpush1.msra.mxu0 0.0
    %1519 = vmatprep.subr.mxu0 0.0
    %1520 = vmatpush1.msra.mxu0 0.0
    %1521 = vmatprep.subr.mxu0 0.0
    %1522 = vmatpush1.msra.mxu0 0.0
    %1523 = vmatprep.subr.mxu0 0.0
    %1524 = vmatpush1.msra.mxu0 0.0
    %1525 = vmatprep.subr.mxu0 0.0
    %1526 = vmatpush1.msra.mxu0 0.0
    %1527 = vmatprep.subr.mxu0 0.0
    %1528 = vmatpush1.msra.mxu0 0.0
    %1529 = vmatprep.subr.mxu0 0.0
    %1530 = vmatpush1.msra.mxu0 0.0
    %1531 = vmatprep.subr.mxu0 0.0
    %1532 = vmatpush1.msra.mxu0 0.0
    %1533 = vmatprep.subr.mxu0 0.0
    %1534 = vmatpush1.msra.mxu0 0.0
    %1535 = vmatprep.subr.mxu0 0.0
    %1536 = vmatpush1.msra.mxu0 0.0
    %1537 = vmatprep.subr.mxu0 0.0
    %1538 = vmatpush1.msra.mxu0 0.0
    %1539 = vmatprep.subr.mxu0 0.0
    %1540 = vmatpush1.msra.mxu0 0.0
    %1541 = vmatprep.subr.mxu0 0.0
    %1542 = vmatpush1.msra.mxu0 0.0
    %1543 = vmatprep.subr.mxu0 0.0
    %1544 = vmatpush1.msra.mxu0 0.0
    %1545 = vmatprep.subr.mxu0 0.0
    %1546 = vmatpush1.msra.mxu0 0.0
    %1547 = vmatprep.subr.mxu0 0.0
    %1548 = vmatpush1.msra.mxu0 0.0
    %1549 = vmatprep.subr.mxu0 0.0
    %1550 = vmatpush1.msra.mxu0 0.0
    %1551 = vmatprep.subr.mxu0 0.0
    %1552 = vmatpush1.msra.mxu0 0.0
    %1553 = vmatprep.mubr.f32.mxu0 0.0
    %1554 = vmatmul.mubr.f32.gmra.mrb[0].mxu0 %v1487
    %v1555 = vpop.f32.mrb[0].mxu0
    %v1556 = vadd.f32 0.0, %v1555
    %v1557 = vpop.f32.mrb[0].mxu0
    %1558 = vdwg.mxu0
    %v1560 = vsel %vm659, %v1335, 0
    %1562 = vmatprep.subr.mxu0 0.0
    %1563 = vmatpush1.msra.mxu0 %v644
    %1564 = vmatprep.subr.mxu0 0.0
    %1565 = vmatpush1.msra.mxu0 0.0
    %1566 = vmatprep.subr.mxu0 0.0
    %1567 = vmatpush1.msra.mxu0 0.0
    %1568 = vmatprep.subr.mxu0 0.0
    %1569 = vmatpush1.msra.mxu0 0.0
    %1570 = vmatprep.subr.mxu0 0.0
    %1571 = vmatpush1.msra.mxu0 0.0
    %1572 = vmatprep.subr.mxu0 0.0
    %1573 = vmatpush1.msra.mxu0 0.0
    %1574 = vmatprep.subr.mxu0 0.0
    %1575 = vmatpush1.msra.mxu0 0.0
    %1576 = vmatprep.subr.mxu0 0.0
    %1577 = vmatpush1.msra.mxu0 0.0
    %1578 = vmatprep.subr.mxu0 0.0
    %1579 = vmatpush1.msra.mxu0 0.0
    %1580 = vmatprep.subr.mxu0 0.0
    %1581 = vmatpush1.msra.mxu0 0.0
    %1582 = vmatprep.subr.mxu0 0.0
    %1583 = vmatpush1.msra.mxu0 0.0
    %1584 = vmatprep.subr.mxu0 0.0
    %1585 = vmatpush1.msra.mxu0 0.0
    %1586 = vmatprep.subr.mxu0 0.0
    %1587 = vmatpush1.msra.mxu0 0.0
    %1588 = vmatprep.subr.mxu0 0.0
    %1589 = vmatpush1.msra.mxu0 0.0
    %1590 = vmatprep.subr.mxu0 0.0
    %1591 = vmatpush1.msra.mxu0 0.0
    %1592 = vmatprep.subr.mxu0 0.0
    %1593 = vmatpush1.msra.mxu0 0.0
    %1594 = vmatprep.subr.mxu0 0.0
    %1595 = vmatpush1.msra.mxu0 0.0
    %1596 = vmatprep.subr.mxu0 0.0
    %1597 = vmatpush1.msra.mxu0 0.0
    %1598 = vmatprep.subr.mxu0 0.0
    %1599 = vmatpush1.msra.mxu0 0.0
    %1600 = vmatprep.subr.mxu0 0.0
    %1601 = vmatpush1.msra.mxu0 0.0
    %1602 = vmatprep.subr.mxu0 0.0
    %1603 = vmatpush1.msra.mxu0 0.0
    %1604 = vmatprep.subr.mxu0 0.0
    %1605 = vmatpush1.msra.mxu0 0.0
    %1606 = vmatprep.subr.mxu0 0.0
    %1607 = vmatpush1.msra.mxu0 0.0
    %1608 = vmatprep.subr.mxu0 0.0
    %1609 = vmatpush1.msra.mxu0 0.0
    %1610 = vmatprep.subr.mxu0 0.0
    %1611 = vmatpush1.msra.mxu0 0.0
    %1612 = vmatprep.subr.mxu0 0.0
    %1613 = vmatpush1.msra.mxu0 0.0
    %1614 = vmatprep.subr.mxu0 0.0
    %1615 = vmatpush1.msra.mxu0 0.0
    %1616 = vmatprep.subr.mxu0 0.0
    %1617 = vmatpush1.msra.mxu0 0.0
    %1618 = vmatprep.subr.mxu0 0.0
    %1619 = vmatpush1.msra.mxu0 0.0
    %1620 = vmatprep.subr.mxu0 0.0
    %1621 = vmatpush1.msra.mxu0 0.0
    %1622 = vmatprep.subr.mxu0 0.0
    %1623 = vmatpush1.msra.mxu0 0.0
    %1624 = vmatprep.subr.mxu0 0.0
    %1625 = vmatpush1.msra.mxu0 0.0
    %1626 = vmatprep.mubr.f32.mxu0 0.0
    %1627 = vmatmul.mubr.f32.gmra.mrb[0].mxu0 %v1560
    %v1628 = vpop.f32.mrb[0].mxu0
    %v1629 = vadd.f32 0.0, %v1628
    %v1630 = vpop.f32.mrb[0].mxu0
    %1631 = vdwg.mxu0
    %v1633 = vsel %vm659, %v1336, 0
    %1635 = vmatprep.subr.mxu0 0.0
    %1636 = vmatpush1.msra.mxu0 %v648
    %1637 = vmatprep.subr.mxu0 0.0
    %1638 = vmatpush1.msra.mxu0 0.0
    %1639 = vmatprep.subr.mxu0 0.0
    %1640 = vmatpush1.msra.mxu0 0.0
    %1641 = vmatprep.subr.mxu0 0.0
    %1642 = vmatpush1.msra.mxu0 0.0
    %1643 = vmatprep.subr.mxu0 0.0
    %1644 = vmatpush1.msra.mxu0 0.0
    %1645 = vmatprep.subr.mxu0 0.0
    %1646 = vmatpush1.msra.mxu0 0.0
    %1647 = vmatprep.subr.mxu0 0.0
    %1648 = vmatpush1.msra.mxu0 0.0
    %1649 = vmatprep.subr.mxu0 0.0
    %1650 = vmatpush1.msra.mxu0 0.0
    %1651 = vmatprep.subr.mxu0 0.0
    %1652 = vmatpush1.msra.mxu0 0.0
    %1653 = vmatprep.subr.mxu0 0.0
    %1654 = vmatpush1.msra.mxu0 0.0
    %1655 = vmatprep.subr.mxu0 0.0
    %1656 = vmatpush1.msra.mxu0 0.0
    %1657 = vmatprep.subr.mxu0 0.0
    %1658 = vmatpush1.msra.mxu0 0.0
    %1659 = vmatprep.subr.mxu0 0.0
    %1660 = vmatpush1.msra.mxu0 0.0
    %1661 = vmatprep.subr.mxu0 0.0
    %1662 = vmatpush1.msra.mxu0 0.0
    %1663 = vmatprep.subr.mxu0 0.0
    %1664 = vmatpush1.msra.mxu0 0.0
    %1665 = vmatprep.subr.mxu0 0.0
    %1666 = vmatpush1.msra.mxu0 0.0
    %1667 = vmatprep.subr.mxu0 0.0
    %1668 = vmatpush1.msra.mxu0 0.0
    %1669 = vmatprep.subr.mxu0 0.0
    %1670 = vmatpush1.msra.mxu0 0.0
    %1671 = vmatprep.subr.mxu0 0.0
    %1672 = vmatpush1.msra.mxu0 0.0
    %1673 = vmatprep.subr.mxu0 0.0
    %1674 = vmatpush1.msra.mxu0 0.0
    %1675 = vmatprep.subr.mxu0 0.0
    %1676 = vmatpush1.msra.mxu0 0.0
    %1677 = vmatprep.subr.mxu0 0.0
    %1678 = vmatpush1.msra.mxu0 0.0
    %1679 = vmatprep.subr.mxu0 0.0
    %1680 = vmatpush1.msra.mxu0 0.0
    %1681 = vmatprep.subr.mxu0 0.0
    %1682 = vmatpush1.msra.mxu0 0.0
    %1683 = vmatprep.subr.mxu0 0.0
    %1684 = vmatpush1.msra.mxu0 0.0
    %1685 = vmatprep.subr.mxu0 0.0
    %1686 = vmatpush1.msra.mxu0 0.0
    %1687 = vmatprep.subr.mxu0 0.0
    %1688 = vmatpush1.msra.mxu0 0.0
    %1689 = vmatprep.subr.mxu0 0.0
    %1690 = vmatpush1.msra.mxu0 0.0
    %1691 = vmatprep.subr.mxu0 0.0
    %1692 = vmatpush1.msra.mxu0 0.0
    %1693 = vmatprep.subr.mxu0 0.0
    %1694 = vmatpush1.msra.mxu0 0.0
    %1695 = vmatprep.subr.mxu0 0.0
    %1696 = vmatpush1.msra.mxu0 0.0
    %1697 = vmatprep.subr.mxu0 0.0
    %1698 = vmatpush1.msra.mxu0 0.0
    %1699 = vmatprep.mubr.f32.mxu0 0.0
    %1700 = vmatmul.mubr.f32.gmra.mrb[0].mxu0 %v1633
    %v1701 = vpop.f32.mrb[0].mxu0
    %v1702 = vadd.f32 0.0, %v1701
    %v1703 = vpop.f32.mrb[0].mxu0
    %1704 = vdwg.mxu0
    %v1706 = vsel %vm659, %v1337, 0
    %1708 = vmatprep.subr.mxu0 0.0
    %1709 = vmatpush1.msra.mxu0 %v650
    %1710 = vmatprep.subr.mxu0 0.0
    %1711 = vmatpush1.msra.mxu0 0.0
    %1712 = vmatprep.subr.mxu0 0.0
    %1713 = vmatpush1.msra.mxu0 0.0
    %1714 = vmatprep.subr.mxu0 0.0
    %1715 = vmatpush1.msra.mxu0 0.0
    %1716 = vmatprep.subr.mxu0 0.0
    %1717 = vmatpush1.msra.mxu0 0.0
    %1718 = vmatprep.subr.mxu0 0.0
    %1719 = vmatpush1.msra.mxu0 0.0
    %1720 = vmatprep.subr.mxu0 0.0
    %1721 = vmatpush1.msra.mxu0 0.0
    %1722 = vmatprep.subr.mxu0 0.0
    %1723 = vmatpush1.msra.mxu0 0.0
    %1724 = vmatprep.subr.mxu0 0.0
    %1725 = vmatpush1.msra.mxu0 0.0
    %1726 = vmatprep.subr.mxu0 0.0
    %1727 = vmatpush1.msra.mxu0 0.0
    %1728 = vmatprep.subr.mxu0 0.0
    %1729 = vmatpush1.msra.mxu0 0.0
    %1730 = vmatprep.subr.mxu0 0.0
    %1731 = vmatpush1.msra.mxu0 0.0
    %1732 = vmatprep.subr.mxu0 0.0
    %1733 = vmatpush1.msra.mxu0 0.0
    %1734 = vmatprep.subr.mxu0 0.0
    %1735 = vmatpush1.msra.mxu0 0.0
    %1736 = vmatprep.subr.mxu0 0.0
    %1737 = vmatpush1.msra.mxu0 0.0
    %1738 = vmatprep.subr.mxu0 0.0
    %1739 = vmatpush1.msra.mxu0 0.0
    %1740 = vmatprep.subr.mxu0 0.0
    %1741 = vmatpush1.msra.mxu0 0.0
    %1742 = vmatprep.subr.mxu0 0.0
    %1743 = vmatpush1.msra.mxu0 0.0
    %1744 = vmatprep.subr.mxu0 0.0
    %1745 = vmatpush1.msra.mxu0 0.0
    %1746 = vmatprep.subr.mxu0 0.0
    %1747 = vmatpush1.msra.mxu0 0.0
    %1748 = vmatprep.subr.mxu0 0.0
    %1749 = vmatpush1.msra.mxu0 0.0
    %1750 = vmatprep.subr.mxu0 0.0
    %1751 = vmatpush1.msra.mxu0 0.0
    %1752 = vmatprep.subr.mxu0 0.0
    %1753 = vmatpush1.msra.mxu0 0.0
    %1754 = vmatprep.subr.mxu0 0.0
    %1755 = vmatpush1.msra.mxu0 0.0
    %1756 = vmatprep.subr.mxu0 0.0
    %1757 = vmatpush1.msra.mxu0 0.0
    %1758 = vmatprep.subr.mxu0 0.0
    %1759 = vmatpush1.msra.mxu0 0.0
    %1760 = vmatprep.subr.mxu0 0.0
    %1761 = vmatpush1.msra.mxu0 0.0
    %1762 = vmatprep.subr.mxu0 0.0
    %1763 = vmatpush1.msra.mxu0 0.0
    %1764 = vmatprep.subr.mxu0 0.0
    %1765 = vmatpush1.msra.mxu0 0.0
    %1766 = vmatprep.subr.mxu0 0.0
    %1767 = vmatpush1.msra.mxu0 0.0
    %1768 = vmatprep.subr.mxu0 0.0
    %1769 = vmatpush1.msra.mxu0 0.0
    %1770 = vmatprep.subr.mxu0 0.0
    %1771 = vmatpush1.msra.mxu0 0.0
    %1772 = vmatprep.mubr.f32.mxu0 0.0
    %1773 = vmatmul.mubr.f32.gmra.mrb[0].mxu0 %v1706
    %v1774 = vpop.f32.mrb[0].mxu0
    %v1775 = vadd.f32 0.0, %v1774
    %v1776 = vpop.f32.mrb[0].mxu0
    %1777 = vdwg.mxu0
    %v1779 = vsel %vm659, %v1338, 0
    %1781 = vmatprep.subr.mxu0 0.0
    %1782 = vmatpush1.msra.mxu0 %v654
    %1783 = vmatprep.subr.mxu0 0.0
    %1784 = vmatpush1.msra.mxu0 0.0
    %1785 = vmatprep.subr.mxu0 0.0
    %1786 = vmatpush1.msra.mxu0 0.0
    %1787 = vmatprep.subr.mxu0 0.0
    %1788 = vmatpush1.msra.mxu0 0.0
    %1789 = vmatprep.subr.mxu0 0.0
    %1790 = vmatpush1.msra.mxu0 0.0
    %1791 = vmatprep.subr.mxu0 0.0
    %1792 = vmatpush1.msra.mxu0 0.0
    %1793 = vmatprep.subr.mxu0 0.0
    %1794 = vmatpush1.msra.mxu0 0.0
    %1795 = vmatprep.subr.mxu0 0.0
    %1796 = vmatpush1.msra.mxu0 0.0
    %1797 = vmatprep.subr.mxu0 0.0
    %1798 = vmatpush1.msra.mxu0 0.0
    %1799 = vmatprep.subr.mxu0 0.0
    %1800 = vmatpush1.msra.mxu0 0.0
    %1801 = vmatprep.subr.mxu0 0.0
    %1802 = vmatpush1.msra.mxu0 0.0
    %1803 = vmatprep.subr.mxu0 0.0
    %1804 = vmatpush1.msra.mxu0 0.0
    %1805 = vmatprep.subr.mxu0 0.0
    %1806 = vmatpush1.msra.mxu0 0.0
    %1807 = vmatprep.subr.mxu0 0.0
    %1808 = vmatpush1.msra.mxu0 0.0
    %1809 = vmatprep.subr.mxu0 0.0
    %1810 = vmatpush1.msra.mxu0 0.0
    %1811 = vmatprep.subr.mxu0 0.0
    %1812 = vmatpush1.msra.mxu0 0.0
    %1813 = vmatprep.subr.mxu0 0.0
    %1814 = vmatpush1.msra.mxu0 0.0
    %1815 = vmatprep.subr.mxu0 0.0
    %1816 = vmatpush1.msra.mxu0 0.0
    %1817 = vmatprep.subr.mxu0 0.0
    %1818 = vmatpush1.msra.mxu0 0.0
    %1819 = vmatprep.subr.mxu0 0.0
    %1820 = vmatpush1.msra.mxu0 0.0
    %1821 = vmatprep.subr.mxu0 0.0
    %1822 = vmatpush1.msra.mxu0 0.0
    %1823 = vmatprep.subr.mxu0 0.0
    %1824 = vmatpush1.msra.mxu0 0.0
    %1825 = vmatprep.subr.mxu0 0.0
    %1826 = vmatpush1.msra.mxu0 0.0
    %1827 = vmatprep.subr.mxu0 0.0
    %1828 = vmatpush1.msra.mxu0 0.0
    %1829 = vmatprep.subr.mxu0 0.0
    %1830 = vmatpush1.msra.mxu0 0.0
    %1831 = vmatprep.subr.mxu0 0.0
    %1832 = vmatpush1.msra.mxu0 0.0
    %1833 = vmatprep.subr.mxu0 0.0
    %1834 = vmatpush1.msra.mxu0 0.0
    %1835 = vmatprep.subr.mxu0 0.0
    %1836 = vmatpush1.msra.mxu0 0.0
    %1837 = vmatprep.subr.mxu0 0.0
    %1838 = vmatpush1.msra.mxu0 0.0
    %1839 = vmatprep.subr.mxu0 0.0
    %1840 = vmatpush1.msra.mxu0 0.0
    %1841 = vmatprep.subr.mxu0 0.0
    %1842 = vmatpush1.msra.mxu0 0.0
    %1843 = vmatprep.subr.mxu0 0.0
    %1844 = vmatpush1.msra.mxu0 0.0
    %1845 = vmatprep.mubr.f32.mxu0 0.0
    %1846 = vmatmul.mubr.f32.gmra.mrb[0].mxu0 %v1779
    %v1847 = vpop.f32.mrb[0].mxu0
    %v1848 = vadd.f32 0.0, %v1847
    %v1849 = vpop.f32.mrb[0].mxu0
    %1850 = vdwg.mxu0
    %v1852 = vsel %vm659, %v1339, 0
    %1854 = vmatprep.subr.mxu0 0.0
    %1855 = vmatpush1.msra.mxu0 %v656
    %1856 = vmatprep.subr.mxu0 0.0
    %1857 = vmatpush1.msra.mxu0 0.0
    %1858 = vmatprep.subr.mxu0 0.0
    %1859 = vmatpush1.msra.mxu0 0.0
    %1860 = vmatprep.subr.mxu0 0.0
    %1861 = vmatpush1.msra.mxu0 0.0
    %1862 = vmatprep.subr.mxu0 0.0
    %1863 = vmatpush1.msra.mxu0 0.0
    %1864 = vmatprep.subr.mxu0 0.0
    %1865 = vmatpush1.msra.mxu0 0.0
    %1866 = vmatprep.subr.mxu0 0.0
    %1867 = vmatpush1.msra.mxu0 0.0
    %1868 = vmatprep.subr.mxu0 0.0
    %1869 = vmatpush1.msra.mxu0 0.0
    %1870 = vmatprep.subr.mxu0 0.0
    %1871 = vmatpush1.msra.mxu0 0.0
    %1872 = vmatprep.subr.mxu0 0.0
    %1873 = vmatpush1.msra.mxu0 0.0
    %1874 = vmatprep.subr.mxu0 0.0
    %1875 = vmatpush1.msra.mxu0 0.0
    %1876 = vmatprep.subr.mxu0 0.0
    %1877 = vmatpush1.msra.mxu0 0.0
    %1878 = vmatprep.subr.mxu0 0.0
    %1879 = vmatpush1.msra.mxu0 0.0
    %1880 = vmatprep.subr.mxu0 0.0
    %1881 = vmatpush1.msra.mxu0 0.0
    %1882 = vmatprep.subr.mxu0 0.0
    %1883 = vmatpush1.msra.mxu0 0.0
    %1884 = vmatprep.subr.mxu0 0.0
    %1885 = vmatpush1.msra.mxu0 0.0
    %1886 = vmatprep.subr.mxu0 0.0
    %1887 = vmatpush1.msra.mxu0 0.0
    %1888 = vmatprep.subr.mxu0 0.0
    %1889 = vmatpush1.msra.mxu0 0.0
    %1890 = vmatprep.subr.mxu0 0.0
    %1891 = vmatpush1.msra.mxu0 0.0
    %1892 = vmatprep.subr.mxu0 0.0
    %1893 = vmatpush1.msra.mxu0 0.0
    %1894 = vmatprep.subr.mxu0 0.0
    %1895 = vmatpush1.msra.mxu0 0.0
    %1896 = vmatprep.subr.mxu0 0.0
    %1897 = vmatpush1.msra.mxu0 0.0
    %1898 = vmatprep.subr.mxu0 0.0
    %1899 = vmatpush1.msra.mxu0 0.0
    %1900 = vmatprep.subr.mxu0 0.0
    %1901 = vmatpush1.msra.mxu0 0.0
    %1902 = vmatprep.subr.mxu0 0.0
    %1903 = vmatpush1.msra.mxu0 0.0
    %1904 = vmatprep.subr.mxu0 0.0
    %1905 = vmatpush1.msra.mxu0 0.0
    %1906 = vmatprep.subr.mxu0 0.0
    %1907 = vmatpush1.msra.mxu0 0.0
    %1908 = vmatprep.subr.mxu0 0.0
    %1909 = vmatpush1.msra.mxu0 0.0
    %1910 = vmatprep.subr.mxu0 0.0
    %1911 = vmatpush1.msra.mxu0 0.0
    %1912 = vmatprep.subr.mxu0 0.0
    %1913 = vmatpush1.msra.mxu0 0.0
    %1914 = vmatprep.subr.mxu0 0.0
    %1915 = vmatpush1.msra.mxu0 0.0
    %1916 = vmatprep.subr.mxu0 0.0
    %1917 = vmatpush1.msra.mxu0 0.0
    %1918 = vmatprep.mubr.f32.mxu0 0.0
    %1919 = vmatmul.mubr.f32.gmra.mrb[0].mxu0 %v1852
    %v1920 = vpop.f32.mrb[0].mxu0
    %v1921 = vadd.f32 0.0, %v1920
    %v1922 = vpop.f32.mrb[0].mxu0
    %1923 = vdwg.mxu0
    %v1924 = vld [vmem:[%s9] sm:$0xff]
    %s1925 = scalar_lea.vmem %s9, 8
    %v1926 = vld [vmem:[%s1925] sm:$0xff]
    %v1928 = vsel %vm659, %v1556, 0
    %v1931 = vsel %vm659, %v1629, 0
    %1933 = vmatprep.subr.mxu0 0.0
    %1934 = vmatpush1.msra.mxu0 %v1926
    %1935 = vmatprep.subr.mxu0 0.0
    %1936 = vmatpush1.msra.mxu0 0.0
    %1937 = vmatprep.subr.mxu0 0.0
    %1938 = vmatpush1.msra.mxu0 0.0
    %1939 = vmatprep.subr.mxu0 0.0
    %1940 = vmatpush1.msra.mxu0 0.0
    %1941 = vmatprep.subr.mxu0 0.0
    %1942 = vmatpush1.msra.mxu0 0.0
    %1943 = vmatprep.subr.mxu0 0.0
    %1944 = vmatpush1.msra.mxu0 0.0
    %1945 = vmatprep.subr.mxu0 0.0
    %1946 = vmatpush1.msra.mxu0 0.0
    %1947 = vmatprep.subr.mxu0 0.0
    %1948 = vmatpush1.msra.mxu0 0.0
    %1949 = vmatprep.subr.mxu0 0.0
    %1950 = vmatpush1.msra.mxu0 0.0
    %1951 = vmatprep.subr.mxu0 0.0
    %1952 = vmatpush1.msra.mxu0 0.0
    %1953 = vmatprep.subr.mxu0 0.0
    %1954 = vmatpush1.msra.mxu0 0.0
    %1955 = vmatprep.subr.mxu0 0.0
    %1956 = vmatpush1.msra.mxu0 0.0
    %1957 = vmatprep.subr.mxu0 0.0
    %1958 = vmatpush1.msra.mxu0 0.0
    %1959 = vmatprep.subr.mxu0 0.0
    %1960 = vmatpush1.msra.mxu0 0.0
    %1961 = vmatprep.subr.mxu0 0.0
    %1962 = vmatpush1.msra.mxu0 0.0
    %1963 = vmatprep.subr.mxu0 0.0
    %1964 = vmatpush1.msra.mxu0 0.0
    %1965 = vmatprep.subr.mxu0 0.0
    %1966 = vmatpush1.msra.mxu0 0.0
    %1967 = vmatprep.subr.mxu0 0.0
    %1968 = vmatpush1.msra.mxu0 0.0
    %1969 = vmatprep.subr.mxu0 0.0
    %1970 = vmatpush1.msra.mxu0 0.0
    %1971 = vmatprep.subr.mxu0 0.0
    %1972 = vmatpush1.msra.mxu0 0.0
    %1973 = vmatprep.subr.mxu0 0.0
    %1974 = vmatpush1.msra.mxu0 0.0
    %1975 = vmatprep.subr.mxu0 0.0
    %1976 = vmatpush1.msra.mxu0 0.0
    %1977 = vmatprep.subr.mxu0 0.0
    %1978 = vmatpush1.msra.mxu0 0.0
    %1979 = vmatprep.subr.mxu0 0.0
    %1980 = vmatpush1.msra.mxu0 0.0
    %1981 = vmatprep.subr.mxu0 0.0
    %1982 = vmatpush1.msra.mxu0 0.0
    %1983 = vmatprep.subr.mxu0 0.0
    %1984 = vmatpush1.msra.mxu0 0.0
    %1985 = vmatprep.subr.mxu0 0.0
    %1986 = vmatpush1.msra.mxu0 0.0
    %1987 = vmatprep.subr.mxu0 0.0
    %1988 = vmatpush1.msra.mxu0 0.0
    %1989 = vmatprep.subr.mxu0 0.0
    %1990 = vmatpush1.msra.mxu0 0.0
    %1991 = vmatprep.subr.mxu0 0.0
    %1992 = vmatpush1.msra.mxu0 0.0
    %1993 = vmatprep.subr.mxu0 0.0
    %1994 = vmatpush1.msra.mxu0 0.0
    %1995 = vmatprep.subr.mxu0 0.0
    %1996 = vmatpush1.msra.mxu0 0.0
    %1997 = vmatprep.mubr.f32.mxu0 0.0
    %1998 = vmatmul.mubr.f32.gmra.mrb[0].mxu0 %v1928
    %v1999 = vpop.f32.mrb[0].mxu0
    %v2000 = vadd.f32 0.0, %v1999
    %v2001 = vpop.f32.mrb[0].mxu0
    %2002 = vmatprep.mubr.f32.mxu0 0.0
    %2003 = vmatmul.mubr.f32.gmra.mrb[0].mxu0 %v1931
    %v2004 = vpop.f32.mrb[0].mxu0
    %v2005 = vadd.f32 0.0, %v2004
    %v2006 = vpop.f32.mrb[0].mxu0
    %2007 = vdwg.mxu0
    %v2009 = vsel %vm659, %v1410, 0
    %v2012 = vsel %vm659, %v1483, 0
    %2014 = vmatprep.subr.mxu0 0.0
    %2015 = vmatpush1.msra.mxu0 %v1924
    %2016 = vmatprep.subr.mxu0 0.0
    %2017 = vmatpush1.msra.mxu0 0.0
    %2018 = vmatprep.subr.mxu0 0.0
    %2019 = vmatpush1.msra.mxu0 0.0
    %2020 = vmatprep.subr.mxu0 0.0
    %2021 = vmatpush1.msra.mxu0 0.0
    %2022 = vmatprep.subr.mxu0 0.0
    %2023 = vmatpush1.msra.mxu0 0.0
    %2024 = vmatprep.subr.mxu0 0.0
    %2025 = vmatpush1.msra.mxu0 0.0
    %2026 = vmatprep.subr.mxu0 0.0
    %2027 = vmatpush1.msra.mxu0 0.0
    %2028 = vmatprep.subr.mxu0 0.0
    %2029 = vmatpush1.msra.mxu0 0.0
    %2030 = vmatprep.subr.mxu0 0.0
    %2031 = vmatpush1.msra.mxu0 0.0
    %2032 = vmatprep.subr.mxu0 0.0
    %2033 = vmatpush1.msra.mxu0 0.0
    %2034 = vmatprep.subr.mxu0 0.0
    %2035 = vmatpush1.msra.mxu0 0.0
    %2036 = vmatprep.subr.mxu0 0.0
    %2037 = vmatpush1.msra.mxu0 0.0
    %2038 = vmatprep.subr.mxu0 0.0
    %2039 = vmatpush1.msra.mxu0 0.0
    %2040 = vmatprep.subr.mxu0 0.0
    %2041 = vmatpush1.msra.mxu0 0.0
    %2042 = vmatprep.subr.mxu0 0.0
    %2043 = vmatpush1.msra.mxu0 0.0
    %2044 = vmatprep.subr.mxu0 0.0
    %2045 = vmatpush1.msra.mxu0 0.0
    %2046 = vmatprep.subr.mxu0 0.0
    %2047 = vmatpush1.msra.mxu0 0.0
    %2048 = vmatprep.subr.mxu0 0.0
    %2049 = vmatpush1.msra.mxu0 0.0
    %2050 = vmatprep.subr.mxu0 0.0
    %2051 = vmatpush1.msra.mxu0 0.0
    %2052 = vmatprep.subr.mxu0 0.0
    %2053 = vmatpush1.msra.mxu0 0.0
    %2054 = vmatprep.subr.mxu0 0.0
    %2055 = vmatpush1.msra.mxu0 0.0
    %2056 = vmatprep.subr.mxu0 0.0
    %2057 = vmatpush1.msra.mxu0 0.0
    %2058 = vmatprep.subr.mxu0 0.0
    %2059 = vmatpush1.msra.mxu0 0.0
    %2060 = vmatprep.subr.mxu0 0.0
    %2061 = vmatpush1.msra.mxu0 0.0
    %2062 = vmatprep.subr.mxu0 0.0
    %2063 = vmatpush1.msra.mxu0 0.0
    %2064 = vmatprep.subr.mxu0 0.0
    %2065 = vmatpush1.msra.mxu0 0.0
    %2066 = vmatprep.subr.mxu0 0.0
    %2067 = vmatpush1.msra.mxu0 0.0
    %2068 = vmatprep.subr.mxu0 0.0
    %2069 = vmatpush1.msra.mxu0 0.0
    %2070 = vmatprep.subr.mxu0 0.0
    %2071 = vmatpush1.msra.mxu0 0.0
    %2072 = vmatprep.subr.mxu0 0.0
    %2073 = vmatpush1.msra.mxu0 0.0
    %2074 = vmatprep.subr.mxu0 0.0
    %2075 = vmatpush1.msra.mxu0 0.0
    %2076 = vmatprep.subr.mxu0 0.0
    %2077 = vmatpush1.msra.mxu0 0.0
    %2078 = vmatprep.mubr.f32.mxu0 0.0
    %2079 = vmatmul.mubr.f32.gmra.mrb[0].mxu0 %v2009
    %v2080 = vpop.f32.mrb[0].mxu0
    %v2081 = vadd.f32 %v2000, %v2080
    %v2082 = vpop.f32.mrb[0].mxu0
    %2083 = vmatprep.mubr.f32.mxu0 0.0
    %2084 = vmatmul.mubr.f32.gmra.mrb[0].mxu0 %v2012
    %v2085 = vpop.f32.mrb[0].mxu0
    %v2086 = vadd.f32 %v2005, %v2085
    %v2087 = vpop.f32.mrb[0].mxu0
    %2088 = vdwg.mxu0
    %s2089 = scalar_lea.vmem %s9, 16
    %v2090 = vld [vmem:[%s2089] sm:$0xff]
    %v2092 = vsel %vm659, %v1702, 0
    %v2095 = vsel %vm659, %v1775, 0
    %2097 = vmatprep.subr.mxu0 0.0
    %2098 = vmatpush1.msra.mxu0 %v2090
    %2099 = vmatprep.subr.mxu0 0.0
    %2100 = vmatpush1.msra.mxu0 0.0
    %2101 = vmatprep.subr.mxu0 0.0
    %2102 = vmatpush1.msra.mxu0 0.0
    %2103 = vmatprep.subr.mxu0 0.0
    %2104 = vmatpush1.msra.mxu0 0.0
    %2105 = vmatprep.subr.mxu0 0.0
    %2106 = vmatpush1.msra.mxu0 0.0
    %2107 = vmatprep.subr.mxu0 0.0
    %2108 = vmatpush1.msra.mxu0 0.0
    %2109 = vmatprep.subr.mxu0 0.0
    %2110 = vmatpush1.msra.mxu0 0.0
    %2111 = vmatprep.subr.mxu0 0.0
    %2112 = vmatpush1.msra.mxu0 0.0
    %2113 = vmatprep.subr.mxu0 0.0
    %2114 = vmatpush1.msra.mxu0 0.0
    %2115 = vmatprep.subr.mxu0 0.0
    %2116 = vmatpush1.msra.mxu0 0.0
    %2117 = vmatprep.subr.mxu0 0.0
    %2118 = vmatpush1.msra.mxu0 0.0
    %2119 = vmatprep.subr.mxu0 0.0
    %2120 = vmatpush1.msra.mxu0 0.0
    %2121 = vmatprep.subr.mxu0 0.0
    %2122 = vmatpush1.msra.mxu0 0.0
    %2123 = vmatprep.subr.mxu0 0.0
    %2124 = vmatpush1.msra.mxu0 0.0
    %2125 = vmatprep.subr.mxu0 0.0
    %2126 = vmatpush1.msra.mxu0 0.0
    %2127 = vmatprep.subr.mxu0 0.0
    %2128 = vmatpush1.msra.mxu0 0.0
    %2129 = vmatprep.subr.mxu0 0.0
    %2130 = vmatpush1.msra.mxu0 0.0
    %2131 = vmatprep.subr.mxu0 0.0
    %2132 = vmatpush1.msra.mxu0 0.0
    %2133 = vmatprep.subr.mxu0 0.0
    %2134 = vmatpush1.msra.mxu0 0.0
    %2135 = vmatprep.subr.mxu0 0.0
    %2136 = vmatpush1.msra.mxu0 0.0
    %2137 = vmatprep.subr.mxu0 0.0
    %2138 = vmatpush1.msra.mxu0 0.0
    %2139 = vmatprep.subr.mxu0 0.0
    %2140 = vmatpush1.msra.mxu0 0.0
    %2141 = vmatprep.subr.mxu0 0.0
    %2142 = vmatpush1.msra.mxu0 0.0
    %2143 = vmatprep.subr.mxu0 0.0
    %2144 = vmatpush1.msra.mxu0 0.0
    %2145 = vmatprep.subr.mxu0 0.0
    %2146 = vmatpush1.msra.mxu0 0.0
    %2147 = vmatprep.subr.mxu0 0.0
    %2148 = vmatpush1.msra.mxu0 0.0
    %2149 = vmatprep.subr.mxu0 0.0
    %2150 = vmatpush1.msra.mxu0 0.0
    %2151 = vmatprep.subr.mxu0 0.0
    %2152 = vmatpush1.msra.mxu0 0.0
    %2153 = vmatprep.subr.mxu0 0.0
    %2154 = vmatpush1.msra.mxu0 0.0
    %2155 = vmatprep.subr.mxu0 0.0
    %2156 = vmatpush1.msra.mxu0 0.0
    %2157 = vmatprep.subr.mxu0 0.0
    %2158 = vmatpush1.msra.mxu0 0.0
    %2159 = vmatprep.subr.mxu0 0.0
    %2160 = vmatpush1.msra.mxu0 0.0
    %2161 = vmatprep.mubr.f32.mxu0 0.0
    %2162 = vmatmul.mubr.f32.gmra.mrb[0].mxu0 %v2092
    %v2163 = vpop.f32.mrb[0].mxu0
    %v2164 = vadd.f32 0.0, %v2163
    %v2165 = vpop.f32.mrb[0].mxu0
    %2166 = vmatprep.mubr.f32.mxu0 0.0
    %2167 = vmatmul.mubr.f32.gmra.mrb[0].mxu0 %v2095
    %v2168 = vpop.f32.mrb[0].mxu0
    %v2169 = vadd.f32 0.0, %v2168
    %v2170 = vpop.f32.mrb[0].mxu0
    %2171 = vdwg.mxu0
    %v2172 = vadd.f32 %v2081, %v2164
    %v2173 = vadd.f32 %v2086, %v2169
    %s2174 = scalar_lea.vmem %s9, 24
    %v2175 = vld [vmem:[%s2174] sm:$0xff]
    %v2177 = vsel %vm659, %v1848, 0
    %v2180 = vsel %vm659, %v1921, 0
    %2182 = vmatprep.subr.mxu0 0.0
    %2183 = vmatpush1.msra.mxu0 %v2175
    %2184 = vmatprep.subr.mxu0 0.0
    %2185 = vmatpush1.msra.mxu0 0.0
    %2186 = vmatprep.subr.mxu0 0.0
    %2187 = vmatpush1.msra.mxu0 0.0
    %2188 = vmatprep.subr.mxu0 0.0
    %2189 = vmatpush1.msra.mxu0 0.0
    %2190 = vmatprep.subr.mxu0 0.0
    %2191 = vmatpush1.msra.mxu0 0.0
    %2192 = vmatprep.subr.mxu0 0.0
    %2193 = vmatpush1.msra.mxu0 0.0
    %2194 = vmatprep.subr.mxu0 0.0
    %2195 = vmatpush1.msra.mxu0 0.0
    %2196 = vmatprep.subr.mxu0 0.0
    %2197 = vmatpush1.msra.mxu0 0.0
    %2198 = vmatprep.subr.mxu0 0.0
    %2199 = vmatpush1.msra.mxu0 0.0
    %2200 = vmatprep.subr.mxu0 0.0
    %2201 = vmatpush1.msra.mxu0 0.0
    %2202 = vmatprep.subr.mxu0 0.0
    %2203 = vmatpush1.msra.mxu0 0.0
    %2204 = vmatprep.subr.mxu0 0.0
    %2205 = vmatpush1.msra.mxu0 0.0
    %2206 = vmatprep.subr.mxu0 0.0
    %2207 = vmatpush1.msra.mxu0 0.0
    %2208 = vmatprep.subr.mxu0 0.0
    %2209 = vmatpush1.msra.mxu0 0.0
    %2210 = vmatprep.subr.mxu0 0.0
    %2211 = vmatpush1.msra.mxu0 0.0
    %2212 = vmatprep.subr.mxu0 0.0
    %2213 = vmatpush1.msra.mxu0 0.0
    %2214 = vmatprep.subr.mxu0 0.0
    %2215 = vmatpush1.msra.mxu0 0.0
    %2216 = vmatprep.subr.mxu0 0.0
    %2217 = vmatpush1.msra.mxu0 0.0
    %2218 = vmatprep.subr.mxu0 0.0
    %2219 = vmatpush1.msra.mxu0 0.0
    %2220 = vmatprep.subr.mxu0 0.0
    %2221 = vmatpush1.msra.mxu0 0.0
    %2222 = vmatprep.subr.mxu0 0.0
    %2223 = vmatpush1.msra.mxu0 0.0
    %2224 = vmatprep.subr.mxu0 0.0
    %2225 = vmatpush1.msra.mxu0 0.0
    %2226 = vmatprep.subr.mxu0 0.0
    %2227 = vmatpush1.msra.mxu0 0.0
    %2228 = vmatprep.subr.mxu0 0.0
    %2229 = vmatpush1.msra.mxu0 0.0
    %2230 = vmatprep.subr.mxu0 0.0
    %2231 = vmatpush1.msra.mxu0 0.0
    %2232 = vmatprep.subr.mxu0 0.0
    %2233 = vmatpush1.msra.mxu0 0.0
    %2234 = vmatprep.subr.mxu0 0.0
    %2235 = vmatpush1.msra.mxu0 0.0
    %2236 = vmatprep.subr.mxu0 0.0
    %2237 = vmatpush1.msra.mxu0 0.0
    %2238 = vmatprep.subr.mxu0 0.0
    %2239 = vmatpush1.msra.mxu0 0.0
    %2240 = vmatprep.subr.mxu0 0.0
    %2241 = vmatpush1.msra.mxu0 0.0
    %2242 = vmatprep.subr.mxu0 0.0
    %2243 = vmatpush1.msra.mxu0 0.0
    %2244 = vmatprep.subr.mxu0 0.0
    %2245 = vmatpush1.msra.mxu0 0.0
    %2246 = vmatprep.mubr.f32.mxu0 0.0
    %2247 = vmatmul.mubr.f32.gmra.mrb[0].mxu0 %v2177
    %v2248 = vpop.f32.mrb[0].mxu0
    %v2249 = vadd.f32 0.0, %v2248
    %v2250 = vpop.f32.mrb[0].mxu0
    %2251 = vmatprep.mubr.f32.mxu0 0.0
    %2252 = vmatmul.mubr.f32.gmra.mrb[0].mxu0 %v2180
    %v2253 = vpop.f32.mrb[0].mxu0
    %v2254 = vadd.f32 0.0, %v2253
    %v2255 = vpop.f32.mrb[0].mxu0
    %2256 = vdwg.mxu0
    %v2257 = vadd.f32 %v2172, %v2249
    %v2258 = vadd.f32 %v2173, %v2254
    %v2259 = vadd.f32 %v170, %v2257
    %v2260 = vadd.f32 %v175, %v2258
    %v2261 = vld [vmem:[%s7] sm:$0x1]
    %v2262 = vmul.f32 %v2259, %v2259
    %v2263 = vmul.f32 %v2260, %v2260
    %2264 = vadd.xlane.f32.xlu0 %v2262
    %v2265 = vpop.xlane.xlu0 %2264
    %2266 = vadd.xlane.f32.xlu0 %v2263
    %v2267 = vpop.xlane.xlu0 %2266
    %v2268 = vmul.f32 %v2265, 0.03125
    %v2269 = vmul.f32 %v2267, 0.03125
    %v2270 = vadd.f32 %v2268, 1e-06
    %v2271 = vadd.f32 %v2269, 1e-06
    %v2272 = vrsqrt.pop %v2270
    %v2273 = vrsqrt.pop %v2271
    %v2274 = vmul.f32 %v2259, %v2272
    %v2275 = vmul.f32 %v2260, %v2273
    %v2277 = vlaneseq
    %v2278 = vshrl.u32 %v2277, 7
    %v2279 = vsub.s32 0, %v2278
    %v2280 = vrot.slane %v2261, %v2279
    %v2282 = vmul.f32 %v2274, %v2280
    %v2283 = vmul.f32 %v2275, %v2280
    %v2284 = vld [vmem:[%s10] sm:$0xff]
    %v2285 = vld [vmem:[%s10 + $0x8] sm:$0xff]
    %v2286 = vld [vmem:[%s10 + $0x10] sm:$0xff]
    %v2287 = vld [vmem:[%s10 + $0x18] sm:$0xff]
    %v2288 = vld [vmem:[%s10 + $0x20] sm:$0xff]
    %v2289 = vld [vmem:[%s10 + $0x28] sm:$0xff]
    %v2290 = vld [vmem:[%s10 + $0x30] sm:$0xff]
    %v2291 = vld [vmem:[%s10 + $0x38] sm:$0xff]
    %v2292 = vld [vmem:[%s10 + $0x40] sm:$0xff]
    %v2293 = vld [vmem:[%s10 + $0x48] sm:$0xff]
    %v2294 = vld [vmem:[%s10 + $0x50] sm:$0xff]
    %v2295 = vld [vmem:[%s10 + $0x58] sm:$0xff]
    %v2296 = vld [vmem:[%s10 + $0x60] sm:$0xff]
    %v2297 = vld [vmem:[%s10 + $0x68] sm:$0xff]
    %v2298 = vld [vmem:[%s10 + $0x70] sm:$0xff]
    %v2299 = vld [vmem:[%s10 + $0x78] sm:$0xff]
    %v2300 = vld [vmem:[%s10 + $0x80] sm:$0xff]
    %v2301 = vld [vmem:[%s10 + $0x88] sm:$0xff]
    %v2302 = vld [vmem:[%s10 + $0x90] sm:$0xff]
    %v2303 = vld [vmem:[%s10 + $0x98] sm:$0xff]
    %v2304 = vld [vmem:[%s10 + $0xa0] sm:$0xff]
    %v2305 = vld [vmem:[%s10 + $0xa8] sm:$0xff]
    %v2306 = vld [vmem:[%s10 + $0xb0] sm:$0xff]
    %v2307 = vld [vmem:[%s10 + $0xb8] sm:$0xff]
    %v2308 = vld [vmem:[%s10 + $0xc0] sm:$0xff]
    %v2309 = vld [vmem:[%s10 + $0xc8] sm:$0xff]
    %v2310 = vld [vmem:[%s10 + $0xd0] sm:$0xff]
    %v2311 = vld [vmem:[%s10 + $0xd8] sm:$0xff]
    %v2312 = vld [vmem:[%s10 + $0xe0] sm:$0xff]
    %v2313 = vld [vmem:[%s10 + $0xe8] sm:$0xff]
    %v2314 = vld [vmem:[%s10 + $0xf0] sm:$0xff]
    %v2315 = vld [vmem:[%s10 + $0xf8] sm:$0xff]
    %2316 = vmatprep.subr.mxu0 %v2285
    %2317 = vmatpush1.msra.mxu0 %v2284
    %2318 = vmatprep.subr.mxu0 %v2287
    %2319 = vmatpush1.msra.mxu0 %v2286
    %2320 = vmatprep.subr.mxu0 %v2289
    %2321 = vmatpush1.msra.mxu0 %v2288
    %2322 = vmatprep.subr.mxu0 %v2291
    %2323 = vmatpush1.msra.mxu0 %v2290
    %2324 = vmatprep.subr.mxu0 %v2293
    %2325 = vmatpush1.msra.mxu0 %v2292
    %2326 = vmatprep.subr.mxu0 %v2295
    %2327 = vmatpush1.msra.mxu0 %v2294
    %2328 = vmatprep.subr.mxu0 %v2297
    %2329 = vmatpush1.msra.mxu0 %v2296
    %2330 = vmatprep.subr.mxu0 %v2299
    %2331 = vmatpush1.msra.mxu0 %v2298
    %2332 = vmatprep.subr.mxu0 %v2301
    %2333 = vmatpush1.msra.mxu0 %v2300
    %2334 = vmatprep.subr.mxu0 %v2303
    %2335 = vmatpush1.msra.mxu0 %v2302
    %2336 = vmatprep.subr.mxu0 %v2305
    %2337 = vmatpush1.msra.mxu0 %v2304
    %2338 = vmatprep.subr.mxu0 %v2307
    %2339 = vmatpush1.msra.mxu0 %v2306
    %2340 = vmatprep.subr.mxu0 %v2309
    %2341 = vmatpush1.msra.mxu0 %v2308
    %2342 = vmatprep.subr.mxu0 %v2311
    %2343 = vmatpush1.msra.mxu0 %v2310
    %2344 = vmatprep.subr.mxu0 %v2313
    %2345 = vmatpush1.msra.mxu0 %v2312
    %2346 = vmatprep.subr.mxu0 %v2315
    %2347 = vmatpush1.msra.mxu0 %v2314
    %2348 = vmatprep.subr.mxu0 0.0
    %2349 = vmatpush1.msra.mxu0 0.0
    %2350 = vmatprep.subr.mxu0 0.0
    %2351 = vmatpush1.msra.mxu0 0.0
    %2352 = vmatprep.subr.mxu0 0.0
    %2353 = vmatpush1.msra.mxu0 0.0
    %2354 = vmatprep.subr.mxu0 0.0
    %2355 = vmatpush1.msra.mxu0 0.0
    %2356 = vmatprep.subr.mxu0 0.0
    %2357 = vmatpush1.msra.mxu0 0.0
    %2358 = vmatprep.subr.mxu0 0.0
    %2359 = vmatpush1.msra.mxu0 0.0
    %2360 = vmatprep.subr.mxu0 0.0
    %2361 = vmatpush1.msra.mxu0 0.0
    %2362 = vmatprep.subr.mxu0 0.0
    %2363 = vmatpush1.msra.mxu0 0.0
    %2364 = vmatprep.subr.mxu0 0.0
    %2365 = vmatpush1.msra.mxu0 0.0
    %2366 = vmatprep.subr.mxu0 0.0
    %2367 = vmatpush1.msra.mxu0 0.0
    %2368 = vmatprep.subr.mxu0 0.0
    %2369 = vmatpush1.msra.mxu0 0.0
    %2370 = vmatprep.subr.mxu0 0.0
    %2371 = vmatpush1.msra.mxu0 0.0
    %2372 = vmatprep.subr.mxu0 0.0
    %2373 = vmatpush1.msra.mxu0 0.0
    %2374 = vmatprep.subr.mxu0 0.0
    %2375 = vmatpush1.msra.mxu0 0.0
    %2376 = vmatprep.subr.mxu0 0.0
    %2377 = vmatpush1.msra.mxu0 0.0
    %2378 = vmatprep.subr.mxu0 0.0
    %2379 = vmatpush1.msra.mxu0 0.0
    %2380 = vmatprep.mubr.f32.mxu0 0.0
    %2381 = vmatmul.mubr.f32.gmra.mrb[0].mxu0 %v2282
    %v2382 = vpop.f32.mrb[0].mxu0
    %v2383 = vadd.f32 0.0, %v2382
    %v2384 = vpop.f32.mrb[0].mxu0
    %v2385 = vadd.f32 0.0, %v2384
    %2386 = vmatprep.mubr.f32.mxu0 0.0
    %2387 = vmatmul.mubr.f32.gmra.mrb[0].mxu0 %v2283
    %v2388 = vpop.f32.mrb[0].mxu0
    %v2389 = vadd.f32 0.0, %v2388
    %v2390 = vpop.f32.mrb[0].mxu0
    %v2391 = vadd.f32 0.0, %v2390
    %2392 = vdwg.mxu0
    %v2393 = vxor.u32 %v2383, 2147483648
    %v2394 = vxor.u32 %v2389, 2147483648
    %v2395 = vmul.f32 %v2393, 1.442695
    %v2396 = vpow.pop %v2395
    %v2397 = vmul.f32 %v2394, 1.442695
    %v2398 = vpow.pop %v2397
    %v2399 = vadd.f32 %v2396, 1.0
    %v2400 = vadd.f32 %v2398, 1.0
    %v2401 = vrcp.pop %v2399
    %v2402 = vmul.f32 1.0, %v2401
    %v2403 = vrcp.pop %v2400
    %v2404 = vmul.f32 1.0, %v2403
    %v2405 = vmul.f32 %v2383, %v2402
    %v2406 = vmul.f32 %v2389, %v2404
    %v2407 = vmul.f32 %v2405, %v2385
    %v2408 = vmul.f32 %v2406, %v2391
    %v2409 = vld [vmem:[%s11] sm:$0xff]
    %v2410 = vld [vmem:[%s11 + $0x8] sm:$0xff]
    %v2411 = vld [vmem:[%s11 + $0x10] sm:$0xff]
    %v2412 = vld [vmem:[%s11 + $0x18] sm:$0xff]
    %v2413 = vld [vmem:[%s11 + $0x20] sm:$0xff]
    %v2414 = vld [vmem:[%s11 + $0x28] sm:$0xff]
    %v2415 = vld [vmem:[%s11 + $0x30] sm:$0xff]
    %v2416 = vld [vmem:[%s11 + $0x38] sm:$0xff]
    %v2417 = vld [vmem:[%s11 + $0x40] sm:$0xff]
    %v2418 = vld [vmem:[%s11 + $0x48] sm:$0xff]
    %v2419 = vld [vmem:[%s11 + $0x50] sm:$0xff]
    %v2420 = vld [vmem:[%s11 + $0x58] sm:$0xff]
    %v2421 = vld [vmem:[%s11 + $0x60] sm:$0xff]
    %v2422 = vld [vmem:[%s11 + $0x68] sm:$0xff]
    %v2423 = vld [vmem:[%s11 + $0x70] sm:$0xff]
    %v2424 = vld [vmem:[%s11 + $0x78] sm:$0xff]
    %2425 = vmatprep.subr.mxu0 0.0
    %2426 = vmatpush1.msra.mxu0 %v2409
    %2427 = vmatprep.subr.mxu0 0.0
    %2428 = vmatpush1.msra.mxu0 %v2410
    %2429 = vmatprep.subr.mxu0 0.0
    %2430 = vmatpush1.msra.mxu0 %v2411
    %2431 = vmatprep.subr.mxu0 0.0
    %2432 = vmatpush1.msra.mxu0 %v2412
    %2433 = vmatprep.subr.mxu0 0.0
    %2434 = vmatpush1.msra.mxu0 %v2413
    %2435 = vmatprep.subr.mxu0 0.0
    %2436 = vmatpush1.msra.mxu0 %v2414
    %2437 = vmatprep.subr.mxu0 0.0
    %2438 = vmatpush1.msra.mxu0 %v2415
    %2439 = vmatprep.subr.mxu0 0.0
    %2440 = vmatpush1.msra.mxu0 %v2416
    %2441 = vmatprep.subr.mxu0 0.0
    %2442 = vmatpush1.msra.mxu0 %v2417
    %2443 = vmatprep.subr.mxu0 0.0
    %2444 = vmatpush1.msra.mxu0 %v2418
    %2445 = vmatprep.subr.mxu0 0.0
    %2446 = vmatpush1.msra.mxu0 %v2419
    %2447 = vmatprep.subr.mxu0 0.0
    %2448 = vmatpush1.msra.mxu0 %v2420
    %2449 = vmatprep.subr.mxu0 0.0
    %2450 = vmatpush1.msra.mxu0 %v2421
    %2451 = vmatprep.subr.mxu0 0.0
    %2452 = vmatpush1.msra.mxu0 %v2422
    %2453 = vmatprep.subr.mxu0 0.0
    %2454 = vmatpush1.msra.mxu0 %v2423
    %2455 = vmatprep.subr.mxu0 0.0
    %2456 = vmatpush1.msra.mxu0 %v2424
    %2457 = vmatprep.subr.mxu0 0.0
    %2458 = vmatpush1.msra.mxu0 0.0
    %2459 = vmatprep.subr.mxu0 0.0
    %2460 = vmatpush1.msra.mxu0 0.0
    %2461 = vmatprep.subr.mxu0 0.0
    %2462 = vmatpush1.msra.mxu0 0.0
    %2463 = vmatprep.subr.mxu0 0.0
    %2464 = vmatpush1.msra.mxu0 0.0
    %2465 = vmatprep.subr.mxu0 0.0
    %2466 = vmatpush1.msra.mxu0 0.0
    %2467 = vmatprep.subr.mxu0 0.0
    %2468 = vmatpush1.msra.mxu0 0.0
    %2469 = vmatprep.subr.mxu0 0.0
    %2470 = vmatpush1.msra.mxu0 0.0
    %2471 = vmatprep.subr.mxu0 0.0
    %2472 = vmatpush1.msra.mxu0 0.0
    %2473 = vmatprep.subr.mxu0 0.0
    %2474 = vmatpush1.msra.mxu0 0.0
    %2475 = vmatprep.subr.mxu0 0.0
    %2476 = vmatpush1.msra.mxu0 0.0
    %2477 = vmatprep.subr.mxu0 0.0
    %2478 = vmatpush1.msra.mxu0 0.0
    %2479 = vmatprep.subr.mxu0 0.0
    %2480 = vmatpush1.msra.mxu0 0.0
    %2481 = vmatprep.subr.mxu0 0.0
    %2482 = vmatpush1.msra.mxu0 0.0
    %2483 = vmatprep.subr.mxu0 0.0
    %2484 = vmatpush1.msra.mxu0 0.0
    %2485 = vmatprep.subr.mxu0 0.0
    %2486 = vmatpush1.msra.mxu0 0.0
    %2487 = vmatprep.subr.mxu0 0.0
    %2488 = vmatpush1.msra.mxu0 0.0
    %2489 = vmatprep.mubr.f32.mxu0 0.0
    %2490 = vmatmul.mubr.f32.gmra.mrb[0].mxu0 %v2407
    %v2491 = vpop.f32.mrb[0].mxu0
    %v2492 = vadd.f32 0.0, %v2491
    %v2493 = vpop.f32.mrb[0].mxu0
    %2494 = vmatprep.mubr.f32.mxu0 0.0
    %2495 = vmatmul.mubr.f32.gmra.mrb[0].mxu0 %v2408
    %v2496 = vpop.f32.mrb[0].mxu0
    %v2497 = vadd.f32 0.0, %v2496
    %v2498 = vpop.f32.mrb[0].mxu0
    %2499 = vdwg.mxu0
    %v2500 = vadd.f32 %v2259, %v2492
    %v2501 = vadd.f32 %v2260, %v2497
    %s2502 = scalar_lea.vmem %s6, 1
    %v2503 = vld [vmem:[%s2502] sm:$0x1]
    %v2504 = vmul.f32 %v2500, %v2500
    %v2505 = vmul.f32 %v2501, %v2501
    %2506 = vadd.xlane.f32.xlu0 %v2504
    %v2507 = vpop.xlane.xlu0 %2506
    %2508 = vadd.xlane.f32.xlu0 %v2505
    %v2509 = vpop.xlane.xlu0 %2508
    %v2510 = vmul.f32 %v2507, 0.03125
    %v2511 = vmul.f32 %v2509, 0.03125
    %v2512 = vadd.f32 %v2510, 1e-06
    %v2513 = vadd.f32 %v2511, 1e-06
    %v2514 = vrsqrt.pop %v2512
    %v2515 = vrsqrt.pop %v2513
    %v2516 = vmul.f32 %v2500, %v2514
    %v2517 = vmul.f32 %v2501, %v2515
    %v2519 = vlaneseq
    %v2520 = vshrl.u32 %v2519, 7
    %v2521 = vsub.s32 0, %v2520
    %v2522 = vrot.slane %v2503, %v2521
    %v2524 = vmul.f32 %v2516, %v2522
    %v2525 = vmul.f32 %v2517, %v2522
    %s2526 = scalar_lea.vmem %s8, 384
    %v2527 = vld [vmem:[%s2526] sm:$0xff]
    %v2528 = vld [vmem:[%s2526 + $0x8] sm:$0xff]
    %v2529 = vld [vmem:[%s2526 + $0x10] sm:$0xff]
    %v2530 = vld [vmem:[%s2526 + $0x18] sm:$0xff]
    %v2531 = vld [vmem:[%s2526 + $0x20] sm:$0xff]
    %v2532 = vld [vmem:[%s2526 + $0x28] sm:$0xff]
    %v2533 = vld [vmem:[%s2526 + $0x30] sm:$0xff]
    %v2534 = vld [vmem:[%s2526 + $0x38] sm:$0xff]
    %v2535 = vld [vmem:[%s2526 + $0x40] sm:$0xff]
    %v2536 = vld [vmem:[%s2526 + $0x48] sm:$0xff]
    %v2537 = vld [vmem:[%s2526 + $0x50] sm:$0xff]
    %v2538 = vld [vmem:[%s2526 + $0x58] sm:$0xff]
    %v2539 = vld [vmem:[%s2526 + $0x60] sm:$0xff]
    %v2540 = vld [vmem:[%s2526 + $0x68] sm:$0xff]
    %v2541 = vld [vmem:[%s2526 + $0x70] sm:$0xff]
    %v2542 = vld [vmem:[%s2526 + $0x78] sm:$0xff]
    %v2543 = vld [vmem:[%s2526 + $0x80] sm:$0xff]
    %v2544 = vld [vmem:[%s2526 + $0x88] sm:$0xff]
    %v2545 = vld [vmem:[%s2526 + $0x90] sm:$0xff]
    %v2546 = vld [vmem:[%s2526 + $0x98] sm:$0xff]
    %v2547 = vld [vmem:[%s2526 + $0xa0] sm:$0xff]
    %v2548 = vld [vmem:[%s2526 + $0xa8] sm:$0xff]
    %v2549 = vld [vmem:[%s2526 + $0xb0] sm:$0xff]
    %v2550 = vld [vmem:[%s2526 + $0xb8] sm:$0xff]
    %v2551 = vld [vmem:[%s2526 + $0xc0] sm:$0xff]
    %v2552 = vld [vmem:[%s2526 + $0xc8] sm:$0xff]
    %v2553 = vld [vmem:[%s2526 + $0xd0] sm:$0xff]
    %v2554 = vld [vmem:[%s2526 + $0xd8] sm:$0xff]
    %v2555 = vld [vmem:[%s2526 + $0xe0] sm:$0xff]
    %v2556 = vld [vmem:[%s2526 + $0xe8] sm:$0xff]
    %v2557 = vld [vmem:[%s2526 + $0xf0] sm:$0xff]
    %v2558 = vld [vmem:[%s2526 + $0xf8] sm:$0xff]
    %v2559 = vld [vmem:[%s2526 + $0x100] sm:$0xff]
    %v2560 = vld [vmem:[%s2526 + $0x108] sm:$0xff]
    %v2561 = vld [vmem:[%s2526 + $0x110] sm:$0xff]
    %v2562 = vld [vmem:[%s2526 + $0x118] sm:$0xff]
    %v2563 = vld [vmem:[%s2526 + $0x120] sm:$0xff]
    %v2564 = vld [vmem:[%s2526 + $0x128] sm:$0xff]
    %v2565 = vld [vmem:[%s2526 + $0x130] sm:$0xff]
    %v2566 = vld [vmem:[%s2526 + $0x138] sm:$0xff]
    %v2567 = vld [vmem:[%s2526 + $0x140] sm:$0xff]
    %v2568 = vld [vmem:[%s2526 + $0x148] sm:$0xff]
    %v2569 = vld [vmem:[%s2526 + $0x150] sm:$0xff]
    %v2570 = vld [vmem:[%s2526 + $0x158] sm:$0xff]
    %v2571 = vld [vmem:[%s2526 + $0x160] sm:$0xff]
    %v2572 = vld [vmem:[%s2526 + $0x168] sm:$0xff]
    %v2573 = vld [vmem:[%s2526 + $0x170] sm:$0xff]
    %v2574 = vld [vmem:[%s2526 + $0x178] sm:$0xff]
    %2575 = vmatprep.subr.mxu0 %v2528
    %2576 = vmatpush1.msra.mxu0 %v2527
    %2577 = vmatprep.subr.mxu0 %v2531
    %2578 = vmatpush1.msra.mxu0 %v2530
    %2579 = vmatprep.subr.mxu0 %v2534
    %2580 = vmatpush1.msra.mxu0 %v2533
    %2581 = vmatprep.subr.mxu0 %v2537
    %2582 = vmatpush1.msra.mxu0 %v2536
    %2583 = vmatprep.subr.mxu0 %v2540
    %2584 = vmatpush1.msra.mxu0 %v2539
    %2585 = vmatprep.subr.mxu0 %v2543
    %2586 = vmatpush1.msra.mxu0 %v2542
    %2587 = vmatprep.subr.mxu0 %v2546
    %2588 = vmatpush1.msra.mxu0 %v2545
    %2589 = vmatprep.subr.mxu0 %v2549
    %2590 = vmatpush1.msra.mxu0 %v2548
    %2591 = vmatprep.subr.mxu0 %v2552
    %2592 = vmatpush1.msra.mxu0 %v2551
    %2593 = vmatprep.subr.mxu0 %v2555
    %2594 = vmatpush1.msra.mxu0 %v2554
    %2595 = vmatprep.subr.mxu0 %v2558
    %2596 = vmatpush1.msra.mxu0 %v2557
    %2597 = vmatprep.subr.mxu0 %v2561
    %2598 = vmatpush1.msra.mxu0 %v2560
    %2599 = vmatprep.subr.mxu0 %v2564
    %2600 = vmatpush1.msra.mxu0 %v2563
    %2601 = vmatprep.subr.mxu0 %v2567
    %2602 = vmatpush1.msra.mxu0 %v2566
    %2603 = vmatprep.subr.mxu0 %v2570
    %2604 = vmatpush1.msra.mxu0 %v2569
    %2605 = vmatprep.subr.mxu0 %v2573
    %2606 = vmatpush1.msra.mxu0 %v2572
    %2607 = vmatprep.subr.mxu0 0.0
    %2608 = vmatpush1.msra.mxu0 0.0
    %2609 = vmatprep.subr.mxu0 0.0
    %2610 = vmatpush1.msra.mxu0 0.0
    %2611 = vmatprep.subr.mxu0 0.0
    %2612 = vmatpush1.msra.mxu0 0.0
    %2613 = vmatprep.subr.mxu0 0.0
    %2614 = vmatpush1.msra.mxu0 0.0
    %2615 = vmatprep.subr.mxu0 0.0
    %2616 = vmatpush1.msra.mxu0 0.0
    %2617 = vmatprep.subr.mxu0 0.0
    %2618 = vmatpush1.msra.mxu0 0.0
    %2619 = vmatprep.subr.mxu0 0.0
    %2620 = vmatpush1.msra.mxu0 0.0
    %2621 = vmatprep.subr.mxu0 0.0
    %2622 = vmatpush1.msra.mxu0 0.0
    %2623 = vmatprep.subr.mxu0 0.0
    %2624 = vmatpush1.msra.mxu0 0.0
    %2625 = vmatprep.subr.mxu0 0.0
    %2626 = vmatpush1.msra.mxu0 0.0
    %2627 = vmatprep.subr.mxu0 0.0
    %2628 = vmatpush1.msra.mxu0 0.0
    %2629 = vmatprep.subr.mxu0 0.0
    %2630 = vmatpush1.msra.mxu0 0.0
    %2631 = vmatprep.subr.mxu0 0.0
    %2632 = vmatpush1.msra.mxu0 0.0
    %2633 = vmatprep.subr.mxu0 0.0
    %2634 = vmatpush1.msra.mxu0 0.0
    %2635 = vmatprep.subr.mxu0 0.0
    %2636 = vmatpush1.msra.mxu0 0.0
    %2637 = vmatprep.subr.mxu0 0.0
    %2638 = vmatpush1.msra.mxu0 0.0
    %2639 = vmatprep.mubr.f32.mxu0 0.0
    %2640 = vmatmul.mubr.f32.gmra.mrb[0].mxu0 %v2524
    %v2641 = vpop.f32.mrb[0].mxu0
    %v2642 = vadd.f32 0.0, %v2641
    %v2643 = vpop.f32.mrb[0].mxu0
    %v2644 = vadd.f32 0.0, %v2643
    %2645 = vmatprep.mubr.f32.mxu0 0.0
    %2646 = vmatmul.mubr.f32.gmra.mrb[0].mxu0 %v2525
    %v2647 = vpop.f32.mrb[0].mxu0
    %v2648 = vadd.f32 0.0, %v2647
    %v2649 = vpop.f32.mrb[0].mxu0
    %v2650 = vadd.f32 0.0, %v2649
    %2651 = vdwg.mxu0
    %2652 = vmatprep.subr.mxu0 0.0
    %2653 = vmatpush1.msra.mxu0 %v2529
    %2654 = vmatprep.subr.mxu0 0.0
    %2655 = vmatpush1.msra.mxu0 %v2532
    %2656 = vmatprep.subr.mxu0 0.0
    %2657 = vmatpush1.msra.mxu0 %v2535
    %2658 = vmatprep.subr.mxu0 0.0
    %2659 = vmatpush1.msra.mxu0 %v2538
    %2660 = vmatprep.subr.mxu0 0.0
    %2661 = vmatpush1.msra.mxu0 %v2541
    %2662 = vmatprep.subr.mxu0 0.0
    %2663 = vmatpush1.msra.mxu0 %v2544
    %2664 = vmatprep.subr.mxu0 0.0
    %2665 = vmatpush1.msra.mxu0 %v2547
    %2666 = vmatprep.subr.mxu0 0.0
    %2667 = vmatpush1.msra.mxu0 %v2550
    %2668 = vmatprep.subr.mxu0 0.0
    %2669 = vmatpush1.msra.mxu0 %v2553
    %2670 = vmatprep.subr.mxu0 0.0
    %2671 = vmatpush1.msra.mxu0 %v2556
    %2672 = vmatprep.subr.mxu0 0.0
    %2673 = vmatpush1.msra.mxu0 %v2559
    %2674 = vmatprep.subr.mxu0 0.0
    %2675 = vmatpush1.msra.mxu0 %v2562
    %2676 = vmatprep.subr.mxu0 0.0
    %2677 = vmatpush1.msra.mxu0 %v2565
    %2678 = vmatprep.subr.mxu0 0.0
    %2679 = vmatpush1.msra.mxu0 %v2568
    %2680 = vmatprep.subr.mxu0 0.0
    %2681 = vmatpush1.msra.mxu0 %v2571
    %2682 = vmatprep.subr.mxu0 0.0
    %2683 = vmatpush1.msra.mxu0 %v2574
    %2684 = vmatprep.subr.mxu0 0.0
    %2685 = vmatpush1.msra.mxu0 0.0
    %2686 = vmatprep.subr.mxu0 0.0
    %2687 = vmatpush1.msra.mxu0 0.0
    %2688 = vmatprep.subr.mxu0 0.0
    %2689 = vmatpush1.msra.mxu0 0.0
    %2690 = vmatprep.subr.mxu0 0.0
    %2691 = vmatpush1.msra.mxu0 0.0
    %2692 = vmatprep.subr.mxu0 0.0
    %2693 = vmatpush1.msra.mxu0 0.0
    %2694 = vmatprep.subr.mxu0 0.0
    %2695 = vmatpush1.msra.mxu0 0.0
    %2696 = vmatprep.subr.mxu0 0.0
    %2697 = vmatpush1.msra.mxu0 0.0
    %2698 = vmatprep.subr.mxu0 0.0
    %2699 = vmatpush1.msra.mxu0 0.0
    %2700 = vmatprep.subr.mxu0 0.0
    %2701 = vmatpush1.msra.mxu0 0.0
    %2702 = vmatprep.subr.mxu0 0.0
    %2703 = vmatpush1.msra.mxu0 0.0
    %2704 = vmatprep.subr.mxu0 0.0
    %2705 = vmatpush1.msra.mxu0 0.0
    %2706 = vmatprep.subr.mxu0 0.0
    %2707 = vmatpush1.msra.mxu0 0.0
    %2708 = vmatprep.subr.mxu0 0.0
    %2709 = vmatpush1.msra.mxu0 0.0
    %2710 = vmatprep.subr.mxu0 0.0
    %2711 = vmatpush1.msra.mxu0 0.0
    %2712 = vmatprep.subr.mxu0 0.0
    %2713 = vmatpush1.msra.mxu0 0.0
    %2714 = vmatprep.subr.mxu0 0.0
    %2715 = vmatpush1.msra.mxu0 0.0
    %2716 = vmatprep.mubr.f32.mxu0 0.0
    %2717 = vmatmul.mubr.f32.gmra.mrb[0].mxu0 %v2524
    %v2718 = vpop.f32.mrb[0].mxu0
    %v2719 = vadd.f32 0.0, %v2718
    %v2720 = vpop.f32.mrb[0].mxu0
    %2721 = vmatprep.mubr.f32.mxu0 0.0
    %2722 = vmatmul.mubr.f32.gmra.mrb[0].mxu0 %v2525
    %v2723 = vpop.f32.mrb[0].mxu0
    %v2724 = vadd.f32 0.0, %v2723
    %v2725 = vpop.f32.mrb[0].mxu0
    %2726 = vdwg.mxu0
    %v2727 = vmul.f32 %v2642, %v51
    %v2728 = vmul.f32 %v2648, %v52
    %2729 = vmatprep.subr.mxu0 0.0
    %2730 = vmatpush1.msra.mxu0 %v55
    %2731 = vmatprep.subr.mxu0 0.0
    %2732 = vmatpush1.msra.mxu0 %v56
    %2733 = vmatprep.subr.mxu0 0.0
    %2734 = vmatpush1.msra.mxu0 %v57
    %2735 = vmatprep.subr.mxu0 0.0
    %2736 = vmatpush1.msra.mxu0 %v58
    %2737 = vmatprep.subr.mxu0 0.0
    %2738 = vmatpush1.msra.mxu0 %v59
    %2739 = vmatprep.subr.mxu0 0.0
    %2740 = vmatpush1.msra.mxu0 %v60
    %2741 = vmatprep.subr.mxu0 0.0
    %2742 = vmatpush1.msra.mxu0 %v61
    %2743 = vmatprep.subr.mxu0 0.0
    %2744 = vmatpush1.msra.mxu0 %v62
    %2745 = vmatprep.subr.mxu0 0.0
    %2746 = vmatpush1.msra.mxu0 %v63
    %2747 = vmatprep.subr.mxu0 0.0
    %2748 = vmatpush1.msra.mxu0 %v64
    %2749 = vmatprep.subr.mxu0 0.0
    %2750 = vmatpush1.msra.mxu0 %v65
    %2751 = vmatprep.subr.mxu0 0.0
    %2752 = vmatpush1.msra.mxu0 %v66
    %2753 = vmatprep.subr.mxu0 0.0
    %2754 = vmatpush1.msra.mxu0 %v67
    %2755 = vmatprep.subr.mxu0 0.0
    %2756 = vmatpush1.msra.mxu0 %v68
    %2757 = vmatprep.subr.mxu0 0.0
    %2758 = vmatpush1.msra.mxu0 %v69
    %2759 = vmatprep.subr.mxu0 0.0
    %2760 = vmatpush1.msra.mxu0 %v70
    %2761 = vmatprep.subr.mxu0 0.0
    %2762 = vmatpush1.msra.mxu0 0.0
    %2763 = vmatprep.subr.mxu0 0.0
    %2764 = vmatpush1.msra.mxu0 0.0
    %2765 = vmatprep.subr.mxu0 0.0
    %2766 = vmatpush1.msra.mxu0 0.0
    %2767 = vmatprep.subr.mxu0 0.0
    %2768 = vmatpush1.msra.mxu0 0.0
    %2769 = vmatprep.subr.mxu0 0.0
    %2770 = vmatpush1.msra.mxu0 0.0
    %2771 = vmatprep.subr.mxu0 0.0
    %2772 = vmatpush1.msra.mxu0 0.0
    %2773 = vmatprep.subr.mxu0 0.0
    %2774 = vmatpush1.msra.mxu0 0.0
    %2775 = vmatprep.subr.mxu0 0.0
    %2776 = vmatpush1.msra.mxu0 0.0
    %2777 = vmatprep.subr.mxu0 0.0
    %2778 = vmatpush1.msra.mxu0 0.0
    %2779 = vmatprep.subr.mxu0 0.0
    %2780 = vmatpush1.msra.mxu0 0.0
    %2781 = vmatprep.subr.mxu0 0.0
    %2782 = vmatpush1.msra.mxu0 0.0
    %2783 = vmatprep.subr.mxu0 0.0
    %2784 = vmatpush1.msra.mxu0 0.0
    %2785 = vmatprep.subr.mxu0 0.0
    %2786 = vmatpush1.msra.mxu0 0.0
    %2787 = vmatprep.subr.mxu0 0.0
    %2788 = vmatpush1.msra.mxu0 0.0
    %2789 = vmatprep.subr.mxu0 0.0
    %2790 = vmatpush1.msra.mxu0 0.0
    %2791 = vmatprep.subr.mxu0 0.0
    %2792 = vmatpush1.msra.mxu0 0.0
    %2793 = vmatprep.mubr.f32.mxu0 0.0
    %2794 = vmatmul.mubr.f32.gmra.mrb[0].mxu0 %v2642
    %v2795 = vpop.f32.mrb[0].mxu0
    %v2796 = vadd.f32 0.0, %v2795
    %v2797 = vpop.f32.mrb[0].mxu0
    %2798 = vmatprep.mubr.f32.mxu0 0.0
    %2799 = vmatmul.mubr.f32.gmra.mrb[0].mxu0 %v2648
    %v2800 = vpop.f32.mrb[0].mxu0
    %v2801 = vadd.f32 0.0, %v2800
    %v2802 = vpop.f32.mrb[0].mxu0
    %2803 = vdwg.mxu0
    %v2804 = vmul.f32 %v2796, %v53
    %v2805 = vmul.f32 %v2801, %v54
    %v2806 = vadd.f32 %v2727, %v2804
    %v2807 = vadd.f32 %v2728, %v2805
    %v2808 = vmul.f32 %v2644, %v51
    %v2809 = vmul.f32 %v2650, %v52
    %2810 = vmatprep.subr.mxu0 0.0
    %2811 = vmatpush1.msra.mxu0 %v55
    %2812 = vmatprep.subr.mxu0 0.0
    %2813 = vmatpush1.msra.mxu0 %v56
    %2814 = vmatprep.subr.mxu0 0.0
    %2815 = vmatpush1.msra.mxu0 %v57
    %2816 = vmatprep.subr.mxu0 0.0
    %2817 = vmatpush1.msra.mxu0 %v58
    %2818 = vmatprep.subr.mxu0 0.0
    %2819 = vmatpush1.msra.mxu0 %v59
    %2820 = vmatprep.subr.mxu0 0.0
    %2821 = vmatpush1.msra.mxu0 %v60
    %2822 = vmatprep.subr.mxu0 0.0
    %2823 = vmatpush1.msra.mxu0 %v61
    %2824 = vmatprep.subr.mxu0 0.0
    %2825 = vmatpush1.msra.mxu0 %v62
    %2826 = vmatprep.subr.mxu0 0.0
    %2827 = vmatpush1.msra.mxu0 %v63
    %2828 = vmatprep.subr.mxu0 0.0
    %2829 = vmatpush1.msra.mxu0 %v64
    %2830 = vmatprep.subr.mxu0 0.0
    %2831 = vmatpush1.msra.mxu0 %v65
    %2832 = vmatprep.subr.mxu0 0.0
    %2833 = vmatpush1.msra.mxu0 %v66
    %2834 = vmatprep.subr.mxu0 0.0
    %2835 = vmatpush1.msra.mxu0 %v67
    %2836 = vmatprep.subr.mxu0 0.0
    %2837 = vmatpush1.msra.mxu0 %v68
    %2838 = vmatprep.subr.mxu0 0.0
    %2839 = vmatpush1.msra.mxu0 %v69
    %2840 = vmatprep.subr.mxu0 0.0
    %2841 = vmatpush1.msra.mxu0 %v70
    %2842 = vmatprep.subr.mxu0 0.0
    %2843 = vmatpush1.msra.mxu0 0.0
    %2844 = vmatprep.subr.mxu0 0.0
    %2845 = vmatpush1.msra.mxu0 0.0
    %2846 = vmatprep.subr.mxu0 0.0
    %2847 = vmatpush1.msra.mxu0 0.0
    %2848 = vmatprep.subr.mxu0 0.0
    %2849 = vmatpush1.msra.mxu0 0.0
    %2850 = vmatprep.subr.mxu0 0.0
    %2851 = vmatpush1.msra.mxu0 0.0
    %2852 = vmatprep.subr.mxu0 0.0
    %2853 = vmatpush1.msra.mxu0 0.0
    %2854 = vmatprep.subr.mxu0 0.0
    %2855 = vmatpush1.msra.mxu0 0.0
    %2856 = vmatprep.subr.mxu0 0.0
    %2857 = vmatpush1.msra.mxu0 0.0
    %2858 = vmatprep.subr.mxu0 0.0
    %2859 = vmatpush1.msra.mxu0 0.0
    %2860 = vmatprep.subr.mxu0 0.0
    %2861 = vmatpush1.msra.mxu0 0.0
    %2862 = vmatprep.subr.mxu0 0.0
    %2863 = vmatpush1.msra.mxu0 0.0
    %2864 = vmatprep.subr.mxu0 0.0
    %2865 = vmatpush1.msra.mxu0 0.0
    %2866 = vmatprep.subr.mxu0 0.0
    %2867 = vmatpush1.msra.mxu0 0.0
    %2868 = vmatprep.subr.mxu0 0.0
    %2869 = vmatpush1.msra.mxu0 0.0
    %2870 = vmatprep.subr.mxu0 0.0
    %2871 = vmatpush1.msra.mxu0 0.0
    %2872 = vmatprep.subr.mxu0 0.0
    %2873 = vmatpush1.msra.mxu0 0.0
    %2874 = vmatprep.mubr.f32.mxu0 0.0
    %2875 = vmatmul.mubr.f32.gmra.mrb[0].mxu0 %v2644
    %v2876 = vpop.f32.mrb[0].mxu0
    %v2877 = vadd.f32 0.0, %v2876
    %v2878 = vpop.f32.mrb[0].mxu0
    %2879 = vmatprep.mubr.f32.mxu0 0.0
    %2880 = vmatmul.mubr.f32.gmra.mrb[0].mxu0 %v2650
    %v2881 = vpop.f32.mrb[0].mxu0
    %v2882 = vadd.f32 0.0, %v2881
    %v2883 = vpop.f32.mrb[0].mxu0
    %2884 = vdwg.mxu0
    %v2885 = vmul.f32 %v2877, %v53
    %v2886 = vmul.f32 %v2882, %v54
    %v2887 = vadd.f32 %v2808, %v2885
    %v2888 = vadd.f32 %v2809, %v2886
    %2891 = vrot.lane.b32.xlu0 %v2806, 120
    %v2892 = vpop.permute.xlu0 %2891
    %2893 = vrot.lane.b32.xlu0 %v2807, 120
    %v2894 = vpop.permute.xlu0 %2893
    %2895 = vrot.lane.b32.xlu0 %v2806, 112
    %v2896 = vpop.permute.xlu0 %2895
    %2897 = vrot.lane.b32.xlu0 %v2807, 112
    %v2898 = vpop.permute.xlu0 %2897
    %2899 = vrot.lane.b32.xlu0 %v2806, 104
    %v2900 = vpop.permute.xlu0 %2899
    %2901 = vrot.lane.b32.xlu0 %v2807, 104
    %v2902 = vpop.permute.xlu0 %2901
    %2905 = vrot.lane.b32.xlu0 %v2887, 120
    %v2906 = vpop.permute.xlu0 %2905
    %2907 = vrot.lane.b32.xlu0 %v2888, 120
    %v2908 = vpop.permute.xlu0 %2907
    %2909 = vrot.lane.b32.xlu0 %v2887, 112
    %v2910 = vpop.permute.xlu0 %2909
    %2911 = vrot.lane.b32.xlu0 %v2888, 112
    %v2912 = vpop.permute.xlu0 %2911
    %2913 = vrot.lane.b32.xlu0 %v2887, 104
    %v2914 = vpop.permute.xlu0 %2913
    %2915 = vrot.lane.b32.xlu0 %v2888, 104
    %v2916 = vpop.permute.xlu0 %2915
    %2919 = vrot.lane.b32.xlu0 %v2719, 120
    %v2920 = vpop.permute.xlu0 %2919
    %2921 = vrot.lane.b32.xlu0 %v2724, 120
    %v2922 = vpop.permute.xlu0 %2921
    %2925 = vrot.lane.b32.xlu0 %v2719, 112
    %v2926 = vpop.permute.xlu0 %2925
    %2927 = vrot.lane.b32.xlu0 %v2724, 112
    %v2928 = vpop.permute.xlu0 %2927
    %2931 = vrot.lane.b32.xlu0 %v2719, 104
    %v2932 = vpop.permute.xlu0 %2931
    %2933 = vrot.lane.b32.xlu0 %v2724, 104
    %v2934 = vpop.permute.xlu0 %2933
    %v2937 = vsel %vm659, %v2806, 0
    %v2939 = vsel %vm659, %v2887, 0
    %2941 = vmatprep.subr.mxu0 0.0
    %2942 = vmatpush1.xpose.msra.mxu0 %v2939
    %2943 = vmatprep.subr.mxu0 0.0
    %2944 = vmatpush1.xpose.msra.mxu0 0.0
    %2945 = vmatprep.subr.mxu0 0.0
    %2946 = vmatpush1.xpose.msra.mxu0 0.0
    %2947 = vmatprep.subr.mxu0 0.0
    %2948 = vmatpush1.xpose.msra.mxu0 0.0
    %2949 = vmatprep.subr.mxu0 0.0
    %2950 = vmatpush1.xpose.msra.mxu0 0.0
    %2951 = vmatprep.subr.mxu0 0.0
    %2952 = vmatpush1.xpose.msra.mxu0 0.0
    %2953 = vmatprep.subr.mxu0 0.0
    %2954 = vmatpush1.xpose.msra.mxu0 0.0
    %2955 = vmatprep.subr.mxu0 0.0
    %2956 = vmatpush1.xpose.msra.mxu0 0.0
    %2957 = vmatprep.subr.mxu0 0.0
    %2958 = vmatpush1.xpose.msra.mxu0 0.0
    %2959 = vmatprep.subr.mxu0 0.0
    %2960 = vmatpush1.xpose.msra.mxu0 0.0
    %2961 = vmatprep.subr.mxu0 0.0
    %2962 = vmatpush1.xpose.msra.mxu0 0.0
    %2963 = vmatprep.subr.mxu0 0.0
    %2964 = vmatpush1.xpose.msra.mxu0 0.0
    %2965 = vmatprep.subr.mxu0 0.0
    %2966 = vmatpush1.xpose.msra.mxu0 0.0
    %2967 = vmatprep.subr.mxu0 0.0
    %2968 = vmatpush1.xpose.msra.mxu0 0.0
    %2969 = vmatprep.subr.mxu0 0.0
    %2970 = vmatpush1.xpose.msra.mxu0 0.0
    %2971 = vmatprep.subr.mxu0 0.0
    %2972 = vmatpush1.xpose.msra.mxu0 0.0
    %2973 = vmatprep.subr.mxu0 0.0
    %2974 = vmatpush1.xpose.msra.mxu0 0.0
    %2975 = vmatprep.subr.mxu0 0.0
    %2976 = vmatpush1.xpose.msra.mxu0 0.0
    %2977 = vmatprep.subr.mxu0 0.0
    %2978 = vmatpush1.xpose.msra.mxu0 0.0
    %2979 = vmatprep.subr.mxu0 0.0
    %2980 = vmatpush1.xpose.msra.mxu0 0.0
    %2981 = vmatprep.subr.mxu0 0.0
    %2982 = vmatpush1.xpose.msra.mxu0 0.0
    %2983 = vmatprep.subr.mxu0 0.0
    %2984 = vmatpush1.xpose.msra.mxu0 0.0
    %2985 = vmatprep.subr.mxu0 0.0
    %2986 = vmatpush1.xpose.msra.mxu0 0.0
    %2987 = vmatprep.subr.mxu0 0.0
    %2988 = vmatpush1.xpose.msra.mxu0 0.0
    %2989 = vmatprep.subr.mxu0 0.0
    %2990 = vmatpush1.xpose.msra.mxu0 0.0
    %2991 = vmatprep.subr.mxu0 0.0
    %2992 = vmatpush1.xpose.msra.mxu0 0.0
    %2993 = vmatprep.subr.mxu0 0.0
    %2994 = vmatpush1.xpose.msra.mxu0 0.0
    %2995 = vmatprep.subr.mxu0 0.0
    %2996 = vmatpush1.xpose.msra.mxu0 0.0
    %2997 = vmatprep.subr.mxu0 0.0
    %2998 = vmatpush1.xpose.msra.mxu0 0.0
    %2999 = vmatprep.subr.mxu0 0.0
    %3000 = vmatpush1.xpose.msra.mxu0 0.0
    %3001 = vmatprep.subr.mxu0 0.0
    %3002 = vmatpush1.xpose.msra.mxu0 0.0
    %3003 = vmatprep.subr.mxu0 0.0
    %3004 = vmatpush1.xpose.msra.mxu0 0.0
    %3005 = vmatprep.mubr.f32.mxu0 0.0
    %3006 = vmatmul.mubr.f32.gmra.mrb[0].mxu0 %v2937
    %v3007 = vpop.f32.mrb[0].mxu0
    %v3008 = vadd.f32 %v224, %v3007
    %v3009 = vpop.f32.mrb[0].mxu0
    %3010 = vdwg.mxu0
    %v3011 = vsel %vm659, %v2807, 0
    %v3013 = vsel %vm659, %v2888, 0
    %3015 = vmatprep.subr.mxu0 0.0
    %3016 = vmatpush1.xpose.msra.mxu0 %v3013
    %3017 = vmatprep.subr.mxu0 0.0
    %3018 = vmatpush1.xpose.msra.mxu0 0.0
    %3019 = vmatprep.subr.mxu0 0.0
    %3020 = vmatpush1.xpose.msra.mxu0 0.0
    %3021 = vmatprep.subr.mxu0 0.0
    %3022 = vmatpush1.xpose.msra.mxu0 0.0
    %3023 = vmatprep.subr.mxu0 0.0
    %3024 = vmatpush1.xpose.msra.mxu0 0.0
    %3025 = vmatprep.subr.mxu0 0.0
    %3026 = vmatpush1.xpose.msra.mxu0 0.0
    %3027 = vmatprep.subr.mxu0 0.0
    %3028 = vmatpush1.xpose.msra.mxu0 0.0
    %3029 = vmatprep.subr.mxu0 0.0
    %3030 = vmatpush1.xpose.msra.mxu0 0.0
    %3031 = vmatprep.subr.mxu0 0.0
    %3032 = vmatpush1.xpose.msra.mxu0 0.0
    %3033 = vmatprep.subr.mxu0 0.0
    %3034 = vmatpush1.xpose.msra.mxu0 0.0
    %3035 = vmatprep.subr.mxu0 0.0
    %3036 = vmatpush1.xpose.msra.mxu0 0.0
    %3037 = vmatprep.subr.mxu0 0.0
    %3038 = vmatpush1.xpose.msra.mxu0 0.0
    %3039 = vmatprep.subr.mxu0 0.0
    %3040 = vmatpush1.xpose.msra.mxu0 0.0
    %3041 = vmatprep.subr.mxu0 0.0
    %3042 = vmatpush1.xpose.msra.mxu0 0.0
    %3043 = vmatprep.subr.mxu0 0.0
    %3044 = vmatpush1.xpose.msra.mxu0 0.0
    %3045 = vmatprep.subr.mxu0 0.0
    %3046 = vmatpush1.xpose.msra.mxu0 0.0
    %3047 = vmatprep.subr.mxu0 0.0
    %3048 = vmatpush1.xpose.msra.mxu0 0.0
    %3049 = vmatprep.subr.mxu0 0.0
    %3050 = vmatpush1.xpose.msra.mxu0 0.0
    %3051 = vmatprep.subr.mxu0 0.0
    %3052 = vmatpush1.xpose.msra.mxu0 0.0
    %3053 = vmatprep.subr.mxu0 0.0
    %3054 = vmatpush1.xpose.msra.mxu0 0.0
    %3055 = vmatprep.subr.mxu0 0.0
    %3056 = vmatpush1.xpose.msra.mxu0 0.0
    %3057 = vmatprep.subr.mxu0 0.0
    %3058 = vmatpush1.xpose.msra.mxu0 0.0
    %3059 = vmatprep.subr.mxu0 0.0
    %3060 = vmatpush1.xpose.msra.mxu0 0.0
    %3061 = vmatprep.subr.mxu0 0.0
    %3062 = vmatpush1.xpose.msra.mxu0 0.0
    %3063 = vmatprep.subr.mxu0 0.0
    %3064 = vmatpush1.xpose.msra.mxu0 0.0
    %3065 = vmatprep.subr.mxu0 0.0
    %3066 = vmatpush1.xpose.msra.mxu0 0.0
    %3067 = vmatprep.subr.mxu0 0.0
    %3068 = vmatpush1.xpose.msra.mxu0 0.0
    %3069 = vmatprep.subr.mxu0 0.0
    %3070 = vmatpush1.xpose.msra.mxu0 0.0
    %3071 = vmatprep.subr.mxu0 0.0
    %3072 = vmatpush1.xpose.msra.mxu0 0.0
    %3073 = vmatprep.subr.mxu0 0.0
    %3074 = vmatpush1.xpose.msra.mxu0 0.0
    %3075 = vmatprep.subr.mxu0 0.0
    %3076 = vmatpush1.xpose.msra.mxu0 0.0
    %3077 = vmatprep.subr.mxu0 0.0
    %3078 = vmatpush1.xpose.msra.mxu0 0.0
    %3079 = vmatprep.mubr.f32.mxu0 0.0
    %3080 = vmatmul.mubr.f32.gmra.mrb[0].mxu0 %v3011
    %v3081 = vpop.f32.mrb[0].mxu0
    %v3082 = vadd.f32 %v225, %v3081
    %v3083 = vpop.f32.mrb[0].mxu0
    %3084 = vdwg.mxu0
    %v3085 = vsel %vm659, %v2892, 0
    %v3087 = vsel %vm659, %v2906, 0
    %3089 = vmatprep.subr.mxu0 0.0
    %3090 = vmatpush1.xpose.msra.mxu0 %v3087
    %3091 = vmatprep.subr.mxu0 0.0
    %3092 = vmatpush1.xpose.msra.mxu0 0.0
    %3093 = vmatprep.subr.mxu0 0.0
    %3094 = vmatpush1.xpose.msra.mxu0 0.0
    %3095 = vmatprep.subr.mxu0 0.0
    %3096 = vmatpush1.xpose.msra.mxu0 0.0
    %3097 = vmatprep.subr.mxu0 0.0
    %3098 = vmatpush1.xpose.msra.mxu0 0.0
    %3099 = vmatprep.subr.mxu0 0.0
    %3100 = vmatpush1.xpose.msra.mxu0 0.0
    %3101 = vmatprep.subr.mxu0 0.0
    %3102 = vmatpush1.xpose.msra.mxu0 0.0
    %3103 = vmatprep.subr.mxu0 0.0
    %3104 = vmatpush1.xpose.msra.mxu0 0.0
    %3105 = vmatprep.subr.mxu0 0.0
    %3106 = vmatpush1.xpose.msra.mxu0 0.0
    %3107 = vmatprep.subr.mxu0 0.0
    %3108 = vmatpush1.xpose.msra.mxu0 0.0
    %3109 = vmatprep.subr.mxu0 0.0
    %3110 = vmatpush1.xpose.msra.mxu0 0.0
    %3111 = vmatprep.subr.mxu0 0.0
    %3112 = vmatpush1.xpose.msra.mxu0 0.0
    %3113 = vmatprep.subr.mxu0 0.0
    %3114 = vmatpush1.xpose.msra.mxu0 0.0
    %3115 = vmatprep.subr.mxu0 0.0
    %3116 = vmatpush1.xpose.msra.mxu0 0.0
    %3117 = vmatprep.subr.mxu0 0.0
    %3118 = vmatpush1.xpose.msra.mxu0 0.0
    %3119 = vmatprep.subr.mxu0 0.0
    %3120 = vmatpush1.xpose.msra.mxu0 0.0
    %3121 = vmatprep.subr.mxu0 0.0
    %3122 = vmatpush1.xpose.msra.mxu0 0.0
    %3123 = vmatprep.subr.mxu0 0.0
    %3124 = vmatpush1.xpose.msra.mxu0 0.0
    %3125 = vmatprep.subr.mxu0 0.0
    %3126 = vmatpush1.xpose.msra.mxu0 0.0
    %3127 = vmatprep.subr.mxu0 0.0
    %3128 = vmatpush1.xpose.msra.mxu0 0.0
    %3129 = vmatprep.subr.mxu0 0.0
    %3130 = vmatpush1.xpose.msra.mxu0 0.0
    %3131 = vmatprep.subr.mxu0 0.0
    %3132 = vmatpush1.xpose.msra.mxu0 0.0
    %3133 = vmatprep.subr.mxu0 0.0
    %3134 = vmatpush1.xpose.msra.mxu0 0.0
    %3135 = vmatprep.subr.mxu0 0.0
    %3136 = vmatpush1.xpose.msra.mxu0 0.0
    %3137 = vmatprep.subr.mxu0 0.0
    %3138 = vmatpush1.xpose.msra.mxu0 0.0
    %3139 = vmatprep.subr.mxu0 0.0
    %3140 = vmatpush1.xpose.msra.mxu0 0.0
    %3141 = vmatprep.subr.mxu0 0.0
    %3142 = vmatpush1.xpose.msra.mxu0 0.0
    %3143 = vmatprep.subr.mxu0 0.0
    %3144 = vmatpush1.xpose.msra.mxu0 0.0
    %3145 = vmatprep.subr.mxu0 0.0
    %3146 = vmatpush1.xpose.msra.mxu0 0.0
    %3147 = vmatprep.subr.mxu0 0.0
    %3148 = vmatpush1.xpose.msra.mxu0 0.0
    %3149 = vmatprep.subr.mxu0 0.0
    %3150 = vmatpush1.xpose.msra.mxu0 0.0
    %3151 = vmatprep.subr.mxu0 0.0
    %3152 = vmatpush1.xpose.msra.mxu0 0.0
    %3153 = vmatprep.mubr.f32.mxu0 0.0
    %3154 = vmatmul.mubr.f32.gmra.mrb[0].mxu0 %v3085
    %v3155 = vpop.f32.mrb[0].mxu0
    %v3156 = vadd.f32 %v224, %v3155
    %v3157 = vpop.f32.mrb[0].mxu0
    %3158 = vdwg.mxu0
    %v3159 = vsel %vm659, %v2894, 0
    %v3161 = vsel %vm659, %v2908, 0
    %3163 = vmatprep.subr.mxu0 0.0
    %3164 = vmatpush1.xpose.msra.mxu0 %v3161
    %3165 = vmatprep.subr.mxu0 0.0
    %3166 = vmatpush1.xpose.msra.mxu0 0.0
    %3167 = vmatprep.subr.mxu0 0.0
    %3168 = vmatpush1.xpose.msra.mxu0 0.0
    %3169 = vmatprep.subr.mxu0 0.0
    %3170 = vmatpush1.xpose.msra.mxu0 0.0
    %3171 = vmatprep.subr.mxu0 0.0
    %3172 = vmatpush1.xpose.msra.mxu0 0.0
    %3173 = vmatprep.subr.mxu0 0.0
    %3174 = vmatpush1.xpose.msra.mxu0 0.0
    %3175 = vmatprep.subr.mxu0 0.0
    %3176 = vmatpush1.xpose.msra.mxu0 0.0
    %3177 = vmatprep.subr.mxu0 0.0
    %3178 = vmatpush1.xpose.msra.mxu0 0.0
    %3179 = vmatprep.subr.mxu0 0.0
    %3180 = vmatpush1.xpose.msra.mxu0 0.0
    %3181 = vmatprep.subr.mxu0 0.0
    %3182 = vmatpush1.xpose.msra.mxu0 0.0
    %3183 = vmatprep.subr.mxu0 0.0
    %3184 = vmatpush1.xpose.msra.mxu0 0.0
    %3185 = vmatprep.subr.mxu0 0.0
    %3186 = vmatpush1.xpose.msra.mxu0 0.0
    %3187 = vmatprep.subr.mxu0 0.0
    %3188 = vmatpush1.xpose.msra.mxu0 0.0
    %3189 = vmatprep.subr.mxu0 0.0
    %3190 = vmatpush1.xpose.msra.mxu0 0.0
    %3191 = vmatprep.subr.mxu0 0.0
    %3192 = vmatpush1.xpose.msra.mxu0 0.0
    %3193 = vmatprep.subr.mxu0 0.0
    %3194 = vmatpush1.xpose.msra.mxu0 0.0
    %3195 = vmatprep.subr.mxu0 0.0
    %3196 = vmatpush1.xpose.msra.mxu0 0.0
    %3197 = vmatprep.subr.mxu0 0.0
    %3198 = vmatpush1.xpose.msra.mxu0 0.0
    %3199 = vmatprep.subr.mxu0 0.0
    %3200 = vmatpush1.xpose.msra.mxu0 0.0
    %3201 = vmatprep.subr.mxu0 0.0
    %3202 = vmatpush1.xpose.msra.mxu0 0.0
    %3203 = vmatprep.subr.mxu0 0.0
    %3204 = vmatpush1.xpose.msra.mxu0 0.0
    %3205 = vmatprep.subr.mxu0 0.0
    %3206 = vmatpush1.xpose.msra.mxu0 0.0
    %3207 = vmatprep.subr.mxu0 0.0
    %3208 = vmatpush1.xpose.msra.mxu0 0.0
    %3209 = vmatprep.subr.mxu0 0.0
    %3210 = vmatpush1.xpose.msra.mxu0 0.0
    %3211 = vmatprep.subr.mxu0 0.0
    %3212 = vmatpush1.xpose.msra.mxu0 0.0
    %3213 = vmatprep.subr.mxu0 0.0
    %3214 = vmatpush1.xpose.msra.mxu0 0.0
    %3215 = vmatprep.subr.mxu0 0.0
    %3216 = vmatpush1.xpose.msra.mxu0 0.0
    %3217 = vmatprep.subr.mxu0 0.0
    %3218 = vmatpush1.xpose.msra.mxu0 0.0
    %3219 = vmatprep.subr.mxu0 0.0
    %3220 = vmatpush1.xpose.msra.mxu0 0.0
    %3221 = vmatprep.subr.mxu0 0.0
    %3222 = vmatpush1.xpose.msra.mxu0 0.0
    %3223 = vmatprep.subr.mxu0 0.0
    %3224 = vmatpush1.xpose.msra.mxu0 0.0
    %3225 = vmatprep.subr.mxu0 0.0
    %3226 = vmatpush1.xpose.msra.mxu0 0.0
    %3227 = vmatprep.mubr.f32.mxu0 0.0
    %3228 = vmatmul.mubr.f32.gmra.mrb[0].mxu0 %v3159
    %v3229 = vpop.f32.mrb[0].mxu0
    %v3230 = vadd.f32 %v225, %v3229
    %v3231 = vpop.f32.mrb[0].mxu0
    %3232 = vdwg.mxu0
    %v3233 = vsel %vm659, %v2896, 0
    %v3235 = vsel %vm659, %v2910, 0
    %3237 = vmatprep.subr.mxu0 0.0
    %3238 = vmatpush1.xpose.msra.mxu0 %v3235
    %3239 = vmatprep.subr.mxu0 0.0
    %3240 = vmatpush1.xpose.msra.mxu0 0.0
    %3241 = vmatprep.subr.mxu0 0.0
    %3242 = vmatpush1.xpose.msra.mxu0 0.0
    %3243 = vmatprep.subr.mxu0 0.0
    %3244 = vmatpush1.xpose.msra.mxu0 0.0
    %3245 = vmatprep.subr.mxu0 0.0
    %3246 = vmatpush1.xpose.msra.mxu0 0.0
    %3247 = vmatprep.subr.mxu0 0.0
    %3248 = vmatpush1.xpose.msra.mxu0 0.0
    %3249 = vmatprep.subr.mxu0 0.0
    %3250 = vmatpush1.xpose.msra.mxu0 0.0
    %3251 = vmatprep.subr.mxu0 0.0
    %3252 = vmatpush1.xpose.msra.mxu0 0.0
    %3253 = vmatprep.subr.mxu0 0.0
    %3254 = vmatpush1.xpose.msra.mxu0 0.0
    %3255 = vmatprep.subr.mxu0 0.0
    %3256 = vmatpush1.xpose.msra.mxu0 0.0
    %3257 = vmatprep.subr.mxu0 0.0
    %3258 = vmatpush1.xpose.msra.mxu0 0.0
    %3259 = vmatprep.subr.mxu0 0.0
    %3260 = vmatpush1.xpose.msra.mxu0 0.0
    %3261 = vmatprep.subr.mxu0 0.0
    %3262 = vmatpush1.xpose.msra.mxu0 0.0
    %3263 = vmatprep.subr.mxu0 0.0
    %3264 = vmatpush1.xpose.msra.mxu0 0.0
    %3265 = vmatprep.subr.mxu0 0.0
    %3266 = vmatpush1.xpose.msra.mxu0 0.0
    %3267 = vmatprep.subr.mxu0 0.0
    %3268 = vmatpush1.xpose.msra.mxu0 0.0
    %3269 = vmatprep.subr.mxu0 0.0
    %3270 = vmatpush1.xpose.msra.mxu0 0.0
    %3271 = vmatprep.subr.mxu0 0.0
    %3272 = vmatpush1.xpose.msra.mxu0 0.0
    %3273 = vmatprep.subr.mxu0 0.0
    %3274 = vmatpush1.xpose.msra.mxu0 0.0
    %3275 = vmatprep.subr.mxu0 0.0
    %3276 = vmatpush1.xpose.msra.mxu0 0.0
    %3277 = vmatprep.subr.mxu0 0.0
    %3278 = vmatpush1.xpose.msra.mxu0 0.0
    %3279 = vmatprep.subr.mxu0 0.0
    %3280 = vmatpush1.xpose.msra.mxu0 0.0
    %3281 = vmatprep.subr.mxu0 0.0
    %3282 = vmatpush1.xpose.msra.mxu0 0.0
    %3283 = vmatprep.subr.mxu0 0.0
    %3284 = vmatpush1.xpose.msra.mxu0 0.0
    %3285 = vmatprep.subr.mxu0 0.0
    %3286 = vmatpush1.xpose.msra.mxu0 0.0
    %3287 = vmatprep.subr.mxu0 0.0
    %3288 = vmatpush1.xpose.msra.mxu0 0.0
    %3289 = vmatprep.subr.mxu0 0.0
    %3290 = vmatpush1.xpose.msra.mxu0 0.0
    %3291 = vmatprep.subr.mxu0 0.0
    %3292 = vmatpush1.xpose.msra.mxu0 0.0
    %3293 = vmatprep.subr.mxu0 0.0
    %3294 = vmatpush1.xpose.msra.mxu0 0.0
    %3295 = vmatprep.subr.mxu0 0.0
    %3296 = vmatpush1.xpose.msra.mxu0 0.0
    %3297 = vmatprep.subr.mxu0 0.0
    %3298 = vmatpush1.xpose.msra.mxu0 0.0
    %3299 = vmatprep.subr.mxu0 0.0
    %3300 = vmatpush1.xpose.msra.mxu0 0.0
    %3301 = vmatprep.mubr.f32.mxu0 0.0
    %3302 = vmatmul.mubr.f32.gmra.mrb[0].mxu0 %v3233
    %v3303 = vpop.f32.mrb[0].mxu0
    %v3304 = vadd.f32 %v224, %v3303
    %v3305 = vpop.f32.mrb[0].mxu0
    %3306 = vdwg.mxu0
    %v3307 = vsel %vm659, %v2898, 0
    %v3309 = vsel %vm659, %v2912, 0
    %3311 = vmatprep.subr.mxu0 0.0
    %3312 = vmatpush1.xpose.msra.mxu0 %v3309
    %3313 = vmatprep.subr.mxu0 0.0
    %3314 = vmatpush1.xpose.msra.mxu0 0.0
    %3315 = vmatprep.subr.mxu0 0.0
    %3316 = vmatpush1.xpose.msra.mxu0 0.0
    %3317 = vmatprep.subr.mxu0 0.0
    %3318 = vmatpush1.xpose.msra.mxu0 0.0
    %3319 = vmatprep.subr.mxu0 0.0
    %3320 = vmatpush1.xpose.msra.mxu0 0.0
    %3321 = vmatprep.subr.mxu0 0.0
    %3322 = vmatpush1.xpose.msra.mxu0 0.0
    %3323 = vmatprep.subr.mxu0 0.0
    %3324 = vmatpush1.xpose.msra.mxu0 0.0
    %3325 = vmatprep.subr.mxu0 0.0
    %3326 = vmatpush1.xpose.msra.mxu0 0.0
    %3327 = vmatprep.subr.mxu0 0.0
    %3328 = vmatpush1.xpose.msra.mxu0 0.0
    %3329 = vmatprep.subr.mxu0 0.0
    %3330 = vmatpush1.xpose.msra.mxu0 0.0
    %3331 = vmatprep.subr.mxu0 0.0
    %3332 = vmatpush1.xpose.msra.mxu0 0.0
    %3333 = vmatprep.subr.mxu0 0.0
    %3334 = vmatpush1.xpose.msra.mxu0 0.0
    %3335 = vmatprep.subr.mxu0 0.0
    %3336 = vmatpush1.xpose.msra.mxu0 0.0
    %3337 = vmatprep.subr.mxu0 0.0
    %3338 = vmatpush1.xpose.msra.mxu0 0.0
    %3339 = vmatprep.subr.mxu0 0.0
    %3340 = vmatpush1.xpose.msra.mxu0 0.0
    %3341 = vmatprep.subr.mxu0 0.0
    %3342 = vmatpush1.xpose.msra.mxu0 0.0
    %3343 = vmatprep.subr.mxu0 0.0
    %3344 = vmatpush1.xpose.msra.mxu0 0.0
    %3345 = vmatprep.subr.mxu0 0.0
    %3346 = vmatpush1.xpose.msra.mxu0 0.0
    %3347 = vmatprep.subr.mxu0 0.0
    %3348 = vmatpush1.xpose.msra.mxu0 0.0
    %3349 = vmatprep.subr.mxu0 0.0
    %3350 = vmatpush1.xpose.msra.mxu0 0.0
    %3351 = vmatprep.subr.mxu0 0.0
    %3352 = vmatpush1.xpose.msra.mxu0 0.0
    %3353 = vmatprep.subr.mxu0 0.0
    %3354 = vmatpush1.xpose.msra.mxu0 0.0
    %3355 = vmatprep.subr.mxu0 0.0
    %3356 = vmatpush1.xpose.msra.mxu0 0.0
    %3357 = vmatprep.subr.mxu0 0.0
    %3358 = vmatpush1.xpose.msra.mxu0 0.0
    %3359 = vmatprep.subr.mxu0 0.0
    %3360 = vmatpush1.xpose.msra.mxu0 0.0
    %3361 = vmatprep.subr.mxu0 0.0
    %3362 = vmatpush1.xpose.msra.mxu0 0.0
    %3363 = vmatprep.subr.mxu0 0.0
    %3364 = vmatpush1.xpose.msra.mxu0 0.0
    %3365 = vmatprep.subr.mxu0 0.0
    %3366 = vmatpush1.xpose.msra.mxu0 0.0
    %3367 = vmatprep.subr.mxu0 0.0
    %3368 = vmatpush1.xpose.msra.mxu0 0.0
    %3369 = vmatprep.subr.mxu0 0.0
    %3370 = vmatpush1.xpose.msra.mxu0 0.0
    %3371 = vmatprep.subr.mxu0 0.0
    %3372 = vmatpush1.xpose.msra.mxu0 0.0
    %3373 = vmatprep.subr.mxu0 0.0
    %3374 = vmatpush1.xpose.msra.mxu0 0.0
    %3375 = vmatprep.mubr.f32.mxu0 0.0
    %3376 = vmatmul.mubr.f32.gmra.mrb[0].mxu0 %v3307
    %v3377 = vpop.f32.mrb[0].mxu0
    %v3378 = vadd.f32 %v225, %v3377
    %v3379 = vpop.f32.mrb[0].mxu0
    %3380 = vdwg.mxu0
    %v3381 = vsel %vm659, %v2900, 0
    %v3383 = vsel %vm659, %v2914, 0
    %3385 = vmatprep.subr.mxu0 0.0
    %3386 = vmatpush1.xpose.msra.mxu0 %v3383
    %3387 = vmatprep.subr.mxu0 0.0
    %3388 = vmatpush1.xpose.msra.mxu0 0.0
    %3389 = vmatprep.subr.mxu0 0.0
    %3390 = vmatpush1.xpose.msra.mxu0 0.0
    %3391 = vmatprep.subr.mxu0 0.0
    %3392 = vmatpush1.xpose.msra.mxu0 0.0
    %3393 = vmatprep.subr.mxu0 0.0
    %3394 = vmatpush1.xpose.msra.mxu0 0.0
    %3395 = vmatprep.subr.mxu0 0.0
    %3396 = vmatpush1.xpose.msra.mxu0 0.0
    %3397 = vmatprep.subr.mxu0 0.0
    %3398 = vmatpush1.xpose.msra.mxu0 0.0
    %3399 = vmatprep.subr.mxu0 0.0
    %3400 = vmatpush1.xpose.msra.mxu0 0.0
    %3401 = vmatprep.subr.mxu0 0.0
    %3402 = vmatpush1.xpose.msra.mxu0 0.0
    %3403 = vmatprep.subr.mxu0 0.0
    %3404 = vmatpush1.xpose.msra.mxu0 0.0
    %3405 = vmatprep.subr.mxu0 0.0
    %3406 = vmatpush1.xpose.msra.mxu0 0.0
    %3407 = vmatprep.subr.mxu0 0.0
    %3408 = vmatpush1.xpose.msra.mxu0 0.0
    %3409 = vmatprep.subr.mxu0 0.0
    %3410 = vmatpush1.xpose.msra.mxu0 0.0
    %3411 = vmatprep.subr.mxu0 0.0
    %3412 = vmatpush1.xpose.msra.mxu0 0.0
    %3413 = vmatprep.subr.mxu0 0.0
    %3414 = vmatpush1.xpose.msra.mxu0 0.0
    %3415 = vmatprep.subr.mxu0 0.0
    %3416 = vmatpush1.xpose.msra.mxu0 0.0
    %3417 = vmatprep.subr.mxu0 0.0
    %3418 = vmatpush1.xpose.msra.mxu0 0.0
    %3419 = vmatprep.subr.mxu0 0.0
    %3420 = vmatpush1.xpose.msra.mxu0 0.0
    %3421 = vmatprep.subr.mxu0 0.0
    %3422 = vmatpush1.xpose.msra.mxu0 0.0
    %3423 = vmatprep.subr.mxu0 0.0
    %3424 = vmatpush1.xpose.msra.mxu0 0.0
    %3425 = vmatprep.subr.mxu0 0.0
    %3426 = vmatpush1.xpose.msra.mxu0 0.0
    %3427 = vmatprep.subr.mxu0 0.0
    %3428 = vmatpush1.xpose.msra.mxu0 0.0
    %3429 = vmatprep.subr.mxu0 0.0
    %3430 = vmatpush1.xpose.msra.mxu0 0.0
    %3431 = vmatprep.subr.mxu0 0.0
    %3432 = vmatpush1.xpose.msra.mxu0 0.0
    %3433 = vmatprep.subr.mxu0 0.0
    %3434 = vmatpush1.xpose.msra.mxu0 0.0
    %3435 = vmatprep.subr.mxu0 0.0
    %3436 = vmatpush1.xpose.msra.mxu0 0.0
    %3437 = vmatprep.subr.mxu0 0.0
    %3438 = vmatpush1.xpose.msra.mxu0 0.0
    %3439 = vmatprep.subr.mxu0 0.0
    %3440 = vmatpush1.xpose.msra.mxu0 0.0
    %3441 = vmatprep.subr.mxu0 0.0
    %3442 = vmatpush1.xpose.msra.mxu0 0.0
    %3443 = vmatprep.subr.mxu0 0.0
    %3444 = vmatpush1.xpose.msra.mxu0 0.0
    %3445 = vmatprep.subr.mxu0 0.0
    %3446 = vmatpush1.xpose.msra.mxu0 0.0
    %3447 = vmatprep.subr.mxu0 0.0
    %3448 = vmatpush1.xpose.msra.mxu0 0.0
    %3449 = vmatprep.mubr.f32.mxu0 0.0
    %3450 = vmatmul.mubr.f32.gmra.mrb[0].mxu0 %v3381
    %v3451 = vpop.f32.mrb[0].mxu0
    %v3452 = vadd.f32 %v224, %v3451
    %v3453 = vpop.f32.mrb[0].mxu0
    %3454 = vdwg.mxu0
    %v3455 = vsel %vm659, %v2902, 0
    %v3457 = vsel %vm659, %v2916, 0
    %3459 = vmatprep.subr.mxu0 0.0
    %3460 = vmatpush1.xpose.msra.mxu0 %v3457
    %3461 = vmatprep.subr.mxu0 0.0
    %3462 = vmatpush1.xpose.msra.mxu0 0.0
    %3463 = vmatprep.subr.mxu0 0.0
    %3464 = vmatpush1.xpose.msra.mxu0 0.0
    %3465 = vmatprep.subr.mxu0 0.0
    %3466 = vmatpush1.xpose.msra.mxu0 0.0
    %3467 = vmatprep.subr.mxu0 0.0
    %3468 = vmatpush1.xpose.msra.mxu0 0.0
    %3469 = vmatprep.subr.mxu0 0.0
    %3470 = vmatpush1.xpose.msra.mxu0 0.0
    %3471 = vmatprep.subr.mxu0 0.0
    %3472 = vmatpush1.xpose.msra.mxu0 0.0
    %3473 = vmatprep.subr.mxu0 0.0
    %3474 = vmatpush1.xpose.msra.mxu0 0.0
    %3475 = vmatprep.subr.mxu0 0.0
    %3476 = vmatpush1.xpose.msra.mxu0 0.0
    %3477 = vmatprep.subr.mxu0 0.0
    %3478 = vmatpush1.xpose.msra.mxu0 0.0
    %3479 = vmatprep.subr.mxu0 0.0
    %3480 = vmatpush1.xpose.msra.mxu0 0.0
    %3481 = vmatprep.subr.mxu0 0.0
    %3482 = vmatpush1.xpose.msra.mxu0 0.0
    %3483 = vmatprep.subr.mxu0 0.0
    %3484 = vmatpush1.xpose.msra.mxu0 0.0
    %3485 = vmatprep.subr.mxu0 0.0
    %3486 = vmatpush1.xpose.msra.mxu0 0.0
    %3487 = vmatprep.subr.mxu0 0.0
    %3488 = vmatpush1.xpose.msra.mxu0 0.0
    %3489 = vmatprep.subr.mxu0 0.0
    %3490 = vmatpush1.xpose.msra.mxu0 0.0
    %3491 = vmatprep.subr.mxu0 0.0
    %3492 = vmatpush1.xpose.msra.mxu0 0.0
    %3493 = vmatprep.subr.mxu0 0.0
    %3494 = vmatpush1.xpose.msra.mxu0 0.0
    %3495 = vmatprep.subr.mxu0 0.0
    %3496 = vmatpush1.xpose.msra.mxu0 0.0
    %3497 = vmatprep.subr.mxu0 0.0
    %3498 = vmatpush1.xpose.msra.mxu0 0.0
    %3499 = vmatprep.subr.mxu0 0.0
    %3500 = vmatpush1.xpose.msra.mxu0 0.0
    %3501 = vmatprep.subr.mxu0 0.0
    %3502 = vmatpush1.xpose.msra.mxu0 0.0
    %3503 = vmatprep.subr.mxu0 0.0
    %3504 = vmatpush1.xpose.msra.mxu0 0.0
    %3505 = vmatprep.subr.mxu0 0.0
    %3506 = vmatpush1.xpose.msra.mxu0 0.0
    %3507 = vmatprep.subr.mxu0 0.0
    %3508 = vmatpush1.xpose.msra.mxu0 0.0
    %3509 = vmatprep.subr.mxu0 0.0
    %3510 = vmatpush1.xpose.msra.mxu0 0.0
    %3511 = vmatprep.subr.mxu0 0.0
    %3512 = vmatpush1.xpose.msra.mxu0 0.0
    %3513 = vmatprep.subr.mxu0 0.0
    %3514 = vmatpush1.xpose.msra.mxu0 0.0
    %3515 = vmatprep.subr.mxu0 0.0
    %3516 = vmatpush1.xpose.msra.mxu0 0.0
    %3517 = vmatprep.subr.mxu0 0.0
    %3518 = vmatpush1.xpose.msra.mxu0 0.0
    %3519 = vmatprep.subr.mxu0 0.0
    %3520 = vmatpush1.xpose.msra.mxu0 0.0
    %3521 = vmatprep.subr.mxu0 0.0
    %3522 = vmatpush1.xpose.msra.mxu0 0.0
    %3523 = vmatprep.mubr.f32.mxu0 0.0
    %3524 = vmatmul.mubr.f32.gmra.mrb[0].mxu0 %v3455
    %v3525 = vpop.f32.mrb[0].mxu0
    %v3526 = vadd.f32 %v225, %v3525
    %v3527 = vpop.f32.mrb[0].mxu0
    %3528 = vdwg.mxu0
    %v3529 = vsel %vm659, %v3008, -inf
    %3530 = vmax.xlane.f32.xlu0 %v3529
    %v3531 = vpop.xlane.xlu0 %3530
    %v3532 = vsel %vm659, %v3082, -inf
    %3533 = vmax.xlane.f32.xlu0 %v3532
    %v3534 = vpop.xlane.xlu0 %3533
    %v3535 = vsel %vm659, %v3156, -inf
    %3536 = vmax.xlane.f32.xlu0 %v3535
    %v3537 = vpop.xlane.xlu0 %3536
    %v3538 = vsel %vm659, %v3230, -inf
    %3539 = vmax.xlane.f32.xlu0 %v3538
    %v3540 = vpop.xlane.xlu0 %3539
    %v3541 = vsel %vm659, %v3304, -inf
    %3542 = vmax.xlane.f32.xlu0 %v3541
    %v3543 = vpop.xlane.xlu0 %3542
    %v3544 = vsel %vm659, %v3378, -inf
    %3545 = vmax.xlane.f32.xlu0 %v3544
    %v3546 = vpop.xlane.xlu0 %3545
    %v3547 = vsel %vm659, %v3452, -inf
    %3548 = vmax.xlane.f32.xlu0 %v3547
    %v3549 = vpop.xlane.xlu0 %3548
    %v3550 = vsel %vm659, %v3526, -inf
    %3551 = vmax.xlane.f32.xlu0 %v3550
    %v3552 = vpop.xlane.xlu0 %3551
    %v3553 = vsub.f32 %v3008, %v3531
    %v3554 = vsub.f32 %v3082, %v3534
    %v3555 = vsub.f32 %v3156, %v3537
    %v3556 = vsub.f32 %v3230, %v3540
    %v3557 = vsub.f32 %v3304, %v3543
    %v3558 = vsub.f32 %v3378, %v3546
    %v3559 = vsub.f32 %v3452, %v3549
    %v3560 = vsub.f32 %v3526, %v3552
    %v3561 = vmul.f32 %v3553, 1.442695
    %v3562 = vpow.pop %v3561
    %v3563 = vmul.f32 %v3554, 1.442695
    %v3564 = vpow.pop %v3563
    %v3565 = vmul.f32 %v3555, 1.442695
    %v3566 = vpow.pop %v3565
    %v3567 = vmul.f32 %v3556, 1.442695
    %v3568 = vpow.pop %v3567
    %v3569 = vmul.f32 %v3557, 1.442695
    %v3570 = vpow.pop %v3569
    %v3571 = vmul.f32 %v3558, 1.442695
    %v3572 = vpow.pop %v3571
    %v3573 = vmul.f32 %v3559, 1.442695
    %v3574 = vpow.pop %v3573
    %v3575 = vmul.f32 %v3560, 1.442695
    %v3576 = vpow.pop %v3575
    %v3577 = vsel %vm659, %v3562, 0.0
    %3578 = vadd.xlane.f32.xlu0 %v3577
    %v3579 = vpop.xlane.xlu0 %3578
    %v3580 = vsel %vm659, %v3564, 0.0
    %3581 = vadd.xlane.f32.xlu0 %v3580
    %v3582 = vpop.xlane.xlu0 %3581
    %v3583 = vsel %vm659, %v3566, 0.0
    %3584 = vadd.xlane.f32.xlu0 %v3583
    %v3585 = vpop.xlane.xlu0 %3584
    %v3586 = vsel %vm659, %v3568, 0.0
    %3587 = vadd.xlane.f32.xlu0 %v3586
    %v3588 = vpop.xlane.xlu0 %3587
    %v3589 = vsel %vm659, %v3570, 0.0
    %3590 = vadd.xlane.f32.xlu0 %v3589
    %v3591 = vpop.xlane.xlu0 %3590
    %v3592 = vsel %vm659, %v3572, 0.0
    %3593 = vadd.xlane.f32.xlu0 %v3592
    %v3594 = vpop.xlane.xlu0 %3593
    %v3595 = vsel %vm659, %v3574, 0.0
    %3596 = vadd.xlane.f32.xlu0 %v3595
    %v3597 = vpop.xlane.xlu0 %3596
    %v3598 = vsel %vm659, %v3576, 0.0
    %3599 = vadd.xlane.f32.xlu0 %v3598
    %v3600 = vpop.xlane.xlu0 %3599
    %v3601 = vrcp.pop %v3579
    %v3602 = vrcp.pop %v3582
    %v3603 = vrcp.pop %v3585
    %v3604 = vrcp.pop %v3588
    %v3605 = vrcp.pop %v3591
    %v3606 = vrcp.pop %v3594
    %v3607 = vrcp.pop %v3597
    %v3608 = vrcp.pop %v3600
    %v3609 = vmul.f32 %v3562, %v3601
    %v3610 = vmul.f32 %v3564, %v3602
    %v3611 = vmul.f32 %v3566, %v3603
    %v3612 = vmul.f32 %v3568, %v3604
    %v3613 = vmul.f32 %v3570, %v3605
    %v3614 = vmul.f32 %v3572, %v3606
    %v3615 = vmul.f32 %v3574, %v3607
    %v3616 = vmul.f32 %v3576, %v3608
    %v3618 = vsel %vm659, %v3609, 0
    %3620 = vmatprep.subr.mxu0 0.0
    %3621 = vmatpush1.msra.mxu0 %v2719
    %3622 = vmatprep.subr.mxu0 0.0
    %3623 = vmatpush1.msra.mxu0 0.0
    %3624 = vmatprep.subr.mxu0 0.0
    %3625 = vmatpush1.msra.mxu0 0.0
    %3626 = vmatprep.subr.mxu0 0.0
    %3627 = vmatpush1.msra.mxu0 0.0
    %3628 = vmatprep.subr.mxu0 0.0
    %3629 = vmatpush1.msra.mxu0 0.0
    %3630 = vmatprep.subr.mxu0 0.0
    %3631 = vmatpush1.msra.mxu0 0.0
    %3632 = vmatprep.subr.mxu0 0.0
    %3633 = vmatpush1.msra.mxu0 0.0
    %3634 = vmatprep.subr.mxu0 0.0
    %3635 = vmatpush1.msra.mxu0 0.0
    %3636 = vmatprep.subr.mxu0 0.0
    %3637 = vmatpush1.msra.mxu0 0.0
    %3638 = vmatprep.subr.mxu0 0.0
    %3639 = vmatpush1.msra.mxu0 0.0
    %3640 = vmatprep.subr.mxu0 0.0
    %3641 = vmatpush1.msra.mxu0 0.0
    %3642 = vmatprep.subr.mxu0 0.0
    %3643 = vmatpush1.msra.mxu0 0.0
    %3644 = vmatprep.subr.mxu0 0.0
    %3645 = vmatpush1.msra.mxu0 0.0
    %3646 = vmatprep.subr.mxu0 0.0
    %3647 = vmatpush1.msra.mxu0 0.0
    %3648 = vmatprep.subr.mxu0 0.0
    %3649 = vmatpush1.msra.mxu0 0.0
    %3650 = vmatprep.subr.mxu0 0.0
    %3651 = vmatpush1.msra.mxu0 0.0
    %3652 = vmatprep.subr.mxu0 0.0
    %3653 = vmatpush1.msra.mxu0 0.0
    %3654 = vmatprep.subr.mxu0 0.0
    %3655 = vmatpush1.msra.mxu0 0.0
    %3656 = vmatprep.subr.mxu0 0.0
    %3657 = vmatpush1.msra.mxu0 0.0
    %3658 = vmatprep.subr.mxu0 0.0
    %3659 = vmatpush1.msra.mxu0 0.0
    %3660 = vmatprep.subr.mxu0 0.0
    %3661 = vmatpush1.msra.mxu0 0.0
    %3662 = vmatprep.subr.mxu0 0.0
    %3663 = vmatpush1.msra.mxu0 0.0
    %3664 = vmatprep.subr.mxu0 0.0
    %3665 = vmatpush1.msra.mxu0 0.0
    %3666 = vmatprep.subr.mxu0 0.0
    %3667 = vmatpush1.msra.mxu0 0.0
    %3668 = vmatprep.subr.mxu0 0.0
    %3669 = vmatpush1.msra.mxu0 0.0
    %3670 = vmatprep.subr.mxu0 0.0
    %3671 = vmatpush1.msra.mxu0 0.0
    %3672 = vmatprep.subr.mxu0 0.0
    %3673 = vmatpush1.msra.mxu0 0.0
    %3674 = vmatprep.subr.mxu0 0.0
    %3675 = vmatpush1.msra.mxu0 0.0
    %3676 = vmatprep.subr.mxu0 0.0
    %3677 = vmatpush1.msra.mxu0 0.0
    %3678 = vmatprep.subr.mxu0 0.0
    %3679 = vmatpush1.msra.mxu0 0.0
    %3680 = vmatprep.subr.mxu0 0.0
    %3681 = vmatpush1.msra.mxu0 0.0
    %3682 = vmatprep.subr.mxu0 0.0
    %3683 = vmatpush1.msra.mxu0 0.0
    %3684 = vmatprep.mubr.f32.mxu0 0.0
    %3685 = vmatmul.mubr.f32.gmra.mrb[0].mxu0 %v3618
    %v3686 = vpop.f32.mrb[0].mxu0
    %v3687 = vadd.f32 0.0, %v3686
    %v3688 = vpop.f32.mrb[0].mxu0
    %3689 = vdwg.mxu0
    %v3691 = vsel %vm659, %v3610, 0
    %3693 = vmatprep.subr.mxu0 0.0
    %3694 = vmatpush1.msra.mxu0 %v2724
    %3695 = vmatprep.subr.mxu0 0.0
    %3696 = vmatpush1.msra.mxu0 0.0
    %3697 = vmatprep.subr.mxu0 0.0
    %3698 = vmatpush1.msra.mxu0 0.0
    %3699 = vmatprep.subr.mxu0 0.0
    %3700 = vmatpush1.msra.mxu0 0.0
    %3701 = vmatprep.subr.mxu0 0.0
    %3702 = vmatpush1.msra.mxu0 0.0
    %3703 = vmatprep.subr.mxu0 0.0
    %3704 = vmatpush1.msra.mxu0 0.0
    %3705 = vmatprep.subr.mxu0 0.0
    %3706 = vmatpush1.msra.mxu0 0.0
    %3707 = vmatprep.subr.mxu0 0.0
    %3708 = vmatpush1.msra.mxu0 0.0
    %3709 = vmatprep.subr.mxu0 0.0
    %3710 = vmatpush1.msra.mxu0 0.0
    %3711 = vmatprep.subr.mxu0 0.0
    %3712 = vmatpush1.msra.mxu0 0.0
    %3713 = vmatprep.subr.mxu0 0.0
    %3714 = vmatpush1.msra.mxu0 0.0
    %3715 = vmatprep.subr.mxu0 0.0
    %3716 = vmatpush1.msra.mxu0 0.0
    %3717 = vmatprep.subr.mxu0 0.0
    %3718 = vmatpush1.msra.mxu0 0.0
    %3719 = vmatprep.subr.mxu0 0.0
    %3720 = vmatpush1.msra.mxu0 0.0
    %3721 = vmatprep.subr.mxu0 0.0
    %3722 = vmatpush1.msra.mxu0 0.0
    %3723 = vmatprep.subr.mxu0 0.0
    %3724 = vmatpush1.msra.mxu0 0.0
    %3725 = vmatprep.subr.mxu0 0.0
    %3726 = vmatpush1.msra.mxu0 0.0
    %3727 = vmatprep.subr.mxu0 0.0
    %3728 = vmatpush1.msra.mxu0 0.0
    %3729 = vmatprep.subr.mxu0 0.0
    %3730 = vmatpush1.msra.mxu0 0.0
    %3731 = vmatprep.subr.mxu0 0.0
    %3732 = vmatpush1.msra.mxu0 0.0
    %3733 = vmatprep.subr.mxu0 0.0
    %3734 = vmatpush1.msra.mxu0 0.0
    %3735 = vmatprep.subr.mxu0 0.0
    %3736 = vmatpush1.msra.mxu0 0.0
    %3737 = vmatprep.subr.mxu0 0.0
    %3738 = vmatpush1.msra.mxu0 0.0
    %3739 = vmatprep.subr.mxu0 0.0
    %3740 = vmatpush1.msra.mxu0 0.0
    %3741 = vmatprep.subr.mxu0 0.0
    %3742 = vmatpush1.msra.mxu0 0.0
    %3743 = vmatprep.subr.mxu0 0.0
    %3744 = vmatpush1.msra.mxu0 0.0
    %3745 = vmatprep.subr.mxu0 0.0
    %3746 = vmatpush1.msra.mxu0 0.0
    %3747 = vmatprep.subr.mxu0 0.0
    %3748 = vmatpush1.msra.mxu0 0.0
    %3749 = vmatprep.subr.mxu0 0.0
    %3750 = vmatpush1.msra.mxu0 0.0
    %3751 = vmatprep.subr.mxu0 0.0
    %3752 = vmatpush1.msra.mxu0 0.0
    %3753 = vmatprep.subr.mxu0 0.0
    %3754 = vmatpush1.msra.mxu0 0.0
    %3755 = vmatprep.subr.mxu0 0.0
    %3756 = vmatpush1.msra.mxu0 0.0
    %3757 = vmatprep.mubr.f32.mxu0 0.0
    %3758 = vmatmul.mubr.f32.gmra.mrb[0].mxu0 %v3691
    %v3759 = vpop.f32.mrb[0].mxu0
    %v3760 = vadd.f32 0.0, %v3759
    %v3761 = vpop.f32.mrb[0].mxu0
    %3762 = vdwg.mxu0
    %v3764 = vsel %vm659, %v3611, 0
    %3766 = vmatprep.subr.mxu0 0.0
    %3767 = vmatpush1.msra.mxu0 %v2920
    %3768 = vmatprep.subr.mxu0 0.0
    %3769 = vmatpush1.msra.mxu0 0.0
    %3770 = vmatprep.subr.mxu0 0.0
    %3771 = vmatpush1.msra.mxu0 0.0
    %3772 = vmatprep.subr.mxu0 0.0
    %3773 = vmatpush1.msra.mxu0 0.0
    %3774 = vmatprep.subr.mxu0 0.0
    %3775 = vmatpush1.msra.mxu0 0.0
    %3776 = vmatprep.subr.mxu0 0.0
    %3777 = vmatpush1.msra.mxu0 0.0
    %3778 = vmatprep.subr.mxu0 0.0
    %3779 = vmatpush1.msra.mxu0 0.0
    %3780 = vmatprep.subr.mxu0 0.0
    %3781 = vmatpush1.msra.mxu0 0.0
    %3782 = vmatprep.subr.mxu0 0.0
    %3783 = vmatpush1.msra.mxu0 0.0
    %3784 = vmatprep.subr.mxu0 0.0
    %3785 = vmatpush1.msra.mxu0 0.0
    %3786 = vmatprep.subr.mxu0 0.0
    %3787 = vmatpush1.msra.mxu0 0.0
    %3788 = vmatprep.subr.mxu0 0.0
    %3789 = vmatpush1.msra.mxu0 0.0
    %3790 = vmatprep.subr.mxu0 0.0
    %3791 = vmatpush1.msra.mxu0 0.0
    %3792 = vmatprep.subr.mxu0 0.0
    %3793 = vmatpush1.msra.mxu0 0.0
    %3794 = vmatprep.subr.mxu0 0.0
    %3795 = vmatpush1.msra.mxu0 0.0
    %3796 = vmatprep.subr.mxu0 0.0
    %3797 = vmatpush1.msra.mxu0 0.0
    %3798 = vmatprep.subr.mxu0 0.0
    %3799 = vmatpush1.msra.mxu0 0.0
    %3800 = vmatprep.subr.mxu0 0.0
    %3801 = vmatpush1.msra.mxu0 0.0
    %3802 = vmatprep.subr.mxu0 0.0
    %3803 = vmatpush1.msra.mxu0 0.0
    %3804 = vmatprep.subr.mxu0 0.0
    %3805 = vmatpush1.msra.mxu0 0.0
    %3806 = vmatprep.subr.mxu0 0.0
    %3807 = vmatpush1.msra.mxu0 0.0
    %3808 = vmatprep.subr.mxu0 0.0
    %3809 = vmatpush1.msra.mxu0 0.0
    %3810 = vmatprep.subr.mxu0 0.0
    %3811 = vmatpush1.msra.mxu0 0.0
    %3812 = vmatprep.subr.mxu0 0.0
    %3813 = vmatpush1.msra.mxu0 0.0
    %3814 = vmatprep.subr.mxu0 0.0
    %3815 = vmatpush1.msra.mxu0 0.0
    %3816 = vmatprep.subr.mxu0 0.0
    %3817 = vmatpush1.msra.mxu0 0.0
    %3818 = vmatprep.subr.mxu0 0.0
    %3819 = vmatpush1.msra.mxu0 0.0
    %3820 = vmatprep.subr.mxu0 0.0
    %3821 = vmatpush1.msra.mxu0 0.0
    %3822 = vmatprep.subr.mxu0 0.0
    %3823 = vmatpush1.msra.mxu0 0.0
    %3824 = vmatprep.subr.mxu0 0.0
    %3825 = vmatpush1.msra.mxu0 0.0
    %3826 = vmatprep.subr.mxu0 0.0
    %3827 = vmatpush1.msra.mxu0 0.0
    %3828 = vmatprep.subr.mxu0 0.0
    %3829 = vmatpush1.msra.mxu0 0.0
    %3830 = vmatprep.mubr.f32.mxu0 0.0
    %3831 = vmatmul.mubr.f32.gmra.mrb[0].mxu0 %v3764
    %v3832 = vpop.f32.mrb[0].mxu0
    %v3833 = vadd.f32 0.0, %v3832
    %v3834 = vpop.f32.mrb[0].mxu0
    %3835 = vdwg.mxu0
    %v3837 = vsel %vm659, %v3612, 0
    %3839 = vmatprep.subr.mxu0 0.0
    %3840 = vmatpush1.msra.mxu0 %v2922
    %3841 = vmatprep.subr.mxu0 0.0
    %3842 = vmatpush1.msra.mxu0 0.0
    %3843 = vmatprep.subr.mxu0 0.0
    %3844 = vmatpush1.msra.mxu0 0.0
    %3845 = vmatprep.subr.mxu0 0.0
    %3846 = vmatpush1.msra.mxu0 0.0
    %3847 = vmatprep.subr.mxu0 0.0
    %3848 = vmatpush1.msra.mxu0 0.0
    %3849 = vmatprep.subr.mxu0 0.0
    %3850 = vmatpush1.msra.mxu0 0.0
    %3851 = vmatprep.subr.mxu0 0.0
    %3852 = vmatpush1.msra.mxu0 0.0
    %3853 = vmatprep.subr.mxu0 0.0
    %3854 = vmatpush1.msra.mxu0 0.0
    %3855 = vmatprep.subr.mxu0 0.0
    %3856 = vmatpush1.msra.mxu0 0.0
    %3857 = vmatprep.subr.mxu0 0.0
    %3858 = vmatpush1.msra.mxu0 0.0
    %3859 = vmatprep.subr.mxu0 0.0
    %3860 = vmatpush1.msra.mxu0 0.0
    %3861 = vmatprep.subr.mxu0 0.0
    %3862 = vmatpush1.msra.mxu0 0.0
    %3863 = vmatprep.subr.mxu0 0.0
    %3864 = vmatpush1.msra.mxu0 0.0
    %3865 = vmatprep.subr.mxu0 0.0
    %3866 = vmatpush1.msra.mxu0 0.0
    %3867 = vmatprep.subr.mxu0 0.0
    %3868 = vmatpush1.msra.mxu0 0.0
    %3869 = vmatprep.subr.mxu0 0.0
    %3870 = vmatpush1.msra.mxu0 0.0
    %3871 = vmatprep.subr.mxu0 0.0
    %3872 = vmatpush1.msra.mxu0 0.0
    %3873 = vmatprep.subr.mxu0 0.0
    %3874 = vmatpush1.msra.mxu0 0.0
    %3875 = vmatprep.subr.mxu0 0.0
    %3876 = vmatpush1.msra.mxu0 0.0
    %3877 = vmatprep.subr.mxu0 0.0
    %3878 = vmatpush1.msra.mxu0 0.0
    %3879 = vmatprep.subr.mxu0 0.0
    %3880 = vmatpush1.msra.mxu0 0.0
    %3881 = vmatprep.subr.mxu0 0.0
    %3882 = vmatpush1.msra.mxu0 0.0
    %3883 = vmatprep.subr.mxu0 0.0
    %3884 = vmatpush1.msra.mxu0 0.0
    %3885 = vmatprep.subr.mxu0 0.0
    %3886 = vmatpush1.msra.mxu0 0.0
    %3887 = vmatprep.subr.mxu0 0.0
    %3888 = vmatpush1.msra.mxu0 0.0
    %3889 = vmatprep.subr.mxu0 0.0
    %3890 = vmatpush1.msra.mxu0 0.0
    %3891 = vmatprep.subr.mxu0 0.0
    %3892 = vmatpush1.msra.mxu0 0.0
    %3893 = vmatprep.subr.mxu0 0.0
    %3894 = vmatpush1.msra.mxu0 0.0
    %3895 = vmatprep.subr.mxu0 0.0
    %3896 = vmatpush1.msra.mxu0 0.0
    %3897 = vmatprep.subr.mxu0 0.0
    %3898 = vmatpush1.msra.mxu0 0.0
    %3899 = vmatprep.subr.mxu0 0.0
    %3900 = vmatpush1.msra.mxu0 0.0
    %3901 = vmatprep.subr.mxu0 0.0
    %3902 = vmatpush1.msra.mxu0 0.0
    %3903 = vmatprep.mubr.f32.mxu0 0.0
    %3904 = vmatmul.mubr.f32.gmra.mrb[0].mxu0 %v3837
    %v3905 = vpop.f32.mrb[0].mxu0
    %v3906 = vadd.f32 0.0, %v3905
    %v3907 = vpop.f32.mrb[0].mxu0
    %3908 = vdwg.mxu0
    %v3910 = vsel %vm659, %v3613, 0
    %3912 = vmatprep.subr.mxu0 0.0
    %3913 = vmatpush1.msra.mxu0 %v2926
    %3914 = vmatprep.subr.mxu0 0.0
    %3915 = vmatpush1.msra.mxu0 0.0
    %3916 = vmatprep.subr.mxu0 0.0
    %3917 = vmatpush1.msra.mxu0 0.0
    %3918 = vmatprep.subr.mxu0 0.0
    %3919 = vmatpush1.msra.mxu0 0.0
    %3920 = vmatprep.subr.mxu0 0.0
    %3921 = vmatpush1.msra.mxu0 0.0
    %3922 = vmatprep.subr.mxu0 0.0
    %3923 = vmatpush1.msra.mxu0 0.0
    %3924 = vmatprep.subr.mxu0 0.0
    %3925 = vmatpush1.msra.mxu0 0.0
    %3926 = vmatprep.subr.mxu0 0.0
    %3927 = vmatpush1.msra.mxu0 0.0
    %3928 = vmatprep.subr.mxu0 0.0
    %3929 = vmatpush1.msra.mxu0 0.0
    %3930 = vmatprep.subr.mxu0 0.0
    %3931 = vmatpush1.msra.mxu0 0.0
    %3932 = vmatprep.subr.mxu0 0.0
    %3933 = vmatpush1.msra.mxu0 0.0
    %3934 = vmatprep.subr.mxu0 0.0
    %3935 = vmatpush1.msra.mxu0 0.0
    %3936 = vmatprep.subr.mxu0 0.0
    %3937 = vmatpush1.msra.mxu0 0.0
    %3938 = vmatprep.subr.mxu0 0.0
    %3939 = vmatpush1.msra.mxu0 0.0
    %3940 = vmatprep.subr.mxu0 0.0
    %3941 = vmatpush1.msra.mxu0 0.0
    %3942 = vmatprep.subr.mxu0 0.0
    %3943 = vmatpush1.msra.mxu0 0.0
    %3944 = vmatprep.subr.mxu0 0.0
    %3945 = vmatpush1.msra.mxu0 0.0
    %3946 = vmatprep.subr.mxu0 0.0
    %3947 = vmatpush1.msra.mxu0 0.0
    %3948 = vmatprep.subr.mxu0 0.0
    %3949 = vmatpush1.msra.mxu0 0.0
    %3950 = vmatprep.subr.mxu0 0.0
    %3951 = vmatpush1.msra.mxu0 0.0
    %3952 = vmatprep.subr.mxu0 0.0
    %3953 = vmatpush1.msra.mxu0 0.0
    %3954 = vmatprep.subr.mxu0 0.0
    %3955 = vmatpush1.msra.mxu0 0.0
    %3956 = vmatprep.subr.mxu0 0.0
    %3957 = vmatpush1.msra.mxu0 0.0
    %3958 = vmatprep.subr.mxu0 0.0
    %3959 = vmatpush1.msra.mxu0 0.0
    %3960 = vmatprep.subr.mxu0 0.0
    %3961 = vmatpush1.msra.mxu0 0.0
    %3962 = vmatprep.subr.mxu0 0.0
    %3963 = vmatpush1.msra.mxu0 0.0
    %3964 = vmatprep.subr.mxu0 0.0
    %3965 = vmatpush1.msra.mxu0 0.0
    %3966 = vmatprep.subr.mxu0 0.0
    %3967 = vmatpush1.msra.mxu0 0.0
    %3968 = vmatprep.subr.mxu0 0.0
    %3969 = vmatpush1.msra.mxu0 0.0
    %3970 = vmatprep.subr.mxu0 0.0
    %3971 = vmatpush1.msra.mxu0 0.0
    %3972 = vmatprep.subr.mxu0 0.0
    %3973 = vmatpush1.msra.mxu0 0.0
    %3974 = vmatprep.subr.mxu0 0.0
    %3975 = vmatpush1.msra.mxu0 0.0
    %3976 = vmatprep.mubr.f32.mxu0 0.0
    %3977 = vmatmul.mubr.f32.gmra.mrb[0].mxu0 %v3910
    %v3978 = vpop.f32.mrb[0].mxu0
    %v3979 = vadd.f32 0.0, %v3978
    %v3980 = vpop.f32.mrb[0].mxu0
    %3981 = vdwg.mxu0
    %v3983 = vsel %vm659, %v3614, 0
    %3985 = vmatprep.subr.mxu0 0.0
    %3986 = vmatpush1.msra.mxu0 %v2928
    %3987 = vmatprep.subr.mxu0 0.0
    %3988 = vmatpush1.msra.mxu0 0.0
    %3989 = vmatprep.subr.mxu0 0.0
    %3990 = vmatpush1.msra.mxu0 0.0
    %3991 = vmatprep.subr.mxu0 0.0
    %3992 = vmatpush1.msra.mxu0 0.0
    %3993 = vmatprep.subr.mxu0 0.0
    %3994 = vmatpush1.msra.mxu0 0.0
    %3995 = vmatprep.subr.mxu0 0.0
    %3996 = vmatpush1.msra.mxu0 0.0
    %3997 = vmatprep.subr.mxu0 0.0
    %3998 = vmatpush1.msra.mxu0 0.0
    %3999 = vmatprep.subr.mxu0 0.0
    %4000 = vmatpush1.msra.mxu0 0.0
    %4001 = vmatprep.subr.mxu0 0.0
    %4002 = vmatpush1.msra.mxu0 0.0
    %4003 = vmatprep.subr.mxu0 0.0
    %4004 = vmatpush1.msra.mxu0 0.0
    %4005 = vmatprep.subr.mxu0 0.0
    %4006 = vmatpush1.msra.mxu0 0.0
    %4007 = vmatprep.subr.mxu0 0.0
    %4008 = vmatpush1.msra.mxu0 0.0
    %4009 = vmatprep.subr.mxu0 0.0
    %4010 = vmatpush1.msra.mxu0 0.0
    %4011 = vmatprep.subr.mxu0 0.0
    %4012 = vmatpush1.msra.mxu0 0.0
    %4013 = vmatprep.subr.mxu0 0.0
    %4014 = vmatpush1.msra.mxu0 0.0
    %4015 = vmatprep.subr.mxu0 0.0
    %4016 = vmatpush1.msra.mxu0 0.0
    %4017 = vmatprep.subr.mxu0 0.0
    %4018 = vmatpush1.msra.mxu0 0.0
    %4019 = vmatprep.subr.mxu0 0.0
    %4020 = vmatpush1.msra.mxu0 0.0
    %4021 = vmatprep.subr.mxu0 0.0
    %4022 = vmatpush1.msra.mxu0 0.0
    %4023 = vmatprep.subr.mxu0 0.0
    %4024 = vmatpush1.msra.mxu0 0.0
    %4025 = vmatprep.subr.mxu0 0.0
    %4026 = vmatpush1.msra.mxu0 0.0
    %4027 = vmatprep.subr.mxu0 0.0
    %4028 = vmatpush1.msra.mxu0 0.0
    %4029 = vmatprep.subr.mxu0 0.0
    %4030 = vmatpush1.msra.mxu0 0.0
    %4031 = vmatprep.subr.mxu0 0.0
    %4032 = vmatpush1.msra.mxu0 0.0
    %4033 = vmatprep.subr.mxu0 0.0
    %4034 = vmatpush1.msra.mxu0 0.0
    %4035 = vmatprep.subr.mxu0 0.0
    %4036 = vmatpush1.msra.mxu0 0.0
    %4037 = vmatprep.subr.mxu0 0.0
    %4038 = vmatpush1.msra.mxu0 0.0
    %4039 = vmatprep.subr.mxu0 0.0
    %4040 = vmatpush1.msra.mxu0 0.0
    %4041 = vmatprep.subr.mxu0 0.0
    %4042 = vmatpush1.msra.mxu0 0.0
    %4043 = vmatprep.subr.mxu0 0.0
    %4044 = vmatpush1.msra.mxu0 0.0
    %4045 = vmatprep.subr.mxu0 0.0
    %4046 = vmatpush1.msra.mxu0 0.0
    %4047 = vmatprep.subr.mxu0 0.0
    %4048 = vmatpush1.msra.mxu0 0.0
    %4049 = vmatprep.mubr.f32.mxu0 0.0
    %4050 = vmatmul.mubr.f32.gmra.mrb[0].mxu0 %v3983
    %v4051 = vpop.f32.mrb[0].mxu0
    %v4052 = vadd.f32 0.0, %v4051
    %v4053 = vpop.f32.mrb[0].mxu0
    %4054 = vdwg.mxu0
    %v4056 = vsel %vm659, %v3615, 0
    %4058 = vmatprep.subr.mxu0 0.0
    %4059 = vmatpush1.msra.mxu0 %v2932
    %4060 = vmatprep.subr.mxu0 0.0
    %4061 = vmatpush1.msra.mxu0 0.0
    %4062 = vmatprep.subr.mxu0 0.0
    %4063 = vmatpush1.msra.mxu0 0.0
    %4064 = vmatprep.subr.mxu0 0.0
    %4065 = vmatpush1.msra.mxu0 0.0
    %4066 = vmatprep.subr.mxu0 0.0
    %4067 = vmatpush1.msra.mxu0 0.0
    %4068 = vmatprep.subr.mxu0 0.0
    %4069 = vmatpush1.msra.mxu0 0.0
    %4070 = vmatprep.subr.mxu0 0.0
    %4071 = vmatpush1.msra.mxu0 0.0
    %4072 = vmatprep.subr.mxu0 0.0
    %4073 = vmatpush1.msra.mxu0 0.0
    %4074 = vmatprep.subr.mxu0 0.0
    %4075 = vmatpush1.msra.mxu0 0.0
    %4076 = vmatprep.subr.mxu0 0.0
    %4077 = vmatpush1.msra.mxu0 0.0
    %4078 = vmatprep.subr.mxu0 0.0
    %4079 = vmatpush1.msra.mxu0 0.0
    %4080 = vmatprep.subr.mxu0 0.0
    %4081 = vmatpush1.msra.mxu0 0.0
    %4082 = vmatprep.subr.mxu0 0.0
    %4083 = vmatpush1.msra.mxu0 0.0
    %4084 = vmatprep.subr.mxu0 0.0
    %4085 = vmatpush1.msra.mxu0 0.0
    %4086 = vmatprep.subr.mxu0 0.0
    %4087 = vmatpush1.msra.mxu0 0.0
    %4088 = vmatprep.subr.mxu0 0.0
    %4089 = vmatpush1.msra.mxu0 0.0
    %4090 = vmatprep.subr.mxu0 0.0
    %4091 = vmatpush1.msra.mxu0 0.0
    %4092 = vmatprep.subr.mxu0 0.0
    %4093 = vmatpush1.msra.mxu0 0.0
    %4094 = vmatprep.subr.mxu0 0.0
    %4095 = vmatpush1.msra.mxu0 0.0
    %4096 = vmatprep.subr.mxu0 0.0
    %4097 = vmatpush1.msra.mxu0 0.0
    %4098 = vmatprep.subr.mxu0 0.0
    %4099 = vmatpush1.msra.mxu0 0.0
    %4100 = vmatprep.subr.mxu0 0.0
    %4101 = vmatpush1.msra.mxu0 0.0
    %4102 = vmatprep.subr.mxu0 0.0
    %4103 = vmatpush1.msra.mxu0 0.0
    %4104 = vmatprep.subr.mxu0 0.0
    %4105 = vmatpush1.msra.mxu0 0.0
    %4106 = vmatprep.subr.mxu0 0.0
    %4107 = vmatpush1.msra.mxu0 0.0
    %4108 = vmatprep.subr.mxu0 0.0
    %4109 = vmatpush1.msra.mxu0 0.0
    %4110 = vmatprep.subr.mxu0 0.0
    %4111 = vmatpush1.msra.mxu0 0.0
    %4112 = vmatprep.subr.mxu0 0.0
    %4113 = vmatpush1.msra.mxu0 0.0
    %4114 = vmatprep.subr.mxu0 0.0
    %4115 = vmatpush1.msra.mxu0 0.0
    %4116 = vmatprep.subr.mxu0 0.0
    %4117 = vmatpush1.msra.mxu0 0.0
    %4118 = vmatprep.subr.mxu0 0.0
    %4119 = vmatpush1.msra.mxu0 0.0
    %4120 = vmatprep.subr.mxu0 0.0
    %4121 = vmatpush1.msra.mxu0 0.0
    %4122 = vmatprep.mubr.f32.mxu0 0.0
    %4123 = vmatmul.mubr.f32.gmra.mrb[0].mxu0 %v4056
    %v4124 = vpop.f32.mrb[0].mxu0
    %v4125 = vadd.f32 0.0, %v4124
    %v4126 = vpop.f32.mrb[0].mxu0
    %4127 = vdwg.mxu0
    %v4129 = vsel %vm659, %v3616, 0
    %4131 = vmatprep.subr.mxu0 0.0
    %4132 = vmatpush1.msra.mxu0 %v2934
    %4133 = vmatprep.subr.mxu0 0.0
    %4134 = vmatpush1.msra.mxu0 0.0
    %4135 = vmatprep.subr.mxu0 0.0
    %4136 = vmatpush1.msra.mxu0 0.0
    %4137 = vmatprep.subr.mxu0 0.0
    %4138 = vmatpush1.msra.mxu0 0.0
    %4139 = vmatprep.subr.mxu0 0.0
    %4140 = vmatpush1.msra.mxu0 0.0
    %4141 = vmatprep.subr.mxu0 0.0
    %4142 = vmatpush1.msra.mxu0 0.0
    %4143 = vmatprep.subr.mxu0 0.0
    %4144 = vmatpush1.msra.mxu0 0.0
    %4145 = vmatprep.subr.mxu0 0.0
    %4146 = vmatpush1.msra.mxu0 0.0
    %4147 = vmatprep.subr.mxu0 0.0
    %4148 = vmatpush1.msra.mxu0 0.0
    %4149 = vmatprep.subr.mxu0 0.0
    %4150 = vmatpush1.msra.mxu0 0.0
    %4151 = vmatprep.subr.mxu0 0.0
    %4152 = vmatpush1.msra.mxu0 0.0
    %4153 = vmatprep.subr.mxu0 0.0
    %4154 = vmatpush1.msra.mxu0 0.0
    %4155 = vmatprep.subr.mxu0 0.0
    %4156 = vmatpush1.msra.mxu0 0.0
    %4157 = vmatprep.subr.mxu0 0.0
    %4158 = vmatpush1.msra.mxu0 0.0
    %4159 = vmatprep.subr.mxu0 0.0
    %4160 = vmatpush1.msra.mxu0 0.0
    %4161 = vmatprep.subr.mxu0 0.0
    %4162 = vmatpush1.msra.mxu0 0.0
    %4163 = vmatprep.subr.mxu0 0.0
    %4164 = vmatpush1.msra.mxu0 0.0
    %4165 = vmatprep.subr.mxu0 0.0
    %4166 = vmatpush1.msra.mxu0 0.0
    %4167 = vmatprep.subr.mxu0 0.0
    %4168 = vmatpush1.msra.mxu0 0.0
    %4169 = vmatprep.subr.mxu0 0.0
    %4170 = vmatpush1.msra.mxu0 0.0
    %4171 = vmatprep.subr.mxu0 0.0
    %4172 = vmatpush1.msra.mxu0 0.0
    %4173 = vmatprep.subr.mxu0 0.0
    %4174 = vmatpush1.msra.mxu0 0.0
    %4175 = vmatprep.subr.mxu0 0.0
    %4176 = vmatpush1.msra.mxu0 0.0
    %4177 = vmatprep.subr.mxu0 0.0
    %4178 = vmatpush1.msra.mxu0 0.0
    %4179 = vmatprep.subr.mxu0 0.0
    %4180 = vmatpush1.msra.mxu0 0.0
    %4181 = vmatprep.subr.mxu0 0.0
    %4182 = vmatpush1.msra.mxu0 0.0
    %4183 = vmatprep.subr.mxu0 0.0
    %4184 = vmatpush1.msra.mxu0 0.0
    %4185 = vmatprep.subr.mxu0 0.0
    %4186 = vmatpush1.msra.mxu0 0.0
    %4187 = vmatprep.subr.mxu0 0.0
    %4188 = vmatpush1.msra.mxu0 0.0
    %4189 = vmatprep.subr.mxu0 0.0
    %4190 = vmatpush1.msra.mxu0 0.0
    %4191 = vmatprep.subr.mxu0 0.0
    %4192 = vmatpush1.msra.mxu0 0.0
    %4193 = vmatprep.subr.mxu0 0.0
    %4194 = vmatpush1.msra.mxu0 0.0
    %4195 = vmatprep.mubr.f32.mxu0 0.0
    %4196 = vmatmul.mubr.f32.gmra.mrb[0].mxu0 %v4129
    %v4197 = vpop.f32.mrb[0].mxu0
    %v4198 = vadd.f32 0.0, %v4197
    %v4199 = vpop.f32.mrb[0].mxu0
    %4200 = vdwg.mxu0
    %s4201 = scalar_lea.vmem %s9, 32
    %v4202 = vld [vmem:[%s4201] sm:$0xff]
    %s4203 = scalar_lea.vmem %s9, 40
    %v4204 = vld [vmem:[%s4203] sm:$0xff]
    %v4206 = vsel %vm659, %v3833, 0
    %v4209 = vsel %vm659, %v3906, 0
    %4211 = vmatprep.subr.mxu0 0.0
    %4212 = vmatpush1.msra.mxu0 %v4204
    %4213 = vmatprep.subr.mxu0 0.0
    %4214 = vmatpush1.msra.mxu0 0.0
    %4215 = vmatprep.subr.mxu0 0.0
    %4216 = vmatpush1.msra.mxu0 0.0
    %4217 = vmatprep.subr.mxu0 0.0
    %4218 = vmatpush1.msra.mxu0 0.0
    %4219 = vmatprep.subr.mxu0 0.0
    %4220 = vmatpush1.msra.mxu0 0.0
    %4221 = vmatprep.subr.mxu0 0.0
    %4222 = vmatpush1.msra.mxu0 0.0
    %4223 = vmatprep.subr.mxu0 0.0
    %4224 = vmatpush1.msra.mxu0 0.0
    %4225 = vmatprep.subr.mxu0 0.0
    %4226 = vmatpush1.msra.mxu0 0.0
    %4227 = vmatprep.subr.mxu0 0.0
    %4228 = vmatpush1.msra.mxu0 0.0
    %4229 = vmatprep.subr.mxu0 0.0
    %4230 = vmatpush1.msra.mxu0 0.0
    %4231 = vmatprep.subr.mxu0 0.0
    %4232 = vmatpush1.msra.mxu0 0.0
    %4233 = vmatprep.subr.mxu0 0.0
    %4234 = vmatpush1.msra.mxu0 0.0
    %4235 = vmatprep.subr.mxu0 0.0
    %4236 = vmatpush1.msra.mxu0 0.0
    %4237 = vmatprep.subr.mxu0 0.0
    %4238 = vmatpush1.msra.mxu0 0.0
    %4239 = vmatprep.subr.mxu0 0.0
    %4240 = vmatpush1.msra.mxu0 0.0
    %4241 = vmatprep.subr.mxu0 0.0
    %4242 = vmatpush1.msra.mxu0 0.0
    %4243 = vmatprep.subr.mxu0 0.0
    %4244 = vmatpush1.msra.mxu0 0.0
    %4245 = vmatprep.subr.mxu0 0.0
    %4246 = vmatpush1.msra.mxu0 0.0
    %4247 = vmatprep.subr.mxu0 0.0
    %4248 = vmatpush1.msra.mxu0 0.0
    %4249 = vmatprep.subr.mxu0 0.0
    %4250 = vmatpush1.msra.mxu0 0.0
    %4251 = vmatprep.subr.mxu0 0.0
    %4252 = vmatpush1.msra.mxu0 0.0
    %4253 = vmatprep.subr.mxu0 0.0
    %4254 = vmatpush1.msra.mxu0 0.0
    %4255 = vmatprep.subr.mxu0 0.0
    %4256 = vmatpush1.msra.mxu0 0.0
    %4257 = vmatprep.subr.mxu0 0.0
    %4258 = vmatpush1.msra.mxu0 0.0
    %4259 = vmatprep.subr.mxu0 0.0
    %4260 = vmatpush1.msra.mxu0 0.0
    %4261 = vmatprep.subr.mxu0 0.0
    %4262 = vmatpush1.msra.mxu0 0.0
    %4263 = vmatprep.subr.mxu0 0.0
    %4264 = vmatpush1.msra.mxu0 0.0
    %4265 = vmatprep.subr.mxu0 0.0
    %4266 = vmatpush1.msra.mxu0 0.0
    %4267 = vmatprep.subr.mxu0 0.0
    %4268 = vmatpush1.msra.mxu0 0.0
    %4269 = vmatprep.subr.mxu0 0.0
    %4270 = vmatpush1.msra.mxu0 0.0
    %4271 = vmatprep.subr.mxu0 0.0
    %4272 = vmatpush1.msra.mxu0 0.0
    %4273 = vmatprep.subr.mxu0 0.0
    %4274 = vmatpush1.msra.mxu0 0.0
    %4275 = vmatprep.mubr.f32.mxu0 0.0
    %4276 = vmatmul.mubr.f32.gmra.mrb[0].mxu0 %v4206
    %v4277 = vpop.f32.mrb[0].mxu0
    %v4278 = vadd.f32 0.0, %v4277
    %v4279 = vpop.f32.mrb[0].mxu0
    %4280 = vmatprep.mubr.f32.mxu0 0.0
    %4281 = vmatmul.mubr.f32.gmra.mrb[0].mxu0 %v4209
    %v4282 = vpop.f32.mrb[0].mxu0
    %v4283 = vadd.f32 0.0, %v4282
    %v4284 = vpop.f32.mrb[0].mxu0
    %4285 = vdwg.mxu0
    %v4287 = vsel %vm659, %v3687, 0
    %v4290 = vsel %vm659, %v3760, 0
    %4292 = vmatprep.subr.mxu0 0.0
    %4293 = vmatpush1.msra.mxu0 %v4202
    %4294 = vmatprep.subr.mxu0 0.0
    %4295 = vmatpush1.msra.mxu0 0.0
    %4296 = vmatprep.subr.mxu0 0.0
    %4297 = vmatpush1.msra.mxu0 0.0
    %4298 = vmatprep.subr.mxu0 0.0
    %4299 = vmatpush1.msra.mxu0 0.0
    %4300 = vmatprep.subr.mxu0 0.0
    %4301 = vmatpush1.msra.mxu0 0.0
    %4302 = vmatprep.subr.mxu0 0.0
    %4303 = vmatpush1.msra.mxu0 0.0
    %4304 = vmatprep.subr.mxu0 0.0
    %4305 = vmatpush1.msra.mxu0 0.0
    %4306 = vmatprep.subr.mxu0 0.0
    %4307 = vmatpush1.msra.mxu0 0.0
    %4308 = vmatprep.subr.mxu0 0.0
    %4309 = vmatpush1.msra.mxu0 0.0
    %4310 = vmatprep.subr.mxu0 0.0
    %4311 = vmatpush1.msra.mxu0 0.0
    %4312 = vmatprep.subr.mxu0 0.0
    %4313 = vmatpush1.msra.mxu0 0.0
    %4314 = vmatprep.subr.mxu0 0.0
    %4315 = vmatpush1.msra.mxu0 0.0
    %4316 = vmatprep.subr.mxu0 0.0
    %4317 = vmatpush1.msra.mxu0 0.0
    %4318 = vmatprep.subr.mxu0 0.0
    %4319 = vmatpush1.msra.mxu0 0.0
    %4320 = vmatprep.subr.mxu0 0.0
    %4321 = vmatpush1.msra.mxu0 0.0
    %4322 = vmatprep.subr.mxu0 0.0
    %4323 = vmatpush1.msra.mxu0 0.0
    %4324 = vmatprep.subr.mxu0 0.0
    %4325 = vmatpush1.msra.mxu0 0.0
    %4326 = vmatprep.subr.mxu0 0.0
    %4327 = vmatpush1.msra.mxu0 0.0
    %4328 = vmatprep.subr.mxu0 0.0
    %4329 = vmatpush1.msra.mxu0 0.0
    %4330 = vmatprep.subr.mxu0 0.0
    %4331 = vmatpush1.msra.mxu0 0.0
    %4332 = vmatprep.subr.mxu0 0.0
    %4333 = vmatpush1.msra.mxu0 0.0
    %4334 = vmatprep.subr.mxu0 0.0
    %4335 = vmatpush1.msra.mxu0 0.0
    %4336 = vmatprep.subr.mxu0 0.0
    %4337 = vmatpush1.msra.mxu0 0.0
    %4338 = vmatprep.subr.mxu0 0.0
    %4339 = vmatpush1.msra.mxu0 0.0
    %4340 = vmatprep.subr.mxu0 0.0
    %4341 = vmatpush1.msra.mxu0 0.0
    %4342 = vmatprep.subr.mxu0 0.0
    %4343 = vmatpush1.msra.mxu0 0.0
    %4344 = vmatprep.subr.mxu0 0.0
    %4345 = vmatpush1.msra.mxu0 0.0
    %4346 = vmatprep.subr.mxu0 0.0
    %4347 = vmatpush1.msra.mxu0 0.0
    %4348 = vmatprep.subr.mxu0 0.0
    %4349 = vmatpush1.msra.mxu0 0.0
    %4350 = vmatprep.subr.mxu0 0.0
    %4351 = vmatpush1.msra.mxu0 0.0
    %4352 = vmatprep.subr.mxu0 0.0
    %4353 = vmatpush1.msra.mxu0 0.0
    %4354 = vmatprep.subr.mxu0 0.0
    %4355 = vmatpush1.msra.mxu0 0.0
    %4356 = vmatprep.mubr.f32.mxu0 0.0
    %4357 = vmatmul.mubr.f32.gmra.mrb[0].mxu0 %v4287
    %v4358 = vpop.f32.mrb[0].mxu0
    %v4359 = vadd.f32 %v4278, %v4358
    %v4360 = vpop.f32.mrb[0].mxu0
    %4361 = vmatprep.mubr.f32.mxu0 0.0
    %4362 = vmatmul.mubr.f32.gmra.mrb[0].mxu0 %v4290
    %v4363 = vpop.f32.mrb[0].mxu0
    %v4364 = vadd.f32 %v4283, %v4363
    %v4365 = vpop.f32.mrb[0].mxu0
    %4366 = vdwg.mxu0
    %s4367 = scalar_lea.vmem %s9, 48
    %v4368 = vld [vmem:[%s4367] sm:$0xff]
    %v4370 = vsel %vm659, %v3979, 0
    %v4373 = vsel %vm659, %v4052, 0
    %4375 = vmatprep.subr.mxu0 0.0
    %4376 = vmatpush1.msra.mxu0 %v4368
    %4377 = vmatprep.subr.mxu0 0.0
    %4378 = vmatpush1.msra.mxu0 0.0
    %4379 = vmatprep.subr.mxu0 0.0
    %4380 = vmatpush1.msra.mxu0 0.0
    %4381 = vmatprep.subr.mxu0 0.0
    %4382 = vmatpush1.msra.mxu0 0.0
    %4383 = vmatprep.subr.mxu0 0.0
    %4384 = vmatpush1.msra.mxu0 0.0
    %4385 = vmatprep.subr.mxu0 0.0
    %4386 = vmatpush1.msra.mxu0 0.0
    %4387 = vmatprep.subr.mxu0 0.0
    %4388 = vmatpush1.msra.mxu0 0.0
    %4389 = vmatprep.subr.mxu0 0.0
    %4390 = vmatpush1.msra.mxu0 0.0
    %4391 = vmatprep.subr.mxu0 0.0
    %4392 = vmatpush1.msra.mxu0 0.0
    %4393 = vmatprep.subr.mxu0 0.0
    %4394 = vmatpush1.msra.mxu0 0.0
    %4395 = vmatprep.subr.mxu0 0.0
    %4396 = vmatpush1.msra.mxu0 0.0
    %4397 = vmatprep.subr.mxu0 0.0
    %4398 = vmatpush1.msra.mxu0 0.0
    %4399 = vmatprep.subr.mxu0 0.0
    %4400 = vmatpush1.msra.mxu0 0.0
    %4401 = vmatprep.subr.mxu0 0.0
    %4402 = vmatpush1.msra.mxu0 0.0
    %4403 = vmatprep.subr.mxu0 0.0
    %4404 = vmatpush1.msra.mxu0 0.0
    %4405 = vmatprep.subr.mxu0 0.0
    %4406 = vmatpush1.msra.mxu0 0.0
    %4407 = vmatprep.subr.mxu0 0.0
    %4408 = vmatpush1.msra.mxu0 0.0
    %4409 = vmatprep.subr.mxu0 0.0
    %4410 = vmatpush1.msra.mxu0 0.0
    %4411 = vmatprep.subr.mxu0 0.0
    %4412 = vmatpush1.msra.mxu0 0.0
    %4413 = vmatprep.subr.mxu0 0.0
    %4414 = vmatpush1.msra.mxu0 0.0
    %4415 = vmatprep.subr.mxu0 0.0
    %4416 = vmatpush1.msra.mxu0 0.0
    %4417 = vmatprep.subr.mxu0 0.0
    %4418 = vmatpush1.msra.mxu0 0.0
    %4419 = vmatprep.subr.mxu0 0.0
    %4420 = vmatpush1.msra.mxu0 0.0
    %4421 = vmatprep.subr.mxu0 0.0
    %4422 = vmatpush1.msra.mxu0 0.0
    %4423 = vmatprep.subr.mxu0 0.0
    %4424 = vmatpush1.msra.mxu0 0.0
    %4425 = vmatprep.subr.mxu0 0.0
    %4426 = vmatpush1.msra.mxu0 0.0
    %4427 = vmatprep.subr.mxu0 0.0
    %4428 = vmatpush1.msra.mxu0 0.0
    %4429 = vmatprep.subr.mxu0 0.0
    %4430 = vmatpush1.msra.mxu0 0.0
    %4431 = vmatprep.subr.mxu0 0.0
    %4432 = vmatpush1.msra.mxu0 0.0
    %4433 = vmatprep.subr.mxu0 0.0
    %4434 = vmatpush1.msra.mxu0 0.0
    %4435 = vmatprep.subr.mxu0 0.0
    %4436 = vmatpush1.msra.mxu0 0.0
    %4437 = vmatprep.subr.mxu0 0.0
    %4438 = vmatpush1.msra.mxu0 0.0
    %4439 = vmatprep.mubr.f32.mxu0 0.0
    %4440 = vmatmul.mubr.f32.gmra.mrb[0].mxu0 %v4370
    %v4441 = vpop.f32.mrb[0].mxu0
    %v4442 = vadd.f32 0.0, %v4441
    %v4443 = vpop.f32.mrb[0].mxu0
    %4444 = vmatprep.mubr.f32.mxu0 0.0
    %4445 = vmatmul.mubr.f32.gmra.mrb[0].mxu0 %v4373
    %v4446 = vpop.f32.mrb[0].mxu0
    %v4447 = vadd.f32 0.0, %v4446
    %v4448 = vpop.f32.mrb[0].mxu0
    %4449 = vdwg.mxu0
    %v4450 = vadd.f32 %v4359, %v4442
    %v4451 = vadd.f32 %v4364, %v4447
    %s4452 = scalar_lea.vmem %s9, 56
    %v4453 = vld [vmem:[%s4452] sm:$0xff]
    %v4455 = vsel %vm659, %v4125, 0
    %v4458 = vsel %vm659, %v4198, 0
    %4460 = vmatprep.subr.mxu0 0.0
    %4461 = vmatpush1.msra.mxu0 %v4453
    %4462 = vmatprep.subr.mxu0 0.0
    %4463 = vmatpush1.msra.mxu0 0.0
    %4464 = vmatprep.subr.mxu0 0.0
    %4465 = vmatpush1.msra.mxu0 0.0
    %4466 = vmatprep.subr.mxu0 0.0
    %4467 = vmatpush1.msra.mxu0 0.0
    %4468 = vmatprep.subr.mxu0 0.0
    %4469 = vmatpush1.msra.mxu0 0.0
    %4470 = vmatprep.subr.mxu0 0.0
    %4471 = vmatpush1.msra.mxu0 0.0
    %4472 = vmatprep.subr.mxu0 0.0
    %4473 = vmatpush1.msra.mxu0 0.0
    %4474 = vmatprep.subr.mxu0 0.0
    %4475 = vmatpush1.msra.mxu0 0.0
    %4476 = vmatprep.subr.mxu0 0.0
    %4477 = vmatpush1.msra.mxu0 0.0
    %4478 = vmatprep.subr.mxu0 0.0
    %4479 = vmatpush1.msra.mxu0 0.0
    %4480 = vmatprep.subr.mxu0 0.0
    %4481 = vmatpush1.msra.mxu0 0.0
    %4482 = vmatprep.subr.mxu0 0.0
    %4483 = vmatpush1.msra.mxu0 0.0
    %4484 = vmatprep.subr.mxu0 0.0
    %4485 = vmatpush1.msra.mxu0 0.0
    %4486 = vmatprep.subr.mxu0 0.0
    %4487 = vmatpush1.msra.mxu0 0.0
    %4488 = vmatprep.subr.mxu0 0.0
    %4489 = vmatpush1.msra.mxu0 0.0
    %4490 = vmatprep.subr.mxu0 0.0
    %4491 = vmatpush1.msra.mxu0 0.0
    %4492 = vmatprep.subr.mxu0 0.0
    %4493 = vmatpush1.msra.mxu0 0.0
    %4494 = vmatprep.subr.mxu0 0.0
    %4495 = vmatpush1.msra.mxu0 0.0
    %4496 = vmatprep.subr.mxu0 0.0
    %4497 = vmatpush1.msra.mxu0 0.0
    %4498 = vmatprep.subr.mxu0 0.0
    %4499 = vmatpush1.msra.mxu0 0.0
    %4500 = vmatprep.subr.mxu0 0.0
    %4501 = vmatpush1.msra.mxu0 0.0
    %4502 = vmatprep.subr.mxu0 0.0
    %4503 = vmatpush1.msra.mxu0 0.0
    %4504 = vmatprep.subr.mxu0 0.0
    %4505 = vmatpush1.msra.mxu0 0.0
    %4506 = vmatprep.subr.mxu0 0.0
    %4507 = vmatpush1.msra.mxu0 0.0
    %4508 = vmatprep.subr.mxu0 0.0
    %4509 = vmatpush1.msra.mxu0 0.0
    %4510 = vmatprep.subr.mxu0 0.0
    %4511 = vmatpush1.msra.mxu0 0.0
    %4512 = vmatprep.subr.mxu0 0.0
    %4513 = vmatpush1.msra.mxu0 0.0
    %4514 = vmatprep.subr.mxu0 0.0
    %4515 = vmatpush1.msra.mxu0 0.0
    %4516 = vmatprep.subr.mxu0 0.0
    %4517 = vmatpush1.msra.mxu0 0.0
    %4518 = vmatprep.subr.mxu0 0.0
    %4519 = vmatpush1.msra.mxu0 0.0
    %4520 = vmatprep.subr.mxu0 0.0
    %4521 = vmatpush1.msra.mxu0 0.0
    %4522 = vmatprep.subr.mxu0 0.0
    %4523 = vmatpush1.msra.mxu0 0.0
    %4524 = vmatprep.mubr.f32.mxu0 0.0
    %4525 = vmatmul.mubr.f32.gmra.mrb[0].mxu0 %v4455
    %v4526 = vpop.f32.mrb[0].mxu0
    %v4527 = vadd.f32 0.0, %v4526
    %v4528 = vpop.f32.mrb[0].mxu0
    %4529 = vmatprep.mubr.f32.mxu0 0.0
    %4530 = vmatmul.mubr.f32.gmra.mrb[0].mxu0 %v4458
    %v4531 = vpop.f32.mrb[0].mxu0
    %v4532 = vadd.f32 0.0, %v4531
    %v4533 = vpop.f32.mrb[0].mxu0
    %4534 = vdwg.mxu0
    %v4535 = vadd.f32 %v4450, %v4527
    %v4536 = vadd.f32 %v4451, %v4532
    %v4537 = vadd.f32 %v2500, %v4535
    %v4538 = vadd.f32 %v2501, %v4536
    %s4539 = scalar_lea.vmem %s7, 1
    %v4540 = vld [vmem:[%s4539] sm:$0x1]
    %v4541 = vmul.f32 %v4537, %v4537
    %v4542 = vmul.f32 %v4538, %v4538
    %4543 = vadd.xlane.f32.xlu0 %v4541
    %v4544 = vpop.xlane.xlu0 %4543
    %4545 = vadd.xlane.f32.xlu0 %v4542
    %v4546 = vpop.xlane.xlu0 %4545
    %v4547 = vmul.f32 %v4544, 0.03125
    %v4548 = vmul.f32 %v4546, 0.03125
    %v4549 = vadd.f32 %v4547, 1e-06
    %v4550 = vadd.f32 %v4548, 1e-06
    %v4551 = vrsqrt.pop %v4549
    %v4552 = vrsqrt.pop %v4550
    %v4553 = vmul.f32 %v4537, %v4551
    %v4554 = vmul.f32 %v4538, %v4552
    %v4556 = vlaneseq
    %v4557 = vshrl.u32 %v4556, 7
    %v4558 = vsub.s32 0, %v4557
    %v4559 = vrot.slane %v4540, %v4558
    %v4561 = vmul.f32 %v4553, %v4559
    %v4562 = vmul.f32 %v4554, %v4559
    %s4563 = scalar_lea.vmem %s10, 256
    %v4564 = vld [vmem:[%s4563] sm:$0xff]
    %v4565 = vld [vmem:[%s4563 + $0x8] sm:$0xff]
    %v4566 = vld [vmem:[%s4563 + $0x10] sm:$0xff]
    %v4567 = vld [vmem:[%s4563 + $0x18] sm:$0xff]
    %v4568 = vld [vmem:[%s4563 + $0x20] sm:$0xff]
    %v4569 = vld [vmem:[%s4563 + $0x28] sm:$0xff]
    %v4570 = vld [vmem:[%s4563 + $0x30] sm:$0xff]
    %v4571 = vld [vmem:[%s4563 + $0x38] sm:$0xff]
    %v4572 = vld [vmem:[%s4563 + $0x40] sm:$0xff]
    %v4573 = vld [vmem:[%s4563 + $0x48] sm:$0xff]
    %v4574 = vld [vmem:[%s4563 + $0x50] sm:$0xff]
    %v4575 = vld [vmem:[%s4563 + $0x58] sm:$0xff]
    %v4576 = vld [vmem:[%s4563 + $0x60] sm:$0xff]
    %v4577 = vld [vmem:[%s4563 + $0x68] sm:$0xff]
    %v4578 = vld [vmem:[%s4563 + $0x70] sm:$0xff]
    %v4579 = vld [vmem:[%s4563 + $0x78] sm:$0xff]
    %v4580 = vld [vmem:[%s4563 + $0x80] sm:$0xff]
    %v4581 = vld [vmem:[%s4563 + $0x88] sm:$0xff]
    %v4582 = vld [vmem:[%s4563 + $0x90] sm:$0xff]
    %v4583 = vld [vmem:[%s4563 + $0x98] sm:$0xff]
    %v4584 = vld [vmem:[%s4563 + $0xa0] sm:$0xff]
    %v4585 = vld [vmem:[%s4563 + $0xa8] sm:$0xff]
    %v4586 = vld [vmem:[%s4563 + $0xb0] sm:$0xff]
    %v4587 = vld [vmem:[%s4563 + $0xb8] sm:$0xff]
    %v4588 = vld [vmem:[%s4563 + $0xc0] sm:$0xff]
    %v4589 = vld [vmem:[%s4563 + $0xc8] sm:$0xff]
    %v4590 = vld [vmem:[%s4563 + $0xd0] sm:$0xff]
    %v4591 = vld [vmem:[%s4563 + $0xd8] sm:$0xff]
    %v4592 = vld [vmem:[%s4563 + $0xe0] sm:$0xff]
    %v4593 = vld [vmem:[%s4563 + $0xe8] sm:$0xff]
    %v4594 = vld [vmem:[%s4563 + $0xf0] sm:$0xff]
    %v4595 = vld [vmem:[%s4563 + $0xf8] sm:$0xff]
    %4596 = vmatprep.subr.mxu0 %v4565
    %4597 = vmatpush1.msra.mxu0 %v4564
    %4598 = vmatprep.subr.mxu0 %v4567
    %4599 = vmatpush1.msra.mxu0 %v4566
    %4600 = vmatprep.subr.mxu0 %v4569
    %4601 = vmatpush1.msra.mxu0 %v4568
    %4602 = vmatprep.subr.mxu0 %v4571
    %4603 = vmatpush1.msra.mxu0 %v4570
    %4604 = vmatprep.subr.mxu0 %v4573
    %4605 = vmatpush1.msra.mxu0 %v4572
    %4606 = vmatprep.subr.mxu0 %v4575
    %4607 = vmatpush1.msra.mxu0 %v4574
    %4608 = vmatprep.subr.mxu0 %v4577
    %4609 = vmatpush1.msra.mxu0 %v4576
    %4610 = vmatprep.subr.mxu0 %v4579
    %4611 = vmatpush1.msra.mxu0 %v4578
    %4612 = vmatprep.subr.mxu0 %v4581
    %4613 = vmatpush1.msra.mxu0 %v4580
    %4614 = vmatprep.subr.mxu0 %v4583
    %4615 = vmatpush1.msra.mxu0 %v4582
    %4616 = vmatprep.subr.mxu0 %v4585
    %4617 = vmatpush1.msra.mxu0 %v4584
    %4618 = vmatprep.subr.mxu0 %v4587
    %4619 = vmatpush1.msra.mxu0 %v4586
    %4620 = vmatprep.subr.mxu0 %v4589
    %4621 = vmatpush1.msra.mxu0 %v4588
    %4622 = vmatprep.subr.mxu0 %v4591
    %4623 = vmatpush1.msra.mxu0 %v4590
    %4624 = vmatprep.subr.mxu0 %v4593
    %4625 = vmatpush1.msra.mxu0 %v4592
    %4626 = vmatprep.subr.mxu0 %v4595
    %4627 = vmatpush1.msra.mxu0 %v4594
    %4628 = vmatprep.subr.mxu0 0.0
    %4629 = vmatpush1.msra.mxu0 0.0
    %4630 = vmatprep.subr.mxu0 0.0
    %4631 = vmatpush1.msra.mxu0 0.0
    %4632 = vmatprep.subr.mxu0 0.0
    %4633 = vmatpush1.msra.mxu0 0.0
    %4634 = vmatprep.subr.mxu0 0.0
    %4635 = vmatpush1.msra.mxu0 0.0
    %4636 = vmatprep.subr.mxu0 0.0
    %4637 = vmatpush1.msra.mxu0 0.0
    %4638 = vmatprep.subr.mxu0 0.0
    %4639 = vmatpush1.msra.mxu0 0.0
    %4640 = vmatprep.subr.mxu0 0.0
    %4641 = vmatpush1.msra.mxu0 0.0
    %4642 = vmatprep.subr.mxu0 0.0
    %4643 = vmatpush1.msra.mxu0 0.0
    %4644 = vmatprep.subr.mxu0 0.0
    %4645 = vmatpush1.msra.mxu0 0.0
    %4646 = vmatprep.subr.mxu0 0.0
    %4647 = vmatpush1.msra.mxu0 0.0
    %4648 = vmatprep.subr.mxu0 0.0
    %4649 = vmatpush1.msra.mxu0 0.0
    %4650 = vmatprep.subr.mxu0 0.0
    %4651 = vmatpush1.msra.mxu0 0.0
    %4652 = vmatprep.subr.mxu0 0.0
    %4653 = vmatpush1.msra.mxu0 0.0
    %4654 = vmatprep.subr.mxu0 0.0
    %4655 = vmatpush1.msra.mxu0 0.0
    %4656 = vmatprep.subr.mxu0 0.0
    %4657 = vmatpush1.msra.mxu0 0.0
    %4658 = vmatprep.subr.mxu0 0.0
    %4659 = vmatpush1.msra.mxu0 0.0
    %4660 = vmatprep.mubr.f32.mxu0 0.0
    %4661 = vmatmul.mubr.f32.gmra.mrb[0].mxu0 %v4561
    %v4662 = vpop.f32.mrb[0].mxu0
    %v4663 = vadd.f32 0.0, %v4662
    %v4664 = vpop.f32.mrb[0].mxu0
    %v4665 = vadd.f32 0.0, %v4664
    %4666 = vmatprep.mubr.f32.mxu0 0.0
    %4667 = vmatmul.mubr.f32.gmra.mrb[0].mxu0 %v4562
    %v4668 = vpop.f32.mrb[0].mxu0
    %v4669 = vadd.f32 0.0, %v4668
    %v4670 = vpop.f32.mrb[0].mxu0
    %v4671 = vadd.f32 0.0, %v4670
    %4672 = vdwg.mxu0
    %v4673 = vxor.u32 %v4663, 2147483648
    %v4674 = vxor.u32 %v4669, 2147483648
    %v4675 = vmul.f32 %v4673, 1.442695
    %v4676 = vpow.pop %v4675
    %v4677 = vmul.f32 %v4674, 1.442695
    %v4678 = vpow.pop %v4677
    %v4679 = vadd.f32 %v4676, 1.0
    %v4680 = vadd.f32 %v4678, 1.0
    %v4681 = vrcp.pop %v4679
    %v4682 = vmul.f32 1.0, %v4681
    %v4683 = vrcp.pop %v4680
    %v4684 = vmul.f32 1.0, %v4683
    %v4685 = vmul.f32 %v4663, %v4682
    %v4686 = vmul.f32 %v4669, %v4684
    %v4687 = vmul.f32 %v4685, %v4665
    %v4688 = vmul.f32 %v4686, %v4671
    %s4689 = scalar_lea.vmem %s11, 128
    %v4690 = vld [vmem:[%s4689] sm:$0xff]
    %v4691 = vld [vmem:[%s4689 + $0x8] sm:$0xff]
    %v4692 = vld [vmem:[%s4689 + $0x10] sm:$0xff]
    %v4693 = vld [vmem:[%s4689 + $0x18] sm:$0xff]
    %v4694 = vld [vmem:[%s4689 + $0x20] sm:$0xff]
    %v4695 = vld [vmem:[%s4689 + $0x28] sm:$0xff]
    %v4696 = vld [vmem:[%s4689 + $0x30] sm:$0xff]
    %v4697 = vld [vmem:[%s4689 + $0x38] sm:$0xff]
    %v4698 = vld [vmem:[%s4689 + $0x40] sm:$0xff]
    %v4699 = vld [vmem:[%s4689 + $0x48] sm:$0xff]
    %v4700 = vld [vmem:[%s4689 + $0x50] sm:$0xff]
    %v4701 = vld [vmem:[%s4689 + $0x58] sm:$0xff]
    %v4702 = vld [vmem:[%s4689 + $0x60] sm:$0xff]
    %v4703 = vld [vmem:[%s4689 + $0x68] sm:$0xff]
    %v4704 = vld [vmem:[%s4689 + $0x70] sm:$0xff]
    %v4705 = vld [vmem:[%s4689 + $0x78] sm:$0xff]
    %4706 = vmatprep.subr.mxu0 0.0
    %4707 = vmatpush1.msra.mxu0 %v4690
    %4708 = vmatprep.subr.mxu0 0.0
    %4709 = vmatpush1.msra.mxu0 %v4691
    %4710 = vmatprep.subr.mxu0 0.0
    %4711 = vmatpush1.msra.mxu0 %v4692
    %4712 = vmatprep.subr.mxu0 0.0
    %4713 = vmatpush1.msra.mxu0 %v4693
    %4714 = vmatprep.subr.mxu0 0.0
    %4715 = vmatpush1.msra.mxu0 %v4694
    %4716 = vmatprep.subr.mxu0 0.0
    %4717 = vmatpush1.msra.mxu0 %v4695
    %4718 = vmatprep.subr.mxu0 0.0
    %4719 = vmatpush1.msra.mxu0 %v4696
    %4720 = vmatprep.subr.mxu0 0.0
    %4721 = vmatpush1.msra.mxu0 %v4697
    %4722 = vmatprep.subr.mxu0 0.0
    %4723 = vmatpush1.msra.mxu0 %v4698
    %4724 = vmatprep.subr.mxu0 0.0
    %4725 = vmatpush1.msra.mxu0 %v4699
    %4726 = vmatprep.subr.mxu0 0.0
    %4727 = vmatpush1.msra.mxu0 %v4700
    %4728 = vmatprep.subr.mxu0 0.0
    %4729 = vmatpush1.msra.mxu0 %v4701
    %4730 = vmatprep.subr.mxu0 0.0
    %4731 = vmatpush1.msra.mxu0 %v4702
    %4732 = vmatprep.subr.mxu0 0.0
    %4733 = vmatpush1.msra.mxu0 %v4703
    %4734 = vmatprep.subr.mxu0 0.0
    %4735 = vmatpush1.msra.mxu0 %v4704
    %4736 = vmatprep.subr.mxu0 0.0
    %4737 = vmatpush1.msra.mxu0 %v4705
    %4738 = vmatprep.subr.mxu0 0.0
    %4739 = vmatpush1.msra.mxu0 0.0
    %4740 = vmatprep.subr.mxu0 0.0
    %4741 = vmatpush1.msra.mxu0 0.0
    %4742 = vmatprep.subr.mxu0 0.0
    %4743 = vmatpush1.msra.mxu0 0.0
    %4744 = vmatprep.subr.mxu0 0.0
    %4745 = vmatpush1.msra.mxu0 0.0
    %4746 = vmatprep.subr.mxu0 0.0
    %4747 = vmatpush1.msra.mxu0 0.0
    %4748 = vmatprep.subr.mxu0 0.0
    %4749 = vmatpush1.msra.mxu0 0.0
    %4750 = vmatprep.subr.mxu0 0.0
    %4751 = vmatpush1.msra.mxu0 0.0
    %4752 = vmatprep.subr.mxu0 0.0
    %4753 = vmatpush1.msra.mxu0 0.0
    %4754 = vmatprep.subr.mxu0 0.0
    %4755 = vmatpush1.msra.mxu0 0.0
    %4756 = vmatprep.subr.mxu0 0.0
    %4757 = vmatpush1.msra.mxu0 0.0
    %4758 = vmatprep.subr.mxu0 0.0
    %4759 = vmatpush1.msra.mxu0 0.0
    %4760 = vmatprep.subr.mxu0 0.0
    %4761 = vmatpush1.msra.mxu0 0.0
    %4762 = vmatprep.subr.mxu0 0.0
    %4763 = vmatpush1.msra.mxu0 0.0
    %4764 = vmatprep.subr.mxu0 0.0
    %4765 = vmatpush1.msra.mxu0 0.0
    %4766 = vmatprep.subr.mxu0 0.0
    %4767 = vmatpush1.msra.mxu0 0.0
    %4768 = vmatprep.subr.mxu0 0.0
    %4769 = vmatpush1.msra.mxu0 0.0
    %4770 = vmatprep.mubr.f32.mxu0 0.0
    %4771 = vmatmul.mubr.f32.gmra.mrb[0].mxu0 %v4687
    %v4772 = vpop.f32.mrb[0].mxu0
    %v4773 = vadd.f32 0.0, %v4772
    %v4774 = vpop.f32.mrb[0].mxu0
    %4775 = vmatprep.mubr.f32.mxu0 0.0
    %4776 = vmatmul.mubr.f32.gmra.mrb[0].mxu0 %v4688
    %v4777 = vpop.f32.mrb[0].mxu0
    %v4778 = vadd.f32 0.0, %v4777
    %v4779 = vpop.f32.mrb[0].mxu0
    %4780 = vdwg.mxu0
    %v4781 = vadd.f32 %v4537, %v4773
    %v4782 = vadd.f32 %v4538, %v4778
    %v4783 = vld [vmem:[%s12] sm:$0x1]
    %v4784 = vmul.f32 %v4781, %v4781
    %v4785 = vmul.f32 %v4782, %v4782
    %4786 = vadd.xlane.f32.xlu0 %v4784
    %v4787 = vpop.xlane.xlu0 %4786
    %4788 = vadd.xlane.f32.xlu0 %v4785
    %v4789 = vpop.xlane.xlu0 %4788
    %v4790 = vmul.f32 %v4787, 0.03125
    %v4791 = vmul.f32 %v4789, 0.03125
    %v4792 = vadd.f32 %v4790, 1e-06
    %v4793 = vadd.f32 %v4791, 1e-06
    %v4794 = vrsqrt.pop %v4792
    %v4795 = vrsqrt.pop %v4793
    %v4796 = vmul.f32 %v4781, %v4794
    %v4797 = vmul.f32 %v4782, %v4795
    %v4799 = vlaneseq
    %v4800 = vshrl.u32 %v4799, 7
    %v4801 = vsub.s32 0, %v4800
    %v4802 = vrot.slane %v4783, %v4801
    %v4804 = vmul.f32 %v4796, %v4802
    %v4805 = vmul.f32 %v4797, %v4802
    %v4806 = vld [vmem:[%s13] sm:$0xff]
    %v4807 = vld [vmem:[%s13 + $0x8] sm:$0xff]
    %v4808 = vld [vmem:[%s13 + $0x10] sm:$0xff]
    %v4809 = vld [vmem:[%s13 + $0x18] sm:$0xff]
    %v4810 = vld [vmem:[%s13 + $0x20] sm:$0xff]
    %v4811 = vld [vmem:[%s13 + $0x28] sm:$0xff]
    %v4812 = vld [vmem:[%s13 + $0x30] sm:$0xff]
    %v4813 = vld [vmem:[%s13 + $0x38] sm:$0xff]
    %v4814 = vld [vmem:[%s13 + $0x40] sm:$0xff]
    %v4815 = vld [vmem:[%s13 + $0x48] sm:$0xff]
    %v4816 = vld [vmem:[%s13 + $0x50] sm:$0xff]
    %v4817 = vld [vmem:[%s13 + $0x58] sm:$0xff]
    %v4818 = vld [vmem:[%s13 + $0x60] sm:$0xff]
    %v4819 = vld [vmem:[%s13 + $0x68] sm:$0xff]
    %v4820 = vld [vmem:[%s13 + $0x70] sm:$0xff]
    %v4821 = vld [vmem:[%s13 + $0x78] sm:$0xff]
    %v4822 = vld [vmem:[%s14] sm:$0x1]
    %v4824 = vlaneseq
    %v4825 = vshrl.u32 %v4824, 7
    %v4826 = vsub.s32 0, %v4825
    %v4827 = vrot.slane %v4822, %v4826
    %v4831 = vrot.slane %v4805, 7
    %vm4832 = vcmask 1041409
    %v4833 = vsel %vm4832, %v4831, %v4804
    %4835 = vmatprep.subr.mxu0 0.0
    %4836 = vmatpush1.msra.mxu0 %v4806
    %4837 = vmatprep.subr.mxu0 0.0
    %4838 = vmatpush1.msra.mxu0 %v4807
    %4839 = vmatprep.subr.mxu0 0.0
    %4840 = vmatpush1.msra.mxu0 %v4808
    %4841 = vmatprep.subr.mxu0 0.0
    %4842 = vmatpush1.msra.mxu0 %v4809
    %4843 = vmatprep.subr.mxu0 0.0
    %4844 = vmatpush1.msra.mxu0 %v4810
    %4845 = vmatprep.subr.mxu0 0.0
    %4846 = vmatpush1.msra.mxu0 %v4811
    %4847 = vmatprep.subr.mxu0 0.0
    %4848 = vmatpush1.msra.mxu0 %v4812
    %4849 = vmatprep.subr.mxu0 0.0
    %4850 = vmatpush1.msra.mxu0 %v4813
    %4851 = vmatprep.subr.mxu0 0.0
    %4852 = vmatpush1.msra.mxu0 %v4814
    %4853 = vmatprep.subr.mxu0 0.0
    %4854 = vmatpush1.msra.mxu0 %v4815
    %4855 = vmatprep.subr.mxu0 0.0
    %4856 = vmatpush1.msra.mxu0 %v4816
    %4857 = vmatprep.subr.mxu0 0.0
    %4858 = vmatpush1.msra.mxu0 %v4817
    %4859 = vmatprep.subr.mxu0 0.0
    %4860 = vmatpush1.msra.mxu0 %v4818
    %4861 = vmatprep.subr.mxu0 0.0
    %4862 = vmatpush1.msra.mxu0 %v4819
    %4863 = vmatprep.subr.mxu0 0.0
    %4864 = vmatpush1.msra.mxu0 %v4820
    %4865 = vmatprep.subr.mxu0 0.0
    %4866 = vmatpush1.msra.mxu0 %v4821
    %4867 = vmatprep.subr.mxu0 0.0
    %4868 = vmatpush1.msra.mxu0 0.0
    %4869 = vmatprep.subr.mxu0 0.0
    %4870 = vmatpush1.msra.mxu0 0.0
    %4871 = vmatprep.subr.mxu0 0.0
    %4872 = vmatpush1.msra.mxu0 0.0
    %4873 = vmatprep.subr.mxu0 0.0
    %4874 = vmatpush1.msra.mxu0 0.0
    %4875 = vmatprep.subr.mxu0 0.0
    %4876 = vmatpush1.msra.mxu0 0.0
    %4877 = vmatprep.subr.mxu0 0.0
    %4878 = vmatpush1.msra.mxu0 0.0
    %4879 = vmatprep.subr.mxu0 0.0
    %4880 = vmatpush1.msra.mxu0 0.0
    %4881 = vmatprep.subr.mxu0 0.0
    %4882 = vmatpush1.msra.mxu0 0.0
    %4883 = vmatprep.subr.mxu0 0.0
    %4884 = vmatpush1.msra.mxu0 0.0
    %4885 = vmatprep.subr.mxu0 0.0
    %4886 = vmatpush1.msra.mxu0 0.0
    %4887 = vmatprep.subr.mxu0 0.0
    %4888 = vmatpush1.msra.mxu0 0.0
    %4889 = vmatprep.subr.mxu0 0.0
    %4890 = vmatpush1.msra.mxu0 0.0
    %4891 = vmatprep.subr.mxu0 0.0
    %4892 = vmatpush1.msra.mxu0 0.0
    %4893 = vmatprep.subr.mxu0 0.0
    %4894 = vmatpush1.msra.mxu0 0.0
    %4895 = vmatprep.subr.mxu0 0.0
    %4896 = vmatpush1.msra.mxu0 0.0
    %4897 = vmatprep.subr.mxu0 0.0
    %4898 = vmatpush1.msra.mxu0 0.0
    %4899 = vmatprep.mubr.f32.mxu0 0.0
    %4900 = vmatmul.mubr.f32.gmra.mrb[0].mxu0 %v4833
    %v4901 = vpop.f32.mrb[0].mxu0
    %v4902 = vadd.f32 %v4827, %v4901
    %v4903 = vpop.f32.mrb[0].mxu0
    %4904 = vdwg.mxu0
    %4905 = vst [vmem:[#allocation2] sm:$0x3] %v4902
    // Predicated region
    $region62: #{llama_classifier_forward.1} parent=1 // pred_check
      _
    $region63: #{llama_classifier_forward.1} parent=1 // pred_check_branch
      %4907 = sbr.rel (0) target = $region65
    $region64: #{llama_classifier_forward.1} parent=1 // pred_region
      %s4909 = ssub.s32 32, 32
      %4910 = vsyncadd [#allocation3], %s4909
      %s4912 = sshll.u32 [#allocation2], 4
      %s4913 = int_to_ptr.vmem [resolvable:$true] %s4912
      %4915 = dma.vmem_to_hbm [thread:$0]  %s4913, 32, %s15, [#allocation3]
    $region65: #{llama_classifier_forward.1} parent=1 // pred_fallthru
      _
    // Predicated region
    $region66: #{llama_classifier_forward.1} parent=1 // pred_check
      _
    $region67: #{llama_classifier_forward.1} parent=1 // pred_check_branch
      %4917 = sbr.rel (0) target = $region69
    $region68: #{llama_classifier_forward.1} parent=1 // pred_region
      %4918 = dma.done [#allocation3], 32
    $region69: #{llama_classifier_forward.1} parent=1 // pred_fallthru
      _
    %4919 = vsyncpa [#allocation3], 1

</llo_original>
